<compile_context>
chip_gen: v6e
topology: v6e:2x2x1
jax: 0.10.0
libtpu: 0.0.40
codegen_flags: <defaults>
</compile_context>

<pallas_src>
import functools

import jax
import jax.numpy as jnp
from jax.experimental import pallas as pl
from jax.experimental.pallas import tpu as pltpu


LANE = 128      # lane width (last dim)
SUBLANE = 8     # sublane width (second-to-last dim)


def _round_up(x, m):
    return ((x + m - 1) // m) * m


def _pick_batch_block(batch):
    """Sublane-aligned batch block; >=2 blocks for bigger batches so both v7x TCs get work."""
    if batch <= SUBLANE:
        return SUBLANE
    return _round_up((batch + 1) // 2, SUBLANE)


# ------------------------------------------------------------------ fused kernel (one grid step = one (batch block, layer))

def encoder_kernel(x_ref, w_emb_ref, b_emb_ref, wih_ref, whh_ref, b_ref,
                   hid_ref, cell_ref, act_ref, gx_ref,
                   *, seq_len, batch_blk, hidden_pad, compute_dtype):
    """Grid = (batch_blocks [parallel], num_layers [arbitrary]).

    x_ref:     [S, Bb, Dp]     time-major, zero-padded input (this batch block)
    w_emb_ref: [Dp, INp]       embedding weight^T (compute dtype)
    b_emb_ref: [1, INp]        embedding bias (f32)
    wih_ref:   [1, INp, 4*Hp]  this layer's input->gates weight^T (gate-lane padded)
    whh_ref:   [1, Hp, 4*Hp]   this layer's hidden->gates weight^T
    b_ref:     [1, 1, 4*Hp]    this layer's combined bias (b_ih + b_hh, f32)
    hid_ref:   [1, Bb, Hp]     final hidden state for (layer, batch block)   (output)
    cell_ref:  [1, Bb, Hp]     final cell state  for (layer, batch block)   (output)
    act_ref:   [S*Bb, Hp]      VMEM scratch: previous layer's hidden sequence (persists over layers)
    gx_ref:    [S*Bb, 4*Hp]    VMEM scratch: precomputed x@W_ih + b for all timesteps (f32)
    """
    S, Bb, Hp = seq_len, batch_blk, hidden_pad
    layer = pl.program_id(1)

    # ---- hoisted input projection: one MXU matmul for ALL timesteps of this layer ----
    @pl.when(layer == 0)
    def _():
        # Embedding + ReLU (+ dropout = identity at inference), then straight into the gate
        # projection; the embedding never round-trips through scratch.
        x2d = x_ref[...].reshape(S * Bb, x_ref.shape[-1])
        emb = jnp.dot(x2d.astype(compute_dtype), w_emb_ref[...],
                      preferred_element_type=jnp.float32) + b_emb_ref[...]
        a = jnp.maximum(emb, 0.0).astype(compute_dtype)
        gx_ref[...] = jnp.dot(a, wih_ref[0],
                              preferred_element_type=jnp.float32) + b_ref[0]

    @pl.when(layer != 0)
    def _():
        # act_ref holds the previous layer's hidden sequence; contract only K = Hp so the
        # zero-padded weight rows [Hp:INp] are never touched (no stale-column coupling).
        gx_ref[...] = jnp.dot(act_ref[...], wih_ref[0, :Hp, :],
                              preferred_element_type=jnp.float32) + b_ref[0]

    # ---- serial recurrence: only h @ W_hh remains on the critical path ----
    # TODO(synk): hold W_hh in MXU staging registers (matmul_push_rhs/acc_lhs/pop) instead of
    #             streaming 4*Hp*Hp weights from VMEM every step.
    h = jnp.zeros((Bb, Hp), jnp.float32)
    c = jnp.zeros((Bb, Hp), jnp.float32)

    # Fully unrolled time loop (S is small & static) so the LLO scheduler can overlap the
    # h@W_hh matmul, EUP sigmoid/tanh and the activation stores across steps.
    for t in range(S):
        row = t * Bb                                  # static, sublane-aligned
        gates = gx_ref[pl.ds(row, Bb), :] + jnp.dot(
            h.astype(compute_dtype), whh_ref[0],
            preferred_element_type=jnp.float32)       # [Bb, 4*Hp], f32 accumulation
        # 128-aligned gate slices: whole-vreg selects, no lane shuffles.  Gate math stays f32
        # (v5e has no bf16 VPU/EUP); only the matmul operands use compute_dtype.
        i = jax.nn.sigmoid(gates[:, 0 * Hp:1 * Hp])
        f = jax.nn.sigmoid(gates[:, 1 * Hp:2 * Hp])
        g = jnp.tanh(gates[:, 2 * Hp:3 * Hp])
        o = jax.nn.sigmoid(gates[:, 3 * Hp:4 * Hp])
        c = f * c + i * g
        h = o * jnp.tanh(c)
        # Feed the next layer (inter-layer dropout = identity at inference).  Lane-dense store.
        act_ref[pl.ds(row, Bb), :] = h.astype(compute_dtype)

    hid_ref[0] = h                                    # lane-dense [Bb, Hp] tile stores
    cell_ref[0] = c


# ------------------------------------------------------------------ wrapper

def _vmem_limit_bytes(S, Bb, Dp, INp, Hp, wbytes):
    """Actual block + scratch footprint with headroom; never request v7x's whole 64 MiB."""
    f32 = 4
    G4 = 4 * Hp
    blocks = (S * Bb * Dp * f32                                    # x block
              + Dp * INp * wbytes + INp * f32                      # w_emb, b_emb
              + INp * G4 * wbytes + Hp * G4 * wbytes + G4 * f32    # wih, whh, b
              + 2 * Bb * Hp * f32)                                 # hid, cell blocks
    scratch = S * Bb * Hp * wbytes + S * Bb * G4 * f32
    need = 2 * blocks + scratch                                    # double-buffered pipeline
    return max(min(int(need * 1.5) + (1 << 20), 48 << 20), 4 << 20)


def encoder_forward(x, padded):
    """x: [B, S, input_dim] -> (hidden, cell), each [num_layers, B, H] (PyTorch LSTM semantics)."""
    B, S, D = x.shape
    Dp, INp = padded["w_emb"].shape
    L, Hp, G4 = padded["whh"].shape
    H = padded["hidden_size"]
    cdt = padded["wih"].dtype
    wbytes = jnp.dtype(cdt).itemsize

    B_BLK = _pick_batch_block(B)
    Bp = _round_up(B, B_BLK)
    nb = Bp // B_BLK

    # Only the tiny raw input is transposed/padded on the wrapper side (layout plumbing);
    # the [S,B,H] inter-layer activations never leave VMEM.
    x_tm = jnp.transpose(x, (1, 0, 2))                               # [S, B, D]
    x_tm = jnp.pad(x_tm, ((0, 0), (0, Bp - B), (0, Dp - D)))         # [S, Bp, Dp]

    kernel = functools.partial(encoder_kernel, seq_len=S, batch_blk=B_BLK,
                               hidden_pad=Hp, compute_dtype=cdt)

    hid_p, cell_p = pl.pallas_call(
        kernel,
        out_shape=(jax.ShapeDtypeStruct((L, Bp, Hp), jnp.float32),
                   jax.ShapeDtypeStruct((L, Bp, Hp), jnp.float32)),
        grid_spec=pltpu.PrefetchScalarGridSpec(
            num_scalar_prefetch=0,
            grid=(nb, L),                                            # (batch block, layer)
            in_specs=[
                pl.BlockSpec((S, B_BLK, Dp), lambda b, l: (0, b, 0)),      # x (per batch block)
                pl.BlockSpec((Dp, INp), lambda b, l: (0, 0)),              # w_emb
                pl.BlockSpec((1, INp), lambda b, l: (0, 0)),               # b_emb
                pl.BlockSpec((1, INp, G4), lambda b, l: (l, 0, 0)),        # wih[layer]
                pl.BlockSpec((1, Hp, G4), lambda b, l: (l, 0, 0)),         # whh[layer]
                pl.BlockSpec((1, 1, G4), lambda b, l: (l, 0, 0)),          # bias[layer]
            ],
            out_specs=(
                pl.BlockSpec((1, B_BLK, Hp), lambda b, l: (l, b, 0)),      # hidden
                pl.BlockSpec((1, B_BLK, Hp), lambda b, l: (l, b, 0)),      # cell
            ),
            scratch_shapes=[
                pltpu.VMEM((S * B_BLK, Hp), cdt),            # previous layer's hidden sequence
                pltpu.VMEM((S * B_BLK, G4), jnp.float32),     # precomputed gates_x
            ],
        ),
        compiler_params=pltpu.CompilerParams(
            dimension_semantics=("parallel", "arbitrary"),
            vmem_limit_bytes=_vmem_limit_bytes(S, B_BLK, Dp, INp, Hp, wbytes),
        ),
    )(x_tm, padded["w_emb"], padded["b_emb"], padded["wih"], padded["whh"], padded["b"])

    # Strip padding (padded batch rows / hidden lanes never influence the real ones).
    return hid_p[:, :B, :H], cell_p[:, :B, :H]


# ------------------------------------------------------------------ param padding (kernel layout)

def pad_params(params, compute_dtype=jnp.float32):
    """Logical PyTorch-style params -> zero-padded, gate-lane-aligned kernel layout.

    Matmul weights are stored in `compute_dtype` (bf16 recommended on v6e/v7x); biases stay f32
    because they are folded into the f32 gate accumulators.
    """
    D, E = params["w_emb_t"].shape
    H = params["layers"][0]["whh_t"].shape[0]
    Dp = _round_up(D, LANE)
    Ep = _round_up(E, LANE)
    Hp = _round_up(H, LANE)
    INp = max(Ep, Hp)          # common input width for all stacked layers

    w_emb = jnp.zeros((Dp, INp), compute_dtype).at[:D, :E].set(
        params["w_emb_t"].astype(compute_dtype))
    b_emb = jnp.zeros((1, INp), jnp.float32).at[:, :E].set(params["b_emb"])

    def pad_gates(w, rows_pad, dtype):
        # [rows, 4H] -> [rows_pad, 4*Hp] with each gate at a 128-aligned lane offset.
        rows = w.shape[0]
        w4 = w.reshape(rows, 4, H)
        out = jnp.zeros((rows_pad, 4, Hp), dtype).at[:rows, :, :H].set(w4.astype(dtype))
        return out.reshape(rows_pad, 4 * Hp)

    wih = jnp.stack([pad_gates(lp["wih_t"], INp, compute_dtype)
                     for lp in params["layers"]])                               # [L, INp, 4Hp]
    whh = jnp.stack([pad_gates(lp["whh_t"], Hp, compute_dtype)
                     for lp in params["layers"]])                               # [L, Hp, 4Hp]
    b = jnp.stack([pad_gates(lp["b"], 1, jnp.float32)
                   for lp in params["layers"]])                                 # [L, 1, 4Hp]

    return {"w_emb": w_emb, "b_emb": b_emb, "wih": wih, "whh": whh, "b": b,
            "hidden_size": H}


# ------------------------------------------------------------------ pure-JAX reference

def encoder_reference(x, params):
    B, S, D = x.shape
    E = params["w_emb_t"].shape[1]
    emb = jnp.maximum(x.reshape(B * S, D) @ params["w_emb_t"] + params["b_emb"], 0.0)
    layer_in = jnp.transpose(emb.reshape(B, S, E), (1, 0, 2))
    hs, cs = [], []
    for lp in params["layers"]:
        H = lp["whh_t"].shape[0]
        h = jnp.zeros((B, H), jnp.float32)
        c = jnp.zeros((B, H), jnp.float32)
        outs = []
        for t in range(S):
            gates = layer_in[t] @ lp["wih_t"] + h @ lp["whh_t"] + lp["b"]
            i = jax.nn.sigmoid(gates[:, :H])
            f = jax.nn.sigmoid(gates[:, H:2 * H])
            g = jnp.tanh(gates[:, 2 * H:3 * H])
            o = jax.nn.sigmoid(gates[:, 3 * H:])
            c = f * c + i * g
            h = o * jnp.tanh(c)
            outs.append(h)
        layer_in = jnp.stack(outs, axis=0)
        hs.append(h)
        cs.append(c)
    return jnp.stack(hs, 0), jnp.stack(cs, 0)


# ------------------------------------------------------------------ param init (PyTorch semantics)

def init_params(key, input_dim, embedding_size, hidden_size, num_layers):
    def uniform(k, shape, bound):
        return jax.random.uniform(k, shape, jnp.float32, -bound, bound)

    keys = jax.random.split(key, 2 + 4 * num_layers)
    k_emb = 1.0 / jnp.sqrt(input_dim)
    params = {
        "w_emb_t": uniform(keys[0], (input_dim, embedding_size), k_emb),   # Linear weight^T
        "b_emb": uniform(keys[1], (1, embedding_size), k_emb),
        "layers": [],
    }
    k_h = 1.0 / jnp.sqrt(hidden_size)
    for layer in range(num_layers):
        in_size = embedding_size if layer == 0 else hidden_size
        kk = keys[2 + 4 * layer: 2 + 4 * (layer + 1)]
        wih = uniform(kk[0], (4 * hidden_size, in_size), k_h)    # PyTorch weight_ih_l{k}
        whh = uniform(kk[1], (4 * hidden_size, hidden_size), k_h)
        b_ih = uniform(kk[2], (4 * hidden_size,), k_h)
        b_hh = uniform(kk[3], (4 * hidden_size,), k_h)
        params["layers"].append({
            "wih_t": wih.T,                                      # [in, 4H]
            "whh_t": whh.T,                                      # [H, 4H]
            "b": (b_ih + b_hh).reshape(1, -1),                   # [1, 4H]
        })
    return params


# ------------------------------------------------------------------ main

if __name__ == "__main__":
    batch, seq_len = 2, 8
    input_dim, embedding_size, hidden_size, num_layers = 4, 16, 32, 2

    key = jax.random.PRNGKey(0)
    k_x, k_p = jax.random.split(key)
    x = jax.random.normal(k_x, (batch, seq_len, input_dim), jnp.float32)
    params = init_params(k_p, input_dim, embedding_size, hidden_size, num_layers)
    h_ref, c_ref = encoder_reference(x, params)

    # --- exact f32 path ---
    padded_f32 = pad_params(params, jnp.float32)
    hidden, cell = encoder_forward(x, padded_f32)
    (hidden, cell) = jax.block_until_ready((hidden, cell))
    assert hidden.shape == (num_layers, batch, hidden_size)
    assert cell.shape == (num_layers, batch, hidden_size)
    assert jnp.allclose(hidden, h_ref, atol=1e-5, rtol=1e-5)
    assert jnp.allclose(cell, c_ref, atol=1e-5, rtol=1e-5)

    # --- bf16 weight/activation path (f32 accumulation & gate math): v6e/v7x fast path ---
    padded_bf16 = pad_params(params, jnp.bfloat16)
    hidden_bf, cell_bf = encoder_forward(x, padded_bf16)
    (hidden_bf, cell_bf) = jax.block_until_ready((hidden_bf, cell_bf))
    assert jnp.allclose(hidden_bf, h_ref, atol=5e-2, rtol=5e-2)
    assert jnp.allclose(cell_bf, c_ref, atol=5e-2, rtol=5e-2)

    print("KERNEL_OK")
</pallas_src>

<mosaic_0001>
module attributes {stable_mosaic.version = 11 : i64} {
  func.func @encoder_kernel(%arg0: i32, %arg1: i32, %arg2: memref<8x8x128xf32, #tpu.memory_space<vmem>>, %arg3: memref<128x128xf32, #tpu.memory_space<vmem>>, %arg4: memref<1x128xf32, #tpu.memory_space<vmem>>, %arg5: memref<1x128x512xf32, #tpu.memory_space<vmem>>, %arg6: memref<1x128x512xf32, #tpu.memory_space<vmem>>, %arg7: memref<1x1x512xf32, #tpu.memory_space<vmem>>, %arg8: memref<1x8x128xf32, #tpu.memory_space<vmem>>, %arg9: memref<1x8x128xf32, #tpu.memory_space<vmem>>, %arg10: memref<64x128xf32, #tpu.memory_space<vmem>>, %arg11: memref<64x512xf32, #tpu.memory_space<vmem>>) attributes {dimension_semantics = [#tpu.dimension_semantics<parallel>, #tpu.dimension_semantics<arbitrary>], iteration_bounds = array<i64: 1, 2>, scalar_prefetch = 0 : i64, scratch_operands = 2 : i64, tpu.core_type = #tpu.core_type<tc>, window_params = [{transform_indices = @transform_0, window_bounds = array<i64: 8, 8, 128>}, {pipeline_mode = #tpu.pipeline_mode<synchronous>, transform_indices = @transform_1, window_bounds = array<i64: 128, 128>}, {pipeline_mode = #tpu.pipeline_mode<synchronous>, transform_indices = @transform_2, window_bounds = array<i64: 1, 128>}, {transform_indices = @transform_3, window_bounds = array<i64: 1, 128, 512>}, {transform_indices = @transform_4, window_bounds = array<i64: 1, 128, 512>}, {transform_indices = @transform_5, window_bounds = array<i64: 1, 1, 512>}, {transform_indices = @transform_6, window_bounds = array<i64: 1, 8, 128>}, {transform_indices = @transform_7, window_bounds = array<i64: 1, 8, 128>}]} {
    %c0_i32 = arith.constant 0 : i32
    %0 = arith.cmpi eq, %arg1, %c0_i32 : i32
    %1 = arith.extui %0 : i1 to i32
    %c0_i32_0 = arith.constant 0 : i32
    %2 = arith.cmpi ne, %1, %c0_i32_0 : i32
    scf.if %2 {
      %c0_90 = arith.constant 0 : index
      %c0_91 = arith.constant 0 : index
      %c0_92 = arith.constant 0 : index
      %262 = vector.load %arg2[%c0_90, %c0_91, %c0_92] : memref<8x8x128xf32, #tpu.memory_space<vmem>>, vector<8x8x128xf32>
      %263 = vector.shape_cast %262 : vector<8x8x128xf32> to vector<64x128xf32>
      %c0_93 = arith.constant 0 : index
      %c0_94 = arith.constant 0 : index
      %264 = vector.load %arg3[%c0_93, %c0_94] : memref<128x128xf32, #tpu.memory_space<vmem>>, vector<128x128xf32>
      %cst_95 = arith.constant dense<0.000000e+00> : vector<64x128xf32>
      %265 = tpu.matmul %263, %264, %cst_95 {dimension_numbers = #tpu.dot_dimension_numbers<[1], [0], [0], [1], [0, 0, 1, 1], [], []>} : vector<64x128xf32>, vector<128x128xf32>, vector<64x128xf32> -> vector<64x128xf32>
      %c0_96 = arith.constant 0 : index
      %c0_97 = arith.constant 0 : index
      %266 = vector.load %arg4[%c0_96, %c0_97] : memref<1x128xf32, #tpu.memory_space<vmem>>, vector<1x128xf32>
      %267 = vector.broadcast %266 : vector<1x128xf32> to vector<64x128xf32>
      %268 = arith.addf %265, %267 : vector<64x128xf32>
      %cst_98 = arith.constant 0.000000e+00 : f32
      %269 = vector.broadcast %cst_98 : f32 to vector<64x128xf32>
      %270 = arith.maximumf %268, %269 : vector<64x128xf32>
      %c0_99 = arith.constant 0 : index
      %c0_100 = arith.constant 0 : index
      %c0_101 = arith.constant 0 : index
      %271 = vector.load %arg5[%c0_99, %c0_100, %c0_101] : memref<1x128x512xf32, #tpu.memory_space<vmem>>, vector<1x128x512xf32>
      %272 = vector.shape_cast %271 : vector<1x128x512xf32> to vector<128x512xf32>
      %cst_102 = arith.constant dense<0.000000e+00> : vector<64x512xf32>
      %273 = tpu.matmul %270, %272, %cst_102 {dimension_numbers = #tpu.dot_dimension_numbers<[1], [0], [0], [1], [0, 0, 1, 1], [], []>} : vector<64x128xf32>, vector<128x512xf32>, vector<64x512xf32> -> vector<64x512xf32>
      %c0_103 = arith.constant 0 : index
      %c0_104 = arith.constant 0 : index
      %c0_105 = arith.constant 0 : index
      %274 = vector.load %arg7[%c0_103, %c0_104, %c0_105] : memref<1x1x512xf32, #tpu.memory_space<vmem>>, vector<1x1x512xf32>
      %275 = vector.shape_cast %274 : vector<1x1x512xf32> to vector<1x512xf32>
      %276 = vector.broadcast %275 : vector<1x512xf32> to vector<64x512xf32>
      %277 = arith.addf %273, %276 : vector<64x512xf32>
      %c0_106 = arith.constant 0 : index
      %c0_107 = arith.constant 0 : index
      %278 = vector.load %arg11[%c0_106, %c0_107] : memref<64x512xf32, #tpu.memory_space<vmem>>, vector<64x512xf32>
      tpu.vector_store %arg11[%c0_106, %c0_107], %277 {strides = array<i32>} : memref<64x512xf32, #tpu.memory_space<vmem>>, vector<64x512xf32>,
    } else {
    }
    %c0_i32_1 = arith.constant 0 : i32
    %3 = arith.cmpi ne, %arg1, %c0_i32_1 : i32
    %4 = arith.extui %3 : i1 to i32
    %c0_i32_2 = arith.constant 0 : i32
    %5 = arith.cmpi ne, %4, %c0_i32_2 : i32
    scf.if %5 {
      %c0_90 = arith.constant 0 : index
      %c0_91 = arith.constant 0 : index
      %262 = vector.load %arg10[%c0_90, %c0_91] : memref<64x128xf32, #tpu.memory_space<vmem>>, vector<64x128xf32>
      %c0_92 = arith.constant 0 : index
      %c0_93 = arith.constant 0 : index
      %c0_94 = arith.constant 0 : index
      %263 = vector.load %arg5[%c0_92, %c0_93, %c0_94] : memref<1x128x512xf32, #tpu.memory_space<vmem>>, vector<1x128x512xf32>
      %264 = vector.shape_cast %263 : vector<1x128x512xf32> to vector<128x512xf32>
      %cst_95 = arith.constant dense<0.000000e+00> : vector<64x512xf32>
      %265 = tpu.matmul %262, %264, %cst_95 {dimension_numbers = #tpu.dot_dimension_numbers<[1], [0], [0], [1], [0, 0, 1, 1], [], []>} : vector<64x128xf32>, vector<128x512xf32>, vector<64x512xf32> -> vector<64x512xf32>
      %c0_96 = arith.constant 0 : index
      %c0_97 = arith.constant 0 : index
      %c0_98 = arith.constant 0 : index
      %266 = vector.load %arg7[%c0_96, %c0_97, %c0_98] : memref<1x1x512xf32, #tpu.memory_space<vmem>>, vector<1x1x512xf32>
      %267 = vector.shape_cast %266 : vector<1x1x512xf32> to vector<1x512xf32>
      %268 = vector.broadcast %267 : vector<1x512xf32> to vector<64x512xf32>
      %269 = arith.addf %265, %268 : vector<64x512xf32>
      %c0_99 = arith.constant 0 : index
      %c0_100 = arith.constant 0 : index
      %270 = vector.load %arg11[%c0_99, %c0_100] : memref<64x512xf32, #tpu.memory_space<vmem>>, vector<64x512xf32>
      tpu.vector_store %arg11[%c0_99, %c0_100], %269 {strides = array<i32>} : memref<64x512xf32, #tpu.memory_space<vmem>>, vector<64x512xf32>,
    } else {
    }
    %cst = arith.constant 0.000000e+00 : f32
    %6 = vector.broadcast %cst : f32 to vector<8x128xf32>
    %cst_3 = arith.constant 0.000000e+00 : f32
    %7 = vector.broadcast %cst_3 : f32 to vector<8x128xf32>
    %c0 = arith.constant 0 : index
    %c0_4 = arith.constant 0 : index
    %8 = vector.load %arg11[%c0, %c0_4] : memref<64x512xf32, #tpu.memory_space<vmem>>, vector<8x512xf32>
    %c0_5 = arith.constant 0 : index
    %c0_6 = arith.constant 0 : index
    %c0_7 = arith.constant 0 : index
    %9 = vector.load %arg6[%c0_5, %c0_6, %c0_7] : memref<1x128x512xf32, #tpu.memory_space<vmem>>, vector<1x128x512xf32>
    %10 = vector.shape_cast %9 : vector<1x128x512xf32> to vector<128x512xf32>
    %cst_8 = arith.constant dense<0.000000e+00> : vector<8x512xf32>
    %11 = tpu.matmul %6, %10, %cst_8 {dimension_numbers = #tpu.dot_dimension_numbers<[1], [0], [0], [1], [0, 0, 1, 1], [], []>} : vector<8x128xf32>, vector<128x512xf32>, vector<8x512xf32> -> vector<8x512xf32>
    %12 = arith.addf %8, %11 : vector<8x512xf32>
    %13 = vector.extract_strided_slice %12 {offsets = [0, 0], sizes = [8, 128], strides = [1, 1]} : vector<8x512xf32> to vector<8x128xf32>
    %14 = arith.negf %13 : vector<8x128xf32>
    %15 = math.exp %14 : vector<8x128xf32>
    %cst_9 = arith.constant 1.000000e+00 : f32
    %16 = vector.broadcast %cst_9 : f32 to vector<8x128xf32>
    %17 = arith.addf %16, %15 : vector<8x128xf32>
    %18 = arith.divf %16, %17 : vector<8x128xf32>
    %19 = vector.extract_strided_slice %12 {offsets = [0, 128], sizes = [8, 128], strides = [1, 1]} : vector<8x512xf32> to vector<8x128xf32>
    %20 = arith.negf %19 : vector<8x128xf32>
    %21 = math.exp %20 : vector<8x128xf32>
    %cst_10 = arith.constant 1.000000e+00 : f32
    %22 = vector.broadcast %cst_10 : f32 to vector<8x128xf32>
    %23 = arith.addf %22, %21 : vector<8x128xf32>
    %24 = arith.divf %22, %23 : vector<8x128xf32>
    %25 = vector.extract_strided_slice %12 {offsets = [0, 256], sizes = [8, 128], strides = [1, 1]} : vector<8x512xf32> to vector<8x128xf32>
    %26 = math.tanh %25 : vector<8x128xf32>
    %27 = vector.extract_strided_slice %12 {offsets = [0, 384], sizes = [8, 128], strides = [1, 1]} : vector<8x512xf32> to vector<8x128xf32>
    %28 = arith.negf %27 : vector<8x128xf32>
    %29 = math.exp %28 : vector<8x128xf32>
    %cst_11 = arith.constant 1.000000e+00 : f32
    %30 = vector.broadcast %cst_11 : f32 to vector<8x128xf32>
    %31 = arith.addf %30, %29 : vector<8x128xf32>
    %32 = arith.divf %30, %31 : vector<8x128xf32>
    %33 = arith.mulf %24, %7 : vector<8x128xf32>
    %34 = arith.mulf %18, %26 : vector<8x128xf32>
    %35 = arith.addf %33, %34 : vector<8x128xf32>
    %36 = math.tanh %35 : vector<8x128xf32>
    %37 = arith.mulf %32, %36 : vector<8x128xf32>
    %c0_12 = arith.constant 0 : index
    %c0_13 = arith.constant 0 : index
    %38 = vector.load %arg10[%c0_12, %c0_13] : memref<64x128xf32, #tpu.memory_space<vmem>>, vector<8x128xf32>
    tpu.vector_store %arg10[%c0_12, %c0_13], %37 {strides = array<i32>} : memref<64x128xf32, #tpu.memory_space<vmem>>, vector<8x128xf32>,
    %c8 = arith.constant 8 : index
    %c0_14 = arith.constant 0 : index
    %39 = vector.load %arg11[%c8, %c0_14] : memref<64x512xf32, #tpu.memory_space<vmem>>, vector<8x512xf32>
    %c0_15 = arith.constant 0 : index
    %c0_16 = arith.constant 0 : index
    %c0_17 = arith.constant 0 : index
    %40 = vector.load %arg6[%c0_15, %c0_16, %c0_17] : memref<1x128x512xf32, #tpu.memory_space<vmem>>, vector<1x128x512xf32>
    %41 = vector.shape_cast %40 : vector<1x128x512xf32> to vector<128x512xf32>
    %cst_18 = arith.constant dense<0.000000e+00> : vector<8x512xf32>
    %42 = tpu.matmul %37, %41, %cst_18 {dimension_numbers = #tpu.dot_dimension_numbers<[1], [0], [0], [1], [0, 0, 1, 1], [], []>} : vector<8x128xf32>, vector<128x512xf32>, vector<8x512xf32> -> vector<8x512xf32>
    %43 = arith.addf %39, %42 : vector<8x512xf32>
    %44 = vector.extract_strided_slice %43 {offsets = [0, 0], sizes = [8, 128], strides = [1, 1]} : vector<8x512xf32> to vector<8x128xf32>
    %45 = arith.negf %44 : vector<8x128xf32>
    %46 = math.exp %45 : vector<8x128xf32>
    %cst_19 = arith.constant 1.000000e+00 : f32
    %47 = vector.broadcast %cst_19 : f32 to vector<8x128xf32>
    %48 = arith.addf %47, %46 : vector<8x128xf32>
    %49 = arith.divf %47, %48 : vector<8x128xf32>
    %50 = vector.extract_strided_slice %43 {offsets = [0, 128], sizes = [8, 128], strides = [1, 1]} : vector<8x512xf32> to vector<8x128xf32>
    %51 = arith.negf %50 : vector<8x128xf32>
    %52 = math.exp %51 : vector<8x128xf32>
    %cst_20 = arith.constant 1.000000e+00 : f32
    %53 = vector.broadcast %cst_20 : f32 to vector<8x128xf32>
    %54 = arith.addf %53, %52 : vector<8x128xf32>
    %55 = arith.divf %53, %54 : vector<8x128xf32>
    %56 = vector.extract_strided_slice %43 {offsets = [0, 256], sizes = [8, 128], strides = [1, 1]} : vector<8x512xf32> to vector<8x128xf32>
    %57 = math.tanh %56 : vector<8x128xf32>
    %58 = vector.extract_strided_slice %43 {offsets = [0, 384], sizes = [8, 128], strides = [1, 1]} : vector<8x512xf32> to vector<8x128xf32>
    %59 = arith.negf %58 : vector<8x128xf32>
    %60 = math.exp %59 : vector<8x128xf32>
    %cst_21 = arith.constant 1.000000e+00 : f32
    %61 = vector.broadcast %cst_21 : f32 to vector<8x128xf32>
    %62 = arith.addf %61, %60 : vector<8x128xf32>
    %63 = arith.divf %61, %62 : vector<8x128xf32>
    %64 = arith.mulf %55, %35 : vector<8x128xf32>
    %65 = arith.mulf %49, %57 : vector<8x128xf32>
    %66 = arith.addf %64, %65 : vector<8x128xf32>
    %67 = math.tanh %66 : vector<8x128xf32>
    %68 = arith.mulf %63, %67 : vector<8x128xf32>
    %c8_22 = arith.constant 8 : index
    %c0_23 = arith.constant 0 : index
    %69 = vector.load %arg10[%c8_22, %c0_23] : memref<64x128xf32, #tpu.memory_space<vmem>>, vector<8x128xf32>
    tpu.vector_store %arg10[%c8_22, %c0_23], %68 {strides = array<i32>} : memref<64x128xf32, #tpu.memory_space<vmem>>, vector<8x128xf32>,
    %c16 = arith.constant 16 : index
    %c0_24 = arith.constant 0 : index
    %70 = vector.load %arg11[%c16, %c0_24] : memref<64x512xf32, #tpu.memory_space<vmem>>, vector<8x512xf32>
    %c0_25 = arith.constant 0 : index
    %c0_26 = arith.constant 0 : index
    %c0_27 = arith.constant 0 : index
    %71 = vector.load %arg6[%c0_25, %c0_26, %c0_27] : memref<1x128x512xf32, #tpu.memory_space<vmem>>, vector<1x128x512xf32>
    %72 = vector.shape_cast %71 : vector<1x128x512xf32> to vector<128x512xf32>
    %cst_28 = arith.constant dense<0.000000e+00> : vector<8x512xf32>
    %73 = tpu.matmul %68, %72, %cst_28 {dimension_numbers = #tpu.dot_dimension_numbers<[1], [0], [0], [1], [0, 0, 1, 1], [], []>} : vector<8x128xf32>, vector<128x512xf32>, vector<8x512xf32> -> vector<8x512xf32>
    %74 = arith.addf %70, %73 : vector<8x512xf32>
    %75 = vector.extract_strided_slice %74 {offsets = [0, 0], sizes = [8, 128], strides = [1, 1]} : vector<8x512xf32> to vector<8x128xf32>
    %76 = arith.negf %75 : vector<8x128xf32>
    %77 = math.exp %76 : vector<8x128xf32>
    %cst_29 = arith.constant 1.000000e+00 : f32
    %78 = vector.broadcast %cst_29 : f32 to vector<8x128xf32>
    %79 = arith.addf %78, %77 : vector<8x128xf32>
    %80 = arith.divf %78, %79 : vector<8x128xf32>
    %81 = vector.extract_strided_slice %74 {offsets = [0, 128], sizes = [8, 128], strides = [1, 1]} : vector<8x512xf32> to vector<8x128xf32>
    %82 = arith.negf %81 : vector<8x128xf32>
    %83 = math.exp %82 : vector<8x128xf32>
    %cst_30 = arith.constant 1.000000e+00 : f32
    %84 = vector.broadcast %cst_30 : f32 to vector<8x128xf32>
    %85 = arith.addf %84, %83 : vector<8x128xf32>
    %86 = arith.divf %84, %85 : vector<8x128xf32>
    %87 = vector.extract_strided_slice %74 {offsets = [0, 256], sizes = [8, 128], strides = [1, 1]} : vector<8x512xf32> to vector<8x128xf32>
    %88 = math.tanh %87 : vector<8x128xf32>
    %89 = vector.extract_strided_slice %74 {offsets = [0, 384], sizes = [8, 128], strides = [1, 1]} : vector<8x512xf32> to vector<8x128xf32>
    %90 = arith.negf %89 : vector<8x128xf32>
    %91 = math.exp %90 : vector<8x128xf32>
    %cst_31 = arith.constant 1.000000e+00 : f32
    %92 = vector.broadcast %cst_31 : f32 to vector<8x128xf32>
    %93 = arith.addf %92, %91 : vector<8x128xf32>
    %94 = arith.divf %92, %93 : vector<8x128xf32>
    %95 = arith.mulf %86, %66 : vector<8x128xf32>
    %96 = arith.mulf %80, %88 : vector<8x128xf32>
    %97 = arith.addf %95, %96 : vector<8x128xf32>
    %98 = math.tanh %97 : vector<8x128xf32>
    %99 = arith.mulf %94, %98 : vector<8x128xf32>
    %c16_32 = arith.constant 16 : index
    %c0_33 = arith.constant 0 : index
    %100 = vector.load %arg10[%c16_32, %c0_33] : memref<64x128xf32, #tpu.memory_space<vmem>>, vector<8x128xf32>
    tpu.vector_store %arg10[%c16_32, %c0_33], %99 {strides = array<i32>} : memref<64x128xf32, #tpu.memory_space<vmem>>, vector<8x128xf32>,
    %c24 = arith.constant 24 : index
    %c0_34 = arith.constant 0 : index
    %101 = vector.load %arg11[%c24, %c0_34] : memref<64x512xf32, #tpu.memory_space<vmem>>, vector<8x512xf32>
    %c0_35 = arith.constant 0 : index
    %c0_36 = arith.constant 0 : index
    %c0_37 = arith.constant 0 : index
    %102 = vector.load %arg6[%c0_35, %c0_36, %c0_37] : memref<1x128x512xf32, #tpu.memory_space<vmem>>, vector<1x128x512xf32>
    %103 = vector.shape_cast %102 : vector<1x128x512xf32> to vector<128x512xf32>
    %cst_38 = arith.constant dense<0.000000e+00> : vector<8x512xf32>
    %104 = tpu.matmul %99, %103, %cst_38 {dimension_numbers = #tpu.dot_dimension_numbers<[1], [0], [0], [1], [0, 0, 1, 1], [], []>} : vector<8x128xf32>, vector<128x512xf32>, vector<8x512xf32> -> vector<8x512xf32>
    %105 = arith.addf %101, %104 : vector<8x512xf32>
    %106 = vector.extract_strided_slice %105 {offsets = [0, 0], sizes = [8, 128], strides = [1, 1]} : vector<8x512xf32> to vector<8x128xf32>
    %107 = arith.negf %106 : vector<8x128xf32>
    %108 = math.exp %107 : vector<8x128xf32>
    %cst_39 = arith.constant 1.000000e+00 : f32
    %109 = vector.broadcast %cst_39 : f32 to vector<8x128xf32>
    %110 = arith.addf %109, %108 : vector<8x128xf32>
    %111 = arith.divf %109, %110 : vector<8x128xf32>
    %112 = vector.extract_strided_slice %105 {offsets = [0, 128], sizes = [8, 128], strides = [1, 1]} : vector<8x512xf32> to vector<8x128xf32>
    %113 = arith.negf %112 : vector<8x128xf32>
    %114 = math.exp %113 : vector<8x128xf32>
    %cst_40 = arith.constant 1.000000e+00 : f32
    %115 = vector.broadcast %cst_40 : f32 to vector<8x128xf32>
    %116 = arith.addf %115, %114 : vector<8x128xf32>
    %117 = arith.divf %115, %116 : vector<8x128xf32>
    %118 = vector.extract_strided_slice %105 {offsets = [0, 256], sizes = [8, 128], strides = [1, 1]} : vector<8x512xf32> to vector<8x128xf32>
    %119 = math.tanh %118 : vector<8x128xf32>
    %120 = vector.extract_strided_slice %105 {offsets = [0, 384], sizes = [8, 128], strides = [1, 1]} : vector<8x512xf32> to vector<8x128xf32>
    %121 = arith.negf %120 : vector<8x128xf32>
    %122 = math.exp %121 : vector<8x128xf32>
    %cst_41 = arith.constant 1.000000e+00 : f32
    %123 = vector.broadcast %cst_41 : f32 to vector<8x128xf32>
    %124 = arith.addf %123, %122 : vector<8x128xf32>
    %125 = arith.divf %123, %124 : vector<8x128xf32>
    %126 = arith.mulf %117, %97 : vector<8x128xf32>
    %127 = arith.mulf %111, %119 : vector<8x128xf32>
    %128 = arith.addf %126, %127 : vector<8x128xf32>
    %129 = math.tanh %128 : vector<8x128xf32>
    %130 = arith.mulf %125, %129 : vector<8x128xf32>
    %c24_42 = arith.constant 24 : index
    %c0_43 = arith.constant 0 : index
    %131 = vector.load %arg10[%c24_42, %c0_43] : memref<64x128xf32, #tpu.memory_space<vmem>>, vector<8x128xf32>
    tpu.vector_store %arg10[%c24_42, %c0_43], %130 {strides = array<i32>} : memref<64x128xf32, #tpu.memory_space<vmem>>, vector<8x128xf32>,
    %c32 = arith.constant 32 : index
    %c0_44 = arith.constant 0 : index
    %132 = vector.load %arg11[%c32, %c0_44] : memref<64x512xf32, #tpu.memory_space<vmem>>, vector<8x512xf32>
    %c0_45 = arith.constant 0 : index
    %c0_46 = arith.constant 0 : index
    %c0_47 = arith.constant 0 : index
    %133 = vector.load %arg6[%c0_45, %c0_46, %c0_47] : memref<1x128x512xf32, #tpu.memory_space<vmem>>, vector<1x128x512xf32>
    %134 = vector.shape_cast %133 : vector<1x128x512xf32> to vector<128x512xf32>
    %cst_48 = arith.constant dense<0.000000e+00> : vector<8x512xf32>
    %135 = tpu.matmul %130, %134, %cst_48 {dimension_numbers = #tpu.dot_dimension_numbers<[1], [0], [0], [1], [0, 0, 1, 1], [], []>} : vector<8x128xf32>, vector<128x512xf32>, vector<8x512xf32> -> vector<8x512xf32>
    %136 = arith.addf %132, %135 : vector<8x512xf32>
    %137 = vector.extract_strided_slice %136 {offsets = [0, 0], sizes = [8, 128], strides = [1, 1]} : vector<8x512xf32> to vector<8x128xf32>
    %138 = arith.negf %137 : vector<8x128xf32>
    %139 = math.exp %138 : vector<8x128xf32>
    %cst_49 = arith.constant 1.000000e+00 : f32
    %140 = vector.broadcast %cst_49 : f32 to vector<8x128xf32>
    %141 = arith.addf %140, %139 : vector<8x128xf32>
    %142 = arith.divf %140, %141 : vector<8x128xf32>
    %143 = vector.extract_strided_slice %136 {offsets = [0, 128], sizes = [8, 128], strides = [1, 1]} : vector<8x512xf32> to vector<8x128xf32>
    %144 = arith.negf %143 : vector<8x128xf32>
    %145 = math.exp %144 : vector<8x128xf32>
    %cst_50 = arith.constant 1.000000e+00 : f32
    %146 = vector.broadcast %cst_50 : f32 to vector<8x128xf32>
    %147 = arith.addf %146, %145 : vector<8x128xf32>
    %148 = arith.divf %146, %147 : vector<8x128xf32>
    %149 = vector.extract_strided_slice %136 {offsets = [0, 256], sizes = [8, 128], strides = [1, 1]} : vector<8x512xf32> to vector<8x128xf32>
    %150 = math.tanh %149 : vector<8x128xf32>
    %151 = vector.extract_strided_slice %136 {offsets = [0, 384], sizes = [8, 128], strides = [1, 1]} : vector<8x512xf32> to vector<8x128xf32>
    %152 = arith.negf %151 : vector<8x128xf32>
    %153 = math.exp %152 : vector<8x128xf32>
    %cst_51 = arith.constant 1.000000e+00 : f32
    %154 = vector.broadcast %cst_51 : f32 to vector<8x128xf32>
    %155 = arith.addf %154, %153 : vector<8x128xf32>
    %156 = arith.divf %154, %155 : vector<8x128xf32>
    %157 = arith.mulf %148, %128 : vector<8x128xf32>
    %158 = arith.mulf %142, %150 : vector<8x128xf32>
    %159 = arith.addf %157, %158 : vector<8x128xf32>
    %160 = math.tanh %159 : vector<8x128xf32>
    %161 = arith.mulf %156, %160 : vector<8x128xf32>
    %c32_52 = arith.constant 32 : index
    %c0_53 = arith.constant 0 : index
    %162 = vector.load %arg10[%c32_52, %c0_53] : memref<64x128xf32, #tpu.memory_space<vmem>>, vector<8x128xf32>
    tpu.vector_store %arg10[%c32_52, %c0_53], %161 {strides = array<i32>} : memref<64x128xf32, #tpu.memory_space<vmem>>, vector<8x128xf32>,
    %c40 = arith.constant 40 : index
    %c0_54 = arith.constant 0 : index
    %163 = vector.load %arg11[%c40, %c0_54] : memref<64x512xf32, #tpu.memory_space<vmem>>, vector<8x512xf32>
    %c0_55 = arith.constant 0 : index
    %c0_56 = arith.constant 0 : index
    %c0_57 = arith.constant 0 : index
    %164 = vector.load %arg6[%c0_55, %c0_56, %c0_57] : memref<1x128x512xf32, #tpu.memory_space<vmem>>, vector<1x128x512xf32>
    %165 = vector.shape_cast %164 : vector<1x128x512xf32> to vector<128x512xf32>
    %cst_58 = arith.constant dense<0.000000e+00> : vector<8x512xf32>
    %166 = tpu.matmul %161, %165, %cst_58 {dimension_numbers = #tpu.dot_dimension_numbers<[1], [0], [0], [1], [0, 0, 1, 1], [], []>} : vector<8x128xf32>, vector<128x512xf32>, vector<8x512xf32> -> vector<8x512xf32>
    %167 = arith.addf %163, %166 : vector<8x512xf32>
    %168 = vector.extract_strided_slice %167 {offsets = [0, 0], sizes = [8, 128], strides = [1, 1]} : vector<8x512xf32> to vector<8x128xf32>
    %169 = arith.negf %168 : vector<8x128xf32>
    %170 = math.exp %169 : vector<8x128xf32>
    %cst_59 = arith.constant 1.000000e+00 : f32
    %171 = vector.broadcast %cst_59 : f32 to vector<8x128xf32>
    %172 = arith.addf %171, %170 : vector<8x128xf32>
    %173 = arith.divf %171, %172 : vector<8x128xf32>
    %174 = vector.extract_strided_slice %167 {offsets = [0, 128], sizes = [8, 128], strides = [1, 1]} : vector<8x512xf32> to vector<8x128xf32>
    %175 = arith.negf %174 : vector<8x128xf32>
    %176 = math.exp %175 : vector<8x128xf32>
    %cst_60 = arith.constant 1.000000e+00 : f32
    %177 = vector.broadcast %cst_60 : f32 to vector<8x128xf32>
    %178 = arith.addf %177, %176 : vector<8x128xf32>
    %179 = arith.divf %177, %178 : vector<8x128xf32>
    %180 = vector.extract_strided_slice %167 {offsets = [0, 256], sizes = [8, 128], strides = [1, 1]} : vector<8x512xf32> to vector<8x128xf32>
    %181 = math.tanh %180 : vector<8x128xf32>
    %182 = vector.extract_strided_slice %167 {offsets = [0, 384], sizes = [8, 128], strides = [1, 1]} : vector<8x512xf32> to vector<8x128xf32>
    %183 = arith.negf %182 : vector<8x128xf32>
    %184 = math.exp %183 : vector<8x128xf32>
    %cst_61 = arith.constant 1.000000e+00 : f32
    %185 = vector.broadcast %cst_61 : f32 to vector<8x128xf32>
    %186 = arith.addf %185, %184 : vector<8x128xf32>
    %187 = arith.divf %185, %186 : vector<8x128xf32>
    %188 = arith.mulf %179, %159 : vector<8x128xf32>
    %189 = arith.mulf %173, %181 : vector<8x128xf32>
    %190 = arith.addf %188, %189 : vector<8x128xf32>
    %191 = math.tanh %190 : vector<8x128xf32>
    %192 = arith.mulf %187, %191 : vector<8x128xf32>
    %c40_62 = arith.constant 40 : index
    %c0_63 = arith.constant 0 : index
    %193 = vector.load %arg10[%c40_62, %c0_63] : memref<64x128xf32, #tpu.memory_space<vmem>>, vector<8x128xf32>
    tpu.vector_store %arg10[%c40_62, %c0_63], %192 {strides = array<i32>} : memref<64x128xf32, #tpu.memory_space<vmem>>, vector<8x128xf32>,
    %c48 = arith.constant 48 : index
    %c0_64 = arith.constant 0 : index
    %194 = vector.load %arg11[%c48, %c0_64] : memref<64x512xf32, #tpu.memory_space<vmem>>, vector<8x512xf32>
    %c0_65 = arith.constant 0 : index
    %c0_66 = arith.constant 0 : index
    %c0_67 = arith.constant 0 : index
    %195 = vector.load %arg6[%c0_65, %c0_66, %c0_67] : memref<1x128x512xf32, #tpu.memory_space<vmem>>, vector<1x128x512xf32>
    %196 = vector.shape_cast %195 : vector<1x128x512xf32> to vector<128x512xf32>
    %cst_68 = arith.constant dense<0.000000e+00> : vector<8x512xf32>
    %197 = tpu.matmul %192, %196, %cst_68 {dimension_numbers = #tpu.dot_dimension_numbers<[1], [0], [0], [1], [0, 0, 1, 1], [], []>} : vector<8x128xf32>, vector<128x512xf32>, vector<8x512xf32> -> vector<8x512xf32>
    %198 = arith.addf %194, %197 : vector<8x512xf32>
    %199 = vector.extract_strided_slice %198 {offsets = [0, 0], sizes = [8, 128], strides = [1, 1]} : vector<8x512xf32> to vector<8x128xf32>
    %200 = arith.negf %199 : vector<8x128xf32>
    %201 = math.exp %200 : vector<8x128xf32>
    %cst_69 = arith.constant 1.000000e+00 : f32
    %202 = vector.broadcast %cst_69 : f32 to vector<8x128xf32>
    %203 = arith.addf %202, %201 : vector<8x128xf32>
    %204 = arith.divf %202, %203 : vector<8x128xf32>
    %205 = vector.extract_strided_slice %198 {offsets = [0, 128], sizes = [8, 128], strides = [1, 1]} : vector<8x512xf32> to vector<8x128xf32>
    %206 = arith.negf %205 : vector<8x128xf32>
    %207 = math.exp %206 : vector<8x128xf32>
    %cst_70 = arith.constant 1.000000e+00 : f32
    %208 = vector.broadcast %cst_70 : f32 to vector<8x128xf32>
    %209 = arith.addf %208, %207 : vector<8x128xf32>
    %210 = arith.divf %208, %209 : vector<8x128xf32>
    %211 = vector.extract_strided_slice %198 {offsets = [0, 256], sizes = [8, 128], strides = [1, 1]} : vector<8x512xf32> to vector<8x128xf32>
    %212 = math.tanh %211 : vector<8x128xf32>
    %213 = vector.extract_strided_slice %198 {offsets = [0, 384], sizes = [8, 128], strides = [1, 1]} : vector<8x512xf32> to vector<8x128xf32>
    %214 = arith.negf %213 : vector<8x128xf32>
    %215 = math.exp %214 : vector<8x128xf32>
    %cst_71 = arith.constant 1.000000e+00 : f32
    %216 = vector.broadcast %cst_71 : f32 to vector<8x128xf32>
    %217 = arith.addf %216, %215 : vector<8x128xf32>
    %218 = arith.divf %216, %217 : vector<8x128xf32>
    %219 = arith.mulf %210, %190 : vector<8x128xf32>
    %220 = arith.mulf %204, %212 : vector<8x128xf32>
    %221 = arith.addf %219, %220 : vector<8x128xf32>
    %222 = math.tanh %221 : vector<8x128xf32>
    %223 = arith.mulf %218, %222 : vector<8x128xf32>
    %c48_72 = arith.constant 48 : index
    %c0_73 = arith.constant 0 : index
    %224 = vector.load %arg10[%c48_72, %c0_73] : memref<64x128xf32, #tpu.memory_space<vmem>>, vector<8x128xf32>
    tpu.vector_store %arg10[%c48_72, %c0_73], %223 {strides = array<i32>} : memref<64x128xf32, #tpu.memory_space<vmem>>, vector<8x128xf32>,
    %c56 = arith.constant 56 : index
    %c0_74 = arith.constant 0 : index
    %225 = vector.load %arg11[%c56, %c0_74] : memref<64x512xf32, #tpu.memory_space<vmem>>, vector<8x512xf32>
    %c0_75 = arith.constant 0 : index
    %c0_76 = arith.constant 0 : index
    %c0_77 = arith.constant 0 : index
    %226 = vector.load %arg6[%c0_75, %c0_76, %c0_77] : memref<1x128x512xf32, #tpu.memory_space<vmem>>, vector<1x128x512xf32>
    %227 = vector.shape_cast %226 : vector<1x128x512xf32> to vector<128x512xf32>
    %cst_78 = arith.constant dense<0.000000e+00> : vector<8x512xf32>
    %228 = tpu.matmul %223, %227, %cst_78 {dimension_numbers = #tpu.dot_dimension_numbers<[1], [0], [0], [1], [0, 0, 1, 1], [], []>} : vector<8x128xf32>, vector<128x512xf32>, vector<8x512xf32> -> vector<8x512xf32>
    %229 = arith.addf %225, %228 : vector<8x512xf32>
    %230 = vector.extract_strided_slice %229 {offsets = [0, 0], sizes = [8, 128], strides = [1, 1]} : vector<8x512xf32> to vector<8x128xf32>
    %231 = arith.negf %230 : vector<8x128xf32>
    %232 = math.exp %231 : vector<8x128xf32>
    %cst_79 = arith.constant 1.000000e+00 : f32
    %233 = vector.broadcast %cst_79 : f32 to vector<8x128xf32>
    %234 = arith.addf %233, %232 : vector<8x128xf32>
    %235 = arith.divf %233, %234 : vector<8x128xf32>
    %236 = vector.extract_strided_slice %229 {offsets = [0, 128], sizes = [8, 128], strides = [1, 1]} : vector<8x512xf32> to vector<8x128xf32>
    %237 = arith.negf %236 : vector<8x128xf32>
    %238 = math.exp %237 : vector<8x128xf32>
    %cst_80 = arith.constant 1.000000e+00 : f32
    %239 = vector.broadcast %cst_80 : f32 to vector<8x128xf32>
    %240 = arith.addf %239, %238 : vector<8x128xf32>
    %241 = arith.divf %239, %240 : vector<8x128xf32>
    %242 = vector.extract_strided_slice %229 {offsets = [0, 256], sizes = [8, 128], strides = [1, 1]} : vector<8x512xf32> to vector<8x128xf32>
    %243 = math.tanh %242 : vector<8x128xf32>
    %244 = vector.extract_strided_slice %229 {offsets = [0, 384], sizes = [8, 128], strides = [1, 1]} : vector<8x512xf32> to vector<8x128xf32>
    %245 = arith.negf %244 : vector<8x128xf32>
    %246 = math.exp %245 : vector<8x128xf32>
    %cst_81 = arith.constant 1.000000e+00 : f32
    %247 = vector.broadcast %cst_81 : f32 to vector<8x128xf32>
    %248 = arith.addf %247, %246 : vector<8x128xf32>
    %249 = arith.divf %247, %248 : vector<8x128xf32>
    %250 = arith.mulf %241, %221 : vector<8x128xf32>
    %251 = arith.mulf %235, %243 : vector<8x128xf32>
    %252 = arith.addf %250, %251 : vector<8x128xf32>
    %253 = math.tanh %252 : vector<8x128xf32>
    %254 = arith.mulf %249, %253 : vector<8x128xf32>
    %c56_82 = arith.constant 56 : index
    %c0_83 = arith.constant 0 : index
    %255 = vector.load %arg10[%c56_82, %c0_83] : memref<64x128xf32, #tpu.memory_space<vmem>>, vector<8x128xf32>
    tpu.vector_store %arg10[%c56_82, %c0_83], %254 {strides = array<i32>} : memref<64x128xf32, #tpu.memory_space<vmem>>, vector<8x128xf32>,
    %c0_84 = arith.constant 0 : index
    %c0_85 = arith.constant 0 : index
    %c0_86 = arith.constant 0 : index
    %256 = vector.load %arg8[%c0_84, %c0_85, %c0_86] : memref<1x8x128xf32, #tpu.memory_space<vmem>>, vector<1x8x128xf32>
    %257 = vector.shape_cast %256 : vector<1x8x128xf32> to vector<8x128xf32>
    %258 = vector.shape_cast %254 : vector<8x128xf32> to vector<1x8x128xf32>
    tpu.vector_store %arg8[%c0_84, %c0_85, %c0_86], %258 {strides = array<i32>} : memref<1x8x128xf32, #tpu.memory_space<vmem>>, vector<1x8x128xf32>,
    %c0_87 = arith.constant 0 : index
    %c0_88 = arith.constant 0 : index
    %c0_89 = arith.constant 0 : index
    %259 = vector.load %arg9[%c0_87, %c0_88, %c0_89] : memref<1x8x128xf32, #tpu.memory_space<vmem>>, vector<1x8x128xf32>
    %260 = vector.shape_cast %259 : vector<1x8x128xf32> to vector<8x128xf32>
    %261 = vector.shape_cast %252 : vector<8x128xf32> to vector<1x8x128xf32>
    tpu.vector_store %arg9[%c0_87, %c0_88, %c0_89], %261 {strides = array<i32>} : memref<1x8x128xf32, #tpu.memory_space<vmem>>, vector<1x8x128xf32>,
    return
  }
  func.func @transform_0(%arg0: i32, %arg1: i32) -> (i32, i32, i32) {
    %c0_i32 = arith.constant 0 : i32
    %c0_i32_0 = arith.constant 0 : i32
    %c0_i32_1 = arith.constant 0 : i32
    return %c0_i32, %arg0, %c0_i32_0 : i32, i32, i32
  }
  func.func @transform_1(%arg0: i32, %arg1: i32) -> (i32, i32) {
    %c0_i32 = arith.constant 0 : i32
    %c0_i32_0 = arith.constant 0 : i32
    %c0_i32_1 = arith.constant 0 : i32
    return %c0_i32, %c0_i32_0 : i32, i32
  }
  func.func @transform_2(%arg0: i32, %arg1: i32) -> (i32, i32) {
    %c0_i32 = arith.constant 0 : i32
    %c0_i32_0 = arith.constant 0 : i32
    %c0_i32_1 = arith.constant 0 : i32
    return %c0_i32, %c0_i32_0 : i32, i32
  }
  func.func @transform_3(%arg0: i32, %arg1: i32) -> (i32, i32, i32) {
    %c0_i32 = arith.constant 0 : i32
    %c0_i32_0 = arith.constant 0 : i32
    %c0_i32_1 = arith.constant 0 : i32
    return %arg1, %c0_i32, %c0_i32_0 : i32, i32, i32
  }
  func.func @transform_4(%arg0: i32, %arg1: i32) -> (i32, i32, i32) {
    %c0_i32 = arith.constant 0 : i32
    %c0_i32_0 = arith.constant 0 : i32
    %c0_i32_1 = arith.constant 0 : i32
    return %arg1, %c0_i32, %c0_i32_0 : i32, i32, i32
  }
  func.func @transform_5(%arg0: i32, %arg1: i32) -> (i32, i32, i32) {
    %c0_i32 = arith.constant 0 : i32
    %c0_i32_0 = arith.constant 0 : i32
    %c0_i32_1 = arith.constant 0 : i32
    return %arg1, %c0_i32, %c0_i32_0 : i32, i32, i32
  }
  func.func @transform_6(%arg0: i32, %arg1: i32) -> (i32, i32, i32) {
    %c0_i32 = arith.constant 0 : i32
    %c0_i32_0 = arith.constant 0 : i32
    return %arg1, %arg0, %c0_i32 : i32, i32, i32
  }
  func.func @transform_7(%arg0: i32, %arg1: i32) -> (i32, i32, i32) {
    %c0_i32 = arith.constant 0 : i32
    %c0_i32_0 = arith.constant 0 : i32
    return %arg1, %arg0, %c0_i32 : i32, i32, i32
  }
}

</mosaic_0001>

<llo_original>
// kernel: tpu_custom_call.1
$region0: #{tpu_custom_call.1}
  #allocation0 [shape = 'u32[]', space=smem, size = 0x4, offset = 0x4, fixed_abs, tag = 'smem constant byte address 0x4 - core index']
  #allocation1 [shape = 'u32[144,128]{1,0:T(1,128)}', space=vmem, size = 0x12000, scoped, tag = 'internal scratch']
  #allocation2 [shape = 'f32[64,128]{1,0:T(8,128)}', space=vmem, size = 0x8000, scoped, tag = 'scratch operand']
  #allocation3 [shape = 'f32[64,512]{1,0:T(8,128)}', space=vmem, size = 0x20000, scoped, tag = 'scratch operand']
  %s0 = inlined_call_operand.hbm [shape: f32[8,8,128], index: 0, kind: input, shape index: {}]
  %s1 = inlined_call_operand.hbm [shape: f32[128,128], index: 1, kind: input, shape index: {}]
  %s2 = inlined_call_operand.vmem [shape: f32[1,128], index: 2, kind: input, shape index: {}]
  %s3 = inlined_call_operand.hbm [shape: f32[2,128,512], index: 3, kind: input, shape index: {}]
  %s4 = inlined_call_operand.hbm [shape: f32[2,128,512], index: 4, kind: input, shape index: {}]
  %s5 = inlined_call_operand.vmem [shape: f32[2,1,512], index: 5, kind: input, shape index: {}]
  %s6 = inlined_call_operand.hbm [shape: f32[2,8,128], index: 6, kind: output, shape index: {0}]
  %s7 = inlined_call_operand.hbm [shape: f32[2,8,128], index: 7, kind: output, shape index: {1}]
  %8 = xla_tuple %s6, %s7
  %s9 = sld [smem:[#allocation0]]
  $region89: #{tpu_custom_call.1} parent=0
    _
  %s11 = ssub.s32 1, %s9
  %s12 = scalar_select 0, %s11, %s9
  $region1: #{tpu_custom_call.1} parent=0
    #allocation4 [shape = 'u8[32768]{0}', space=vmem, size = 0x8000, scoped, tag = 'input window, operand 0, single buffered']
    #allocation5 [shape = 's32[2]{0}', space=sflag, size = 0x8, scoped, tag = 'scoped memory for tpu_custom_call.1']
    #allocation6 [shape = 's32[2]{0}', space=sflag, size = 0x8, scoped, tag = 'scoped memory for tpu_custom_call.1']
    #allocation7 [shape = 'u8[65536]{0}', space=vmem, size = 0x10000, scoped, tag = 'input window, operand 1, single buffered']
    #allocation8 [shape = 's32[1]{0}', space=sflag, size = 0x4, scoped, tag = 'scoped memory for tpu_custom_call.1']
    #allocation9 [shape = 'u8[524288]{0}', space=vmem, size = 0x80000, scoped, tag = 'input window, operand 3']
    #allocation10 [shape = 'u8[524288]{0}', space=vmem, size = 0x80000, scoped, tag = 'input window, operand 4']
    #allocation11 [shape = 'u8[8192]{0}', space=vmem, size = 0x2000, scoped, tag = 'output window, operand 0']
    #allocation12 [shape = 'u8[8192]{0}', space=vmem, size = 0x2000, scoped, tag = 'output window, operand 1']
    #allocation13 [shape = 's32[2]{0}', space=sflag, size = 0x8, scoped, tag = 'scoped memory for tpu_custom_call.1']
    %13 = vsyncpa [#allocation5], 0
    %14 = vsyncpa [#allocation8], 0
    %15 = vsyncpa [#allocation6], 0
    %s16 = scalar_lea.sflag [#allocation6], 1
    %17 = vsyncpa %s16, 0
    %18 = vsyncpa [#allocation13], 0
    %s19 = scalar_lea.sflag [#allocation13], 1
    %20 = vsyncpa %s19, 0
    loop: start=0, step=1, limit=4
    $region2: #{tpu_custom_call.1} parent=1 // loop_pre_header
      _
    $region3: #{tpu_custom_call.1} parent=1 // loop_header
      %s22 = sphi 0, %s26
      %p23 = scmp.ge.s32.totalorder %s22, 4
      %s29 = sphi 0, %s41
      %s30 = sphi 0, %s37
      %s31 = sphi 0, %s29
      %s32 = sphi 0, %s30
      %s33 = sphi 0, %s31
      %s34 = sphi 0, %s32
      %s44 = sphi 0, %s46
      %s47 = sphi 0, %s44
      %s48 = sphi 0, %s47
      %s64 = sphi 0, %s48
      %s68 = sphi 0, %s68
      %s70 = sphi 0, %s68
      %s71 = sphi 0, %s70
      %s85 = sphi 0, %s71
      %s89 = sphi 0, %s89
      %s91 = sphi 0, %s89
      %s92 = sphi 0, %s91
      %s106 = sphi 0, %s92
      %s112 = sphi 0, %s114
      %s115 = sphi 0, %s112
      %s116 = sphi 0, %s115
      %s132 = sphi 0, %s116
      %s138 = sphi 0, %s140
      %s141 = sphi 0, %s138
      %s142 = sphi 0, %s141
      %s158 = sphi 0, %s142
      %s164 = sphi 0, %s166
      %s167 = sphi 0, %s164
      %s168 = sphi 0, %s167
      %s184 = sphi 0, %s168
      %s192 = sphi 0, %s194
      %s195 = sphi 0, %s192
      %s196 = sphi 0, %s195
      %s212 = sphi 0, %s196
      %s220 = sphi 0, %s222
      %s223 = sphi 0, %s220
      %s224 = sphi 0, %s223
      %s240 = sphi 0, %s224
    $region4: #{tpu_custom_call.1} parent=1 // loop_header_branch
      %25 = sbr.rel (%p23) target = $region8
    $region5: #{tpu_custom_call.1} parent=1 // loop_body
      %s27 = ssub.s32 %s22, 1
      %s28 = ssub.s32 %s22, 2
      %s35 = sadd.s32 1, %s30
      %p36 = scmp.ge.s32.totalorder %s35, 2
      %s37 = scalar_select %p36, 0, %s35
      %s38 = sadd.s32 1, %s29
      %s39 = scalar_select %p36, %s38, %s29
      %p40 = scmp.ge.s32.totalorder %s39, 1
      %s41 = scalar_select %p40, 0, %s39
      %s42 = ssub.s32 %s29, %s41
      %p43 = scmp.eq.s32.totalorder %s42, 0
      %s45 = sadd.s32 %s44, 1
      %s46 = scalar_select %p43, %s44, %s45
      %p49 = pneg %p43
      %p50 = scmp.eq.s32.totalorder %s22, 1
      %p51 = por %p49, %p50
      %p52 = scmp.ne.s32.totalorder %s44, %s47
      %p53 = scmp.eq.s32.totalorder %s22, 0
      %p54 = por %p52, %p53
      %p55 = scmp.ne.s32.totalorder %s44, %s47
      %p56 = scmp.eq.s32.totalorder %s27, 1
      %p57 = por %p55, %p56
      %p58 = scmp.ne.s32.totalorder %s47, %s48
      %p59 = scmp.eq.s32.totalorder %s27, 0
      %p60 = por %p58, %p59
      %p61 = scmp.ne.s32.totalorder %s47, %s48
      %p62 = scmp.eq.s32.totalorder %s28, 1
      %p63 = por %p61, %p62
      %p65 = scmp.ne.s32.totalorder %s48, %s64
      %p66 = scmp.eq.s32.totalorder %s28, 0
      %p67 = por %p65, %p66
      %s69 = sadd.s32 %s68, 1
      %p72 = scmp.eq.s32.totalorder %s22, 1
      %p73 = scmp.ne.s32.totalorder %s68, %s70
      %p74 = scmp.eq.s32.totalorder %s22, 0
      %p75 = por %p73, %p74
      %p76 = scmp.ne.s32.totalorder %s68, %s70
      %p77 = scmp.eq.s32.totalorder %s27, 1
      %p78 = por %p76, %p77
      %p79 = scmp.ne.s32.totalorder %s70, %s71
      %p80 = scmp.eq.s32.totalorder %s27, 0
      %p81 = por %p79, %p80
      %p82 = scmp.ne.s32.totalorder %s70, %s71
      %p83 = scmp.eq.s32.totalorder %s28, 1
      %p84 = por %p82, %p83
      %p86 = scmp.ne.s32.totalorder %s71, %s85
      %p87 = scmp.eq.s32.totalorder %s28, 0
      %p88 = por %p86, %p87
      %s90 = sadd.s32 %s89, 1
      %p93 = scmp.eq.s32.totalorder %s22, 1
      %p94 = scmp.ne.s32.totalorder %s89, %s91
      %p95 = scmp.eq.s32.totalorder %s22, 0
      %p96 = por %p94, %p95
      %p97 = scmp.ne.s32.totalorder %s89, %s91
      %p98 = scmp.eq.s32.totalorder %s27, 1
      %p99 = por %p97, %p98
      %p100 = scmp.ne.s32.totalorder %s91, %s92
      %p101 = scmp.eq.s32.totalorder %s27, 0
      %p102 = por %p100, %p101
      %p103 = scmp.ne.s32.totalorder %s91, %s92
      %p104 = scmp.eq.s32.totalorder %s28, 1
      %p105 = por %p103, %p104
      %p107 = scmp.ne.s32.totalorder %s92, %s106
      %p108 = scmp.eq.s32.totalorder %s28, 0
      %p109 = por %p107, %p108
      %s110 = ssub.s32 %s30, %s37
      %p111 = scmp.eq.s32.totalorder %s110, 0
      %s113 = sadd.s32 %s112, 1
      %s114 = scalar_select %p111, %s112, %s113
      %p117 = pneg %p111
      %p118 = scmp.eq.s32.totalorder %s22, 1
      %p119 = por %p117, %p118
      %p120 = scmp.ne.s32.totalorder %s112, %s115
      %p121 = scmp.eq.s32.totalorder %s22, 0
      %p122 = por %p120, %p121
      %p123 = scmp.ne.s32.totalorder %s112, %s115
      %p124 = scmp.eq.s32.totalorder %s27, 1
      %p125 = por %p123, %p124
      %p126 = scmp.ne.s32.totalorder %s115, %s116
      %p127 = scmp.eq.s32.totalorder %s27, 0
      %p128 = por %p126, %p127
      %p129 = scmp.ne.s32.totalorder %s115, %s116
      %p130 = scmp.eq.s32.totalorder %s28, 1
      %p131 = por %p129, %p130
      %p133 = scmp.ne.s32.totalorder %s116, %s132
      %p134 = scmp.eq.s32.totalorder %s28, 0
      %p135 = por %p133, %p134
      %s136 = ssub.s32 %s30, %s37
      %p137 = scmp.eq.s32.totalorder %s136, 0
      %s139 = sadd.s32 %s138, 1
      %s140 = scalar_select %p137, %s138, %s139
      %p143 = pneg %p137
      %p144 = scmp.eq.s32.totalorder %s22, 1
      %p145 = por %p143, %p144
      %p146 = scmp.ne.s32.totalorder %s138, %s141
      %p147 = scmp.eq.s32.totalorder %s22, 0
      %p148 = por %p146, %p147
      %p149 = scmp.ne.s32.totalorder %s138, %s141
      %p150 = scmp.eq.s32.totalorder %s27, 1
      %p151 = por %p149, %p150
      %p152 = scmp.ne.s32.totalorder %s141, %s142
      %p153 = scmp.eq.s32.totalorder %s27, 0
      %p154 = por %p152, %p153
      %p155 = scmp.ne.s32.totalorder %s141, %s142
      %p156 = scmp.eq.s32.totalorder %s28, 1
      %p157 = por %p155, %p156
      %p159 = scmp.ne.s32.totalorder %s142, %s158
      %p160 = scmp.eq.s32.totalorder %s28, 0
      %p161 = por %p159, %p160
      %s162 = ssub.s32 %s30, %s37
      %p163 = scmp.eq.s32.totalorder %s162, 0
      %s165 = sadd.s32 %s164, 1
      %s166 = scalar_select %p163, %s164, %s165
      %p169 = pneg %p163
      %p170 = scmp.eq.s32.totalorder %s22, 1
      %p171 = por %p169, %p170
      %p172 = scmp.ne.s32.totalorder %s164, %s167
      %p173 = scmp.eq.s32.totalorder %s22, 0
      %p174 = por %p172, %p173
      %p175 = scmp.ne.s32.totalorder %s164, %s167
      %p176 = scmp.eq.s32.totalorder %s27, 1
      %p177 = por %p175, %p176
      %p178 = scmp.ne.s32.totalorder %s167, %s168
      %p179 = scmp.eq.s32.totalorder %s27, 0
      %p180 = por %p178, %p179
      %p181 = scmp.ne.s32.totalorder %s167, %s168
      %p182 = scmp.eq.s32.totalorder %s28, 1
      %p183 = por %p181, %p182
      %p185 = scmp.ne.s32.totalorder %s168, %s184
      %p186 = scmp.eq.s32.totalorder %s28, 0
      %p187 = por %p185, %p186
      %s188 = ssub.s32 %s30, %s37
      %s189 = ssub.s32 %s29, %s41
      %s190 = sor.u32 %s188, %s189
      %p191 = scmp.eq.s32.totalorder %s190, 0
      %s193 = sadd.s32 %s192, 1
      %s194 = scalar_select %p191, %s192, %s193
      %p197 = pneg %p191
      %p198 = scmp.eq.s32.totalorder %s22, 1
      %p199 = por %p197, %p198
      %p200 = scmp.ne.s32.totalorder %s192, %s195
      %p201 = scmp.eq.s32.totalorder %s22, 0
      %p202 = por %p200, %p201
      %p203 = scmp.ne.s32.totalorder %s192, %s195
      %p204 = scmp.eq.s32.totalorder %s27, 1
      %p205 = por %p203, %p204
      %p206 = scmp.ne.s32.totalorder %s195, %s196
      %p207 = scmp.eq.s32.totalorder %s27, 0
      %p208 = por %p206, %p207
      %p209 = scmp.ne.s32.totalorder %s195, %s196
      %p210 = scmp.eq.s32.totalorder %s28, 1
      %p211 = por %p209, %p210
      %p213 = scmp.ne.s32.totalorder %s196, %s212
      %p214 = scmp.eq.s32.totalorder %s28, 0
      %p215 = por %p213, %p214
      %s216 = ssub.s32 %s30, %s37
      %s217 = ssub.s32 %s29, %s41
      %s218 = sor.u32 %s216, %s217
      %p219 = scmp.eq.s32.totalorder %s218, 0
      %s221 = sadd.s32 %s220, 1
      %s222 = scalar_select %p219, %s220, %s221
      %p225 = pneg %p219
      %p226 = scmp.eq.s32.totalorder %s22, 1
      %p227 = por %p225, %p226
      %p228 = scmp.ne.s32.totalorder %s220, %s223
      %p229 = scmp.eq.s32.totalorder %s22, 0
      %p230 = por %p228, %p229
      %p231 = scmp.ne.s32.totalorder %s220, %s223
      %p232 = scmp.eq.s32.totalorder %s27, 1
      %p233 = por %p231, %p232
      %p234 = scmp.ne.s32.totalorder %s223, %s224
      %p235 = scmp.eq.s32.totalorder %s27, 0
      %p236 = por %p234, %p235
      %p237 = scmp.ne.s32.totalorder %s223, %s224
      %p238 = scmp.eq.s32.totalorder %s28, 1
      %p239 = por %p237, %p238
      %p241 = scmp.ne.s32.totalorder %s224, %s240
      %p242 = scmp.eq.s32.totalorder %s28, 0
      %p243 = por %p241, %p242
      %p244 = scmp.le.s32.totalorder 1, %s22
      %p245 = scmp.lt.s32.totalorder %s22, 3
      %p246 = pnand %p244, %p245
      %p247 = pneg %p246
      // Predicated region
      $region9: #{tpu_custom_call.1} parent=5 // pred_check
        _
      $region10: #{tpu_custom_call.1} parent=5 // pred_check_branch
        %249 = sbr.rel (%p246) target = $region12
      $region11: #{tpu_custom_call.1} parent=5 // pred_region
        %s250 = ssub.s32 %s22, 1
        // Predicated region
        $region13: #{tpu_custom_call.1} parent=11 // pred_check
          %p251 = pneg %p60
        $region14: #{tpu_custom_call.1} parent=11 // pred_check_branch
          %253 = sbr.rel (%p251) target = $region16
        $region15: #{tpu_custom_call.1} parent=11 // pred_region
          %s255 = ssub.s32 1024, 1024
          %256 = vsyncadd [#allocation5], %s255
          %s257 = smul.addr %s31, 128
          %s258 = scalar_lea.hbm %s0, %s257
          %s259 = sshll.u32 [#allocation4], 4
          %s260 = int_to_ptr.vmem [resolvable:$true] %s259
          %265 = dma.hbm_to_vmem [thread:$0]  %s258, 1024, %s260, [#allocation5], 128, 128, 8
        $region16: #{tpu_custom_call.1} parent=11 // pred_fallthru
          _
        // Predicated region
        $region17: #{tpu_custom_call.1} parent=11 // pred_check
          %p266 = pneg %p81
        $region18: #{tpu_custom_call.1} parent=11 // pred_check_branch
          %268 = sbr.rel (%p266) target = $region20
        $region19: #{tpu_custom_call.1} parent=11 // pred_region
          %s270 = ssub.s32 2048, 2048
          %271 = vsyncadd [#allocation8], %s270
          %s272 = sshll.u32 [#allocation7], 4
          %s273 = int_to_ptr.vmem [resolvable:$true] %s272
          %278 = dma.hbm_to_vmem [thread:$0]  %s1, 2048, %s273, [#allocation8], 128, 128, 8
        $region20: #{tpu_custom_call.1} parent=11 // pred_fallthru
          _
        // Predicated region
        $region21: #{tpu_custom_call.1} parent=11 // pred_check
          %p279 = pneg %p102
        $region22: #{tpu_custom_call.1} parent=11 // pred_check_branch
          %281 = sbr.rel (%p279) target = $region24
        $region23: #{tpu_custom_call.1} parent=11 // pred_region
          _
        $region24: #{tpu_custom_call.1} parent=11 // pred_fallthru
          _
      $region12: #{tpu_custom_call.1} parent=5 // pred_fallthru
        _
      %p282 = scmp.lt.s32.totalorder %s22, 2
      // Predicated region
      $region25: #{tpu_custom_call.1} parent=5 // pred_check
        %p283 = pneg %p282
      $region26: #{tpu_custom_call.1} parent=5 // pred_check_branch
        %285 = sbr.rel (%p283) target = $region28
      $region27: #{tpu_custom_call.1} parent=5 // pred_region
        // Predicated region
        $region29: #{tpu_custom_call.1} parent=27 // pred_check
          %p286 = pneg %p122
        $region30: #{tpu_custom_call.1} parent=27 // pred_check_branch
          %288 = sbr.rel (%p286) target = $region32
        $region31: #{tpu_custom_call.1} parent=27 // pred_region
          %s289 = sand.u32 %s22, 1
          %s290 = scalar_lea.sflag [#allocation5], %s289
          %s291 = sand.u32 %s112, 1
          %s292 = smul.addr %s291, 512
          %s293 = scalar_lea.vmem [#allocation9], %s292
          %s295 = ssub.s32 8192, 8192
          %296 = vsyncadd %s290, %s295
          %s297 = smul.addr %s30, 64
          %s298 = smul.addr %s297, 128
          %s299 = scalar_lea.hbm %s3, %s298
          %s300 = sshll.u32 %s293, 4
          %s301 = int_to_ptr.vmem [resolvable:$true] %s300
          %306 = dma.hbm_to_vmem [thread:$0]  %s299, 8192, %s301, %s290, 512, 512, 32
        $region32: #{tpu_custom_call.1} parent=27 // pred_fallthru
          _
        // Predicated region
        $region33: #{tpu_custom_call.1} parent=27 // pred_check
          %p307 = pneg %p148
        $region34: #{tpu_custom_call.1} parent=27 // pred_check_branch
          %309 = sbr.rel (%p307) target = $region36
        $region35: #{tpu_custom_call.1} parent=27 // pred_region
          %s310 = sand.u32 %s22, 1
          %s311 = scalar_lea.sflag [#allocation5], %s310
          %s312 = sand.u32 %s138, 1
          %s313 = smul.addr %s312, 512
          %s314 = scalar_lea.vmem [#allocation10], %s313
          %s316 = ssub.s32 8192, 8192
          %317 = vsyncadd %s311, %s316
          %s318 = smul.addr %s30, 64
          %s319 = smul.addr %s318, 128
          %s320 = scalar_lea.hbm %s4, %s319
          %s321 = sshll.u32 %s314, 4
          %s322 = int_to_ptr.vmem [resolvable:$true] %s321
          %327 = dma.hbm_to_vmem [thread:$0]  %s320, 8192, %s322, %s311, 512, 512, 32
        $region36: #{tpu_custom_call.1} parent=27 // pred_fallthru
          _
        // Predicated region
        $region37: #{tpu_custom_call.1} parent=27 // pred_check
          %p328 = pneg %p174
        $region38: #{tpu_custom_call.1} parent=27 // pred_check_branch
          %330 = sbr.rel (%p328) target = $region40
        $region39: #{tpu_custom_call.1} parent=27 // pred_region
          %p331 = scmp.lt.s32.totalorder %s30, 1
          %s332 = scalar_select %p331, %s30, 1
          %s333 = smul.addr %s332, 4
          %s334 = scalar_lea.vmem %s5, %s333
        $region40: #{tpu_custom_call.1} parent=27 // pred_fallthru
          _
      $region28: #{tpu_custom_call.1} parent=5 // pred_fallthru
        _
      %p335 = scmp.le.s32.totalorder 1, %s22
      %p336 = scmp.lt.s32.totalorder %s22, 3
      %p337 = pnand %p335, %p336
      %p338 = pneg %p337
      // Predicated region
      $region41: #{tpu_custom_call.1} parent=5 // pred_check
        _
      $region42: #{tpu_custom_call.1} parent=5 // pred_check_branch
        %340 = sbr.rel (%p337) target = $region44
      $region43: #{tpu_custom_call.1} parent=5 // pred_region
        %s341 = ssub.s32 %s22, 1
        // Predicated region
        $region45: #{tpu_custom_call.1} parent=43 // pred_check
          %p342 = pneg %p60
        $region46: #{tpu_custom_call.1} parent=43 // pred_check_branch
          %344 = sbr.rel (%p342) target = $region48
        $region47: #{tpu_custom_call.1} parent=43 // pred_region
          %345 = dma.done [#allocation5], 1024
        $region48: #{tpu_custom_call.1} parent=43 // pred_fallthru
          _
        // Predicated region
        $region49: #{tpu_custom_call.1} parent=43 // pred_check
          %p346 = pneg %p81
        $region50: #{tpu_custom_call.1} parent=43 // pred_check_branch
          %348 = sbr.rel (%p346) target = $region52
        $region51: #{tpu_custom_call.1} parent=43 // pred_region
          %349 = dma.done [#allocation8], 2048
        $region52: #{tpu_custom_call.1} parent=43 // pred_fallthru
          _
        %s350 = sand.u32 %s27, 1
        %s351 = scalar_lea.sflag [#allocation5], %s350
        %s352 = sand.u32 %s115, 1
        %s353 = smul.addr %s352, 512
        %s354 = scalar_lea.vmem [#allocation9], %s353
        // Predicated region
        $region53: #{tpu_custom_call.1} parent=43 // pred_check
          %p355 = pneg %p128
        $region54: #{tpu_custom_call.1} parent=43 // pred_check_branch
          %357 = sbr.rel (%p355) target = $region56
        $region55: #{tpu_custom_call.1} parent=43 // pred_region
          %358 = dma.done %s351, 8192
        $region56: #{tpu_custom_call.1} parent=43 // pred_fallthru
          _
        %s359 = sand.u32 %s27, 1
        %s360 = scalar_lea.sflag [#allocation5], %s359
        %s361 = sand.u32 %s141, 1
        %s362 = smul.addr %s361, 512
        %s363 = scalar_lea.vmem [#allocation10], %s362
        // Predicated region
        $region57: #{tpu_custom_call.1} parent=43 // pred_check
          %p364 = pneg %p154
        $region58: #{tpu_custom_call.1} parent=43 // pred_check_branch
          %366 = sbr.rel (%p364) target = $region60
        $region59: #{tpu_custom_call.1} parent=43 // pred_region
          %367 = dma.done %s360, 8192
        $region60: #{tpu_custom_call.1} parent=43 // pred_fallthru
          _
        %p368 = pneg %p60
        %p369 = pneg %p57
        %p370 = pneg %p81
        %p371 = pneg %p78
        %p372 = pneg %p102
        %p373 = pneg %p99
        %s374 = sand.u32 %s27, 1
        %s375 = scalar_lea.sflag [#allocation5], %s374
        %s376 = sand.u32 %s115, 1
        %s377 = smul.addr %s376, 512
        %s378 = scalar_lea.vmem [#allocation9], %s377
        %p379 = pneg %p128
        %p380 = pneg %p125
        %s381 = sand.u32 %s27, 1
        %s382 = scalar_lea.sflag [#allocation5], %s381
        %s383 = sand.u32 %s141, 1
        %s384 = smul.addr %s383, 512
        %s385 = scalar_lea.vmem [#allocation10], %s384
        %p386 = pneg %p154
        %p387 = pneg %p151
        %p388 = scmp.lt.s32.totalorder %s32, 1
        %s389 = scalar_select %p388, %s32, 1
        %s390 = smul.addr %s389, 4
        %s391 = scalar_lea.vmem %s5, %s390
        %p392 = pneg %p180
        %p393 = pneg %p177
        %p394 = pneg %p208
        %p395 = pneg %p205
        %s396 = sand.u32 %s195, 1
        %s397 = scalar_lea.sflag [#allocation6], %s396
        %s398 = sand.u32 %s195, 1
        %s399 = smul.addr %s398, 8
        %s400 = scalar_lea.vmem [#allocation11], %s399
        %p401 = pneg %p236
        %p402 = pneg %p233
        %s403 = sand.u32 %s223, 1
        %s404 = scalar_lea.sflag [#allocation13], %s403
        %s405 = sand.u32 %s223, 1
        %s406 = smul.addr %s405, 8
        %s407 = scalar_lea.vmem [#allocation12], %s406
        %p408 = scmp.lt.s32.totalorder %s32, 1
        %s409 = scalar_select %p408, %s32, 1
        %s410 = smul.addr %s409, 4
        %s411 = scalar_lea.vmem %s5, %s410
        %p412 = scmp.eq.s32.totalorder %s32, 0
        // Predicated region
        $region61: #{tpu_custom_call.1} parent=43 // pred_check
          %p413 = pneg %p412
        $region62: #{tpu_custom_call.1} parent=43 // pred_check_branch
          %415 = sbr.rel (%p413) target = $region64
        $region63: #{tpu_custom_call.1} parent=43 // pred_region
          %v416 = vld [vmem:[#allocation4] sm:$0xff]
          %v417 = vld [vmem:[#allocation4 + $0x8] sm:$0xff]
          %v418 = vld [vmem:[#allocation4 + $0x10] sm:$0xff]
          %v419 = vld [vmem:[#allocation4 + $0x18] sm:$0xff]
          %v420 = vld [vmem:[#allocation4 + $0x20] sm:$0xff]
          %v421 = vld [vmem:[#allocation4 + $0x28] sm:$0xff]
          %v422 = vld [vmem:[#allocation4 + $0x30] sm:$0xff]
          %v423 = vld [vmem:[#allocation4 + $0x38] sm:$0xff]
          %v424 = vld [vmem:[#allocation7] sm:$0xff]
          %v425 = vld [vmem:[#allocation7 + $0x8] sm:$0xff]
          %v426 = vld [vmem:[#allocation7 + $0x10] sm:$0xff]
          %v427 = vld [vmem:[#allocation7 + $0x18] sm:$0xff]
          %v428 = vld [vmem:[#allocation7 + $0x20] sm:$0xff]
          %v429 = vld [vmem:[#allocation7 + $0x28] sm:$0xff]
          %v430 = vld [vmem:[#allocation7 + $0x30] sm:$0xff]
          %v431 = vld [vmem:[#allocation7 + $0x38] sm:$0xff]
          %v432 = vld [vmem:[#allocation7 + $0x40] sm:$0xff]
          %v433 = vld [vmem:[#allocation7 + $0x48] sm:$0xff]
          %v434 = vld [vmem:[#allocation7 + $0x50] sm:$0xff]
          %v435 = vld [vmem:[#allocation7 + $0x58] sm:$0xff]
          %v436 = vld [vmem:[#allocation7 + $0x60] sm:$0xff]
          %v437 = vld [vmem:[#allocation7 + $0x68] sm:$0xff]
          %v438 = vld [vmem:[#allocation7 + $0x70] sm:$0xff]
          %v439 = vld [vmem:[#allocation7 + $0x78] sm:$0xff]
          %v440 = vld [vmem:[%s2] sm:$0x1]
          %v442 = vlaneseq
          %v443 = vshrl.u32 %v442, 7
          %v444 = vsub.s32 0, %v443
          %v445 = vrot.slane %v440, %v444
          %447 = vmatprep.subr.mxu0 0.0
          %448 = vmatpush1.msra.mxu0 %v439
          %449 = vmatprep.subr.mxu0 0.0
          %450 = vmatpush1.msra.mxu0 %v438
          %451 = vmatprep.subr.mxu0 0.0
          %452 = vmatpush1.msra.mxu0 %v437
          %453 = vmatprep.subr.mxu0 0.0
          %454 = vmatpush1.msra.mxu0 %v436
          %455 = vmatprep.subr.mxu0 0.0
          %456 = vmatpush1.msra.mxu0 %v435
          %457 = vmatprep.subr.mxu0 0.0
          %458 = vmatpush1.msra.mxu0 %v434
          %459 = vmatprep.subr.mxu0 0.0
          %460 = vmatpush1.msra.mxu0 %v433
          %461 = vmatprep.subr.mxu0 0.0
          %462 = vmatpush1.msra.mxu0 %v432
          %463 = vmatprep.subr.mxu0 0.0
          %464 = vmatpush1.msra.mxu0 %v431
          %465 = vmatprep.subr.mxu0 0.0
          %466 = vmatpush1.msra.mxu0 %v430
          %467 = vmatprep.subr.mxu0 0.0
          %468 = vmatpush1.msra.mxu0 %v429
          %469 = vmatprep.subr.mxu0 0.0
          %470 = vmatpush1.msra.mxu0 %v428
          %471 = vmatprep.subr.mxu0 0.0
          %472 = vmatpush1.msra.mxu0 %v427
          %473 = vmatprep.subr.mxu0 0.0
          %474 = vmatpush1.msra.mxu0 %v426
          %475 = vmatprep.subr.mxu0 0.0
          %476 = vmatpush1.msra.mxu0 %v425
          %477 = vmatprep.subr.mxu0 0.0
          %478 = vmatpush1.msra.mxu0 %v424
          %479 = vmatprep.subr.mxu0 0.0
          %480 = vmatpush2.msra.mxu0 0.0
          %481 = vmatprep.subr.mxu0 0.0
          %482 = vmatpush2.msra.mxu0 0.0
          %483 = vmatprep.subr.mxu0 0.0
          %484 = vmatpush2.msra.mxu0 0.0
          %485 = vmatprep.subr.mxu0 0.0
          %486 = vmatpush2.msra.mxu0 0.0
          %487 = vmatprep.subr.mxu0 0.0
          %488 = vmatpush2.msra.mxu0 0.0
          %489 = vmatprep.subr.mxu0 0.0
          %490 = vmatpush2.msra.mxu0 0.0
          %491 = vmatprep.subr.mxu0 0.0
          %492 = vmatpush2.msra.mxu0 0.0
          %493 = vmatprep.subr.mxu0 0.0
          %494 = vmatpush2.msra.mxu0 0.0
          %495 = vmatprep.subr.mxu0 0.0
          %496 = vmatpush2.msra.mxu0 0.0
          %497 = vmatprep.subr.mxu0 0.0
          %498 = vmatpush2.msra.mxu0 0.0
          %499 = vmatprep.subr.mxu0 0.0
          %500 = vmatpush2.msra.mxu0 0.0
          %501 = vmatprep.subr.mxu0 0.0
          %502 = vmatpush2.msra.mxu0 0.0
          %503 = vmatprep.subr.mxu0 0.0
          %504 = vmatpush2.msra.mxu0 0.0
          %505 = vmatprep.subr.mxu0 0.0
          %506 = vmatpush2.msra.mxu0 0.0
          %507 = vmatprep.subr.mxu0 0.0
          %508 = vmatpush2.msra.mxu0 0.0
          %509 = vmatprep.subr.mxu0 0.0
          %510 = vmatpush2.msra.mxu0 0.0
          %511 = vmatprep.mubr.f32.mxu0 0.0
          %512 = vmatmul.mubr.f32.gmra.mxu0 %v416
          %v513 = vpop.f32.mrf.mxu0
          %v514 = vadd.f32 %v445, %v513
          %v515 = vpop.f32.mrf.mxu0
          %516 = vmatprep.mubr.f32.mxu0 0.0
          %517 = vmatmul.mubr.f32.gmra.mxu0 %v417
          %v518 = vpop.f32.mrf.mxu0
          %v519 = vadd.f32 %v445, %v518
          %v520 = vpop.f32.mrf.mxu0
          %521 = vmatprep.mubr.f32.mxu0 0.0
          %522 = vmatmul.mubr.f32.gmra.mxu0 %v418
          %v523 = vpop.f32.mrf.mxu0
          %v524 = vadd.f32 %v445, %v523
          %v525 = vpop.f32.mrf.mxu0
          %526 = vmatprep.mubr.f32.mxu0 0.0
          %527 = vmatmul.mubr.f32.gmra.mxu0 %v419
          %v528 = vpop.f32.mrf.mxu0
          %v529 = vadd.f32 %v445, %v528
          %v530 = vpop.f32.mrf.mxu0
          %531 = vmatprep.mubr.f32.mxu0 0.0
          %532 = vmatmul.mubr.f32.gmra.mxu0 %v420
          %v533 = vpop.f32.mrf.mxu0
          %v534 = vadd.f32 %v445, %v533
          %v535 = vpop.f32.mrf.mxu0
          %536 = vmatprep.mubr.f32.mxu0 0.0
          %537 = vmatmul.mubr.f32.gmra.mxu0 %v421
          %v538 = vpop.f32.mrf.mxu0
          %v539 = vadd.f32 %v445, %v538
          %v540 = vpop.f32.mrf.mxu0
          %541 = vmatprep.mubr.f32.mxu0 0.0
          %542 = vmatmul.mubr.f32.gmra.mxu0 %v422
          %v543 = vpop.f32.mrf.mxu0
          %v544 = vadd.f32 %v445, %v543
          %v545 = vpop.f32.mrf.mxu0
          %546 = vmatprep.mubr.f32.mxu0 0.0
          %547 = vmatmul.mubr.f32.gmra.mxu0 %v423
          %v548 = vpop.f32.mrf.mxu0
          %v549 = vadd.f32 %v445, %v548
          %v550 = vpop.f32.mrf.mxu0
          %551 = vdwg.mxu0
          %v552 = vmax.f32 %v514, 0.0
          %v553 = vmax.f32 %v519, 0.0
          %v554 = vmax.f32 %v524, 0.0
          %v555 = vmax.f32 %v529, 0.0
          %v556 = vmax.f32 %v534, 0.0
          %v557 = vmax.f32 %v539, 0.0
          %v558 = vmax.f32 %v544, 0.0
          %v559 = vmax.f32 %v549, 0.0
          %v560 = vld [vmem:[%s354] sm:$0xff]
          %v561 = vld [vmem:[%s354 + $0x8] sm:$0xff]
          %v562 = vld [vmem:[%s354 + $0x10] sm:$0xff]
          %v563 = vld [vmem:[%s354 + $0x18] sm:$0xff]
          %v564 = vld [vmem:[%s354 + $0x20] sm:$0xff]
          %v565 = vld [vmem:[%s354 + $0x28] sm:$0xff]
          %v566 = vld [vmem:[%s354 + $0x30] sm:$0xff]
          %v567 = vld [vmem:[%s354 + $0x38] sm:$0xff]
          %v568 = vld [vmem:[%s354 + $0x40] sm:$0xff]
          %v569 = vld [vmem:[%s354 + $0x48] sm:$0xff]
          %v570 = vld [vmem:[%s354 + $0x50] sm:$0xff]
          %v571 = vld [vmem:[%s354 + $0x58] sm:$0xff]
          %v572 = vld [vmem:[%s354 + $0x60] sm:$0xff]
          %v573 = vld [vmem:[%s354 + $0x68] sm:$0xff]
          %v574 = vld [vmem:[%s354 + $0x70] sm:$0xff]
          %v575 = vld [vmem:[%s354 + $0x78] sm:$0xff]
          %v576 = vld [vmem:[%s354 + $0x80] sm:$0xff]
          %v577 = vld [vmem:[%s354 + $0x88] sm:$0xff]
          %v578 = vld [vmem:[%s354 + $0x90] sm:$0xff]
          %v579 = vld [vmem:[%s354 + $0x98] sm:$0xff]
          %v580 = vld [vmem:[%s354 + $0xa0] sm:$0xff]
          %v581 = vld [vmem:[%s354 + $0xa8] sm:$0xff]
          %v582 = vld [vmem:[%s354 + $0xb0] sm:$0xff]
          %v583 = vld [vmem:[%s354 + $0xb8] sm:$0xff]
          %v584 = vld [vmem:[%s354 + $0xc0] sm:$0xff]
          %v585 = vld [vmem:[%s354 + $0xc8] sm:$0xff]
          %v586 = vld [vmem:[%s354 + $0xd0] sm:$0xff]
          %v587 = vld [vmem:[%s354 + $0xd8] sm:$0xff]
          %v588 = vld [vmem:[%s354 + $0xe0] sm:$0xff]
          %v589 = vld [vmem:[%s354 + $0xe8] sm:$0xff]
          %v590 = vld [vmem:[%s354 + $0xf0] sm:$0xff]
          %v591 = vld [vmem:[%s354 + $0xf8] sm:$0xff]
          %v592 = vld [vmem:[%s354 + $0x100] sm:$0xff]
          %v593 = vld [vmem:[%s354 + $0x108] sm:$0xff]
          %v594 = vld [vmem:[%s354 + $0x110] sm:$0xff]
          %v595 = vld [vmem:[%s354 + $0x118] sm:$0xff]
          %v596 = vld [vmem:[%s354 + $0x120] sm:$0xff]
          %v597 = vld [vmem:[%s354 + $0x128] sm:$0xff]
          %v598 = vld [vmem:[%s354 + $0x130] sm:$0xff]
          %v599 = vld [vmem:[%s354 + $0x138] sm:$0xff]
          %v600 = vld [vmem:[%s354 + $0x140] sm:$0xff]
          %v601 = vld [vmem:[%s354 + $0x148] sm:$0xff]
          %v602 = vld [vmem:[%s354 + $0x150] sm:$0xff]
          %v603 = vld [vmem:[%s354 + $0x158] sm:$0xff]
          %v604 = vld [vmem:[%s354 + $0x160] sm:$0xff]
          %v605 = vld [vmem:[%s354 + $0x168] sm:$0xff]
          %v606 = vld [vmem:[%s354 + $0x170] sm:$0xff]
          %v607 = vld [vmem:[%s354 + $0x178] sm:$0xff]
          %v608 = vld [vmem:[%s354 + $0x180] sm:$0xff]
          %v609 = vld [vmem:[%s354 + $0x188] sm:$0xff]
          %v610 = vld [vmem:[%s354 + $0x190] sm:$0xff]
          %v611 = vld [vmem:[%s354 + $0x198] sm:$0xff]
          %v612 = vld [vmem:[%s354 + $0x1a0] sm:$0xff]
          %v613 = vld [vmem:[%s354 + $0x1a8] sm:$0xff]
          %v614 = vld [vmem:[%s354 + $0x1b0] sm:$0xff]
          %v615 = vld [vmem:[%s354 + $0x1b8] sm:$0xff]
          %v616 = vld [vmem:[%s354 + $0x1c0] sm:$0xff]
          %v617 = vld [vmem:[%s354 + $0x1c8] sm:$0xff]
          %v618 = vld [vmem:[%s354 + $0x1d0] sm:$0xff]
          %v619 = vld [vmem:[%s354 + $0x1d8] sm:$0xff]
          %v620 = vld [vmem:[%s354 + $0x1e0] sm:$0xff]
          %v621 = vld [vmem:[%s354 + $0x1e8] sm:$0xff]
          %v622 = vld [vmem:[%s354 + $0x1f0] sm:$0xff]
          %v623 = vld [vmem:[%s354 + $0x1f8] sm:$0xff]
          %v624 = vld [vmem:[%s411] sm:$0xf]
          %v626 = vlaneseq
          %v627 = vshrl.u32 %v626, 7
          %v628 = vsub.s32 0, %v627
          %v629 = vrot.slane %v624, %v628
          %v630 = vlaneseq
          %v631 = vshrl.u32 %v630, 7
          %v632 = vsub.s32 1, %v631
          %v633 = vrot.slane %v624, %v632
          %v634 = vlaneseq
          %v635 = vshrl.u32 %v634, 7
          %v636 = vsub.s32 2, %v635
          %v637 = vrot.slane %v624, %v636
          %v638 = vlaneseq
          %v639 = vshrl.u32 %v638, 7
          %v640 = vsub.s32 3, %v639
          %v641 = vrot.slane %v624, %v640
          %646 = vmatprep.subr.mxu0 %v621
          %647 = vmatpush1.msra.mxu0 %v620
          %648 = vmatprep.subr.mxu0 %v617
          %649 = vmatpush1.msra.mxu0 %v616
          %650 = vmatprep.subr.mxu0 %v613
          %651 = vmatpush1.msra.mxu0 %v612
          %652 = vmatprep.subr.mxu0 %v609
          %653 = vmatpush1.msra.mxu0 %v608
          %654 = vmatprep.subr.mxu0 %v605
          %655 = vmatpush1.msra.mxu0 %v604
          %656 = vmatprep.subr.mxu0 %v601
          %657 = vmatpush1.msra.mxu0 %v600
          %658 = vmatprep.subr.mxu0 %v597
          %659 = vmatpush1.msra.mxu0 %v596
          %660 = vmatprep.subr.mxu0 %v593
          %661 = vmatpush1.msra.mxu0 %v592
          %662 = vmatprep.subr.mxu0 %v589
          %663 = vmatpush1.msra.mxu0 %v588
          %664 = vmatprep.subr.mxu0 %v585
          %665 = vmatpush1.msra.mxu0 %v584
          %666 = vmatprep.subr.mxu0 %v581
          %667 = vmatpush1.msra.mxu0 %v580
          %668 = vmatprep.subr.mxu0 %v577
          %669 = vmatpush1.msra.mxu0 %v576
          %670 = vmatprep.subr.mxu0 %v573
          %671 = vmatpush1.msra.mxu0 %v572
          %672 = vmatprep.subr.mxu0 %v569
          %673 = vmatpush1.msra.mxu0 %v568
          %674 = vmatprep.subr.mxu0 %v565
          %675 = vmatpush1.msra.mxu0 %v564
          %676 = vmatprep.subr.mxu0 %v561
          %677 = vmatpush1.msra.mxu0 %v560
          %678 = vmatprep.subr.mxu0 0.0
          %679 = vmatpush2.msra.mxu0 0.0
          %680 = vmatprep.subr.mxu0 0.0
          %681 = vmatpush2.msra.mxu0 0.0
          %682 = vmatprep.subr.mxu0 0.0
          %683 = vmatpush2.msra.mxu0 0.0
          %684 = vmatprep.subr.mxu0 0.0
          %685 = vmatpush2.msra.mxu0 0.0
          %686 = vmatprep.subr.mxu0 0.0
          %687 = vmatpush2.msra.mxu0 0.0
          %688 = vmatprep.subr.mxu0 0.0
          %689 = vmatpush2.msra.mxu0 0.0
          %690 = vmatprep.subr.mxu0 0.0
          %691 = vmatpush2.msra.mxu0 0.0
          %692 = vmatprep.subr.mxu0 0.0
          %693 = vmatpush2.msra.mxu0 0.0
          %694 = vmatprep.subr.mxu0 0.0
          %695 = vmatpush2.msra.mxu0 0.0
          %696 = vmatprep.subr.mxu0 0.0
          %697 = vmatpush2.msra.mxu0 0.0
          %698 = vmatprep.subr.mxu0 0.0
          %699 = vmatpush2.msra.mxu0 0.0
          %700 = vmatprep.subr.mxu0 0.0
          %701 = vmatpush2.msra.mxu0 0.0
          %702 = vmatprep.subr.mxu0 0.0
          %703 = vmatpush2.msra.mxu0 0.0
          %704 = vmatprep.subr.mxu0 0.0
          %705 = vmatpush2.msra.mxu0 0.0
          %706 = vmatprep.subr.mxu0 0.0
          %707 = vmatpush2.msra.mxu0 0.0
          %708 = vmatprep.subr.mxu0 0.0
          %709 = vmatpush2.msra.mxu0 0.0
          %710 = vmatprep.mubr.f32.mxu0 0.0
          %711 = vmatmul.mubr.f32.gmra.mxu0 %v552
          %v712 = vpop.f32.mrf.mxu0
          %v713 = vadd.f32 %v629, %v712
          %v714 = vpop.f32.mrf.mxu0
          %v715 = vadd.f32 %v633, %v714
          %716 = vmatprep.mubr.f32.mxu0 0.0
          %717 = vmatmul.mubr.f32.gmra.mxu0 %v553
          %v718 = vpop.f32.mrf.mxu0
          %v719 = vadd.f32 %v629, %v718
          %v720 = vpop.f32.mrf.mxu0
          %v721 = vadd.f32 %v633, %v720
          %722 = vmatprep.mubr.f32.mxu0 0.0
          %723 = vmatmul.mubr.f32.gmra.mxu0 %v554
          %v724 = vpop.f32.mrf.mxu0
          %v725 = vadd.f32 %v629, %v724
          %v726 = vpop.f32.mrf.mxu0
          %v727 = vadd.f32 %v633, %v726
          %728 = vmatprep.mubr.f32.mxu0 0.0
          %729 = vmatmul.mubr.f32.gmra.mxu0 %v555
          %v730 = vpop.f32.mrf.mxu0
          %v731 = vadd.f32 %v629, %v730
          %v732 = vpop.f32.mrf.mxu0
          %v733 = vadd.f32 %v633, %v732
          %734 = vmatprep.mubr.f32.mxu0 0.0
          %735 = vmatmul.mubr.f32.gmra.mxu0 %v556
          %v736 = vpop.f32.mrf.mxu0
          %v737 = vadd.f32 %v629, %v736
          %v738 = vpop.f32.mrf.mxu0
          %v739 = vadd.f32 %v633, %v738
          %740 = vmatprep.mubr.f32.mxu0 0.0
          %741 = vmatmul.mubr.f32.gmra.mxu0 %v557
          %v742 = vpop.f32.mrf.mxu0
          %v743 = vadd.f32 %v629, %v742
          %v744 = vpop.f32.mrf.mxu0
          %v745 = vadd.f32 %v633, %v744
          %746 = vmatprep.mubr.f32.mxu0 0.0
          %747 = vmatmul.mubr.f32.gmra.mxu0 %v558
          %v748 = vpop.f32.mrf.mxu0
          %v749 = vadd.f32 %v629, %v748
          %v750 = vpop.f32.mrf.mxu0
          %v751 = vadd.f32 %v633, %v750
          %752 = vmatprep.mubr.f32.mxu0 0.0
          %753 = vmatmul.mubr.f32.gmra.mxu0 %v559
          %v754 = vpop.f32.mrf.mxu0
          %v755 = vadd.f32 %v629, %v754
          %v756 = vpop.f32.mrf.mxu0
          %v757 = vadd.f32 %v633, %v756
          %758 = vdwg.mxu0
          %759 = vmatprep.subr.mxu0 %v623
          %760 = vmatpush1.msra.mxu0 %v622
          %761 = vmatprep.subr.mxu0 %v619
          %762 = vmatpush1.msra.mxu0 %v618
          %763 = vmatprep.subr.mxu0 %v615
          %764 = vmatpush1.msra.mxu0 %v614
          %765 = vmatprep.subr.mxu0 %v611
          %766 = vmatpush1.msra.mxu0 %v610
          %767 = vmatprep.subr.mxu0 %v607
          %768 = vmatpush1.msra.mxu0 %v606
          %769 = vmatprep.subr.mxu0 %v603
          %770 = vmatpush1.msra.mxu0 %v602
          %771 = vmatprep.subr.mxu0 %v599
          %772 = vmatpush1.msra.mxu0 %v598
          %773 = vmatprep.subr.mxu0 %v595
          %774 = vmatpush1.msra.mxu0 %v594
          %775 = vmatprep.subr.mxu0 %v591
          %776 = vmatpush1.msra.mxu0 %v590
          %777 = vmatprep.subr.mxu0 %v587
          %778 = vmatpush1.msra.mxu0 %v586
          %779 = vmatprep.subr.mxu0 %v583
          %780 = vmatpush1.msra.mxu0 %v582
          %781 = vmatprep.subr.mxu0 %v579
          %782 = vmatpush1.msra.mxu0 %v578
          %783 = vmatprep.subr.mxu0 %v575
          %784 = vmatpush1.msra.mxu0 %v574
          %785 = vmatprep.subr.mxu0 %v571
          %786 = vmatpush1.msra.mxu0 %v570
          %787 = vmatprep.subr.mxu0 %v567
          %788 = vmatpush1.msra.mxu0 %v566
          %789 = vmatprep.subr.mxu0 %v563
          %790 = vmatpush1.msra.mxu0 %v562
          %791 = vmatprep.subr.mxu0 0.0
          %792 = vmatpush2.msra.mxu0 0.0
          %793 = vmatprep.subr.mxu0 0.0
          %794 = vmatpush2.msra.mxu0 0.0
          %795 = vmatprep.subr.mxu0 0.0
          %796 = vmatpush2.msra.mxu0 0.0
          %797 = vmatprep.subr.mxu0 0.0
          %798 = vmatpush2.msra.mxu0 0.0
          %799 = vmatprep.subr.mxu0 0.0
          %800 = vmatpush2.msra.mxu0 0.0
          %801 = vmatprep.subr.mxu0 0.0
          %802 = vmatpush2.msra.mxu0 0.0
          %803 = vmatprep.subr.mxu0 0.0
          %804 = vmatpush2.msra.mxu0 0.0
          %805 = vmatprep.subr.mxu0 0.0
          %806 = vmatpush2.msra.mxu0 0.0
          %807 = vmatprep.subr.mxu0 0.0
          %808 = vmatpush2.msra.mxu0 0.0
          %809 = vmatprep.subr.mxu0 0.0
          %810 = vmatpush2.msra.mxu0 0.0
          %811 = vmatprep.subr.mxu0 0.0
          %812 = vmatpush2.msra.mxu0 0.0
          %813 = vmatprep.subr.mxu0 0.0
          %814 = vmatpush2.msra.mxu0 0.0
          %815 = vmatprep.subr.mxu0 0.0
          %816 = vmatpush2.msra.mxu0 0.0
          %817 = vmatprep.subr.mxu0 0.0
          %818 = vmatpush2.msra.mxu0 0.0
          %819 = vmatprep.subr.mxu0 0.0
          %820 = vmatpush2.msra.mxu0 0.0
          %821 = vmatprep.subr.mxu0 0.0
          %822 = vmatpush2.msra.mxu0 0.0
          %823 = vmatprep.mubr.f32.mxu0 0.0
          %824 = vmatmul.mubr.f32.gmra.mxu0 %v552
          %v825 = vpop.f32.mrf.mxu0
          %v826 = vadd.f32 %v637, %v825
          %v827 = vpop.f32.mrf.mxu0
          %v828 = vadd.f32 %v641, %v827
          %829 = vmatprep.mubr.f32.mxu0 0.0
          %830 = vmatmul.mubr.f32.gmra.mxu0 %v553
          %v831 = vpop.f32.mrf.mxu0
          %v832 = vadd.f32 %v637, %v831
          %v833 = vpop.f32.mrf.mxu0
          %v834 = vadd.f32 %v641, %v833
          %835 = vmatprep.mubr.f32.mxu0 0.0
          %836 = vmatmul.mubr.f32.gmra.mxu0 %v554
          %v837 = vpop.f32.mrf.mxu0
          %v838 = vadd.f32 %v637, %v837
          %v839 = vpop.f32.mrf.mxu0
          %v840 = vadd.f32 %v641, %v839
          %841 = vmatprep.mubr.f32.mxu0 0.0
          %842 = vmatmul.mubr.f32.gmra.mxu0 %v555
          %v843 = vpop.f32.mrf.mxu0
          %v844 = vadd.f32 %v637, %v843
          %v845 = vpop.f32.mrf.mxu0
          %v846 = vadd.f32 %v641, %v845
          %847 = vmatprep.mubr.f32.mxu0 0.0
          %848 = vmatmul.mubr.f32.gmra.mxu0 %v556
          %v849 = vpop.f32.mrf.mxu0
          %v850 = vadd.f32 %v637, %v849
          %v851 = vpop.f32.mrf.mxu0
          %v852 = vadd.f32 %v641, %v851
          %853 = vmatprep.mubr.f32.mxu0 0.0
          %854 = vmatmul.mubr.f32.gmra.mxu0 %v557
          %v855 = vpop.f32.mrf.mxu0
          %v856 = vadd.f32 %v637, %v855
          %v857 = vpop.f32.mrf.mxu0
          %v858 = vadd.f32 %v641, %v857
          %859 = vmatprep.mubr.f32.mxu0 0.0
          %860 = vmatmul.mubr.f32.gmra.mxu0 %v558
          %v861 = vpop.f32.mrf.mxu0
          %v862 = vadd.f32 %v637, %v861
          %v863 = vpop.f32.mrf.mxu0
          %v864 = vadd.f32 %v641, %v863
          %865 = vmatprep.mubr.f32.mxu0 0.0
          %866 = vmatmul.mubr.f32.gmra.mxu0 %v559
          %v867 = vpop.f32.mrf.mxu0
          %v868 = vadd.f32 %v637, %v867
          %v869 = vpop.f32.mrf.mxu0
          %v870 = vadd.f32 %v641, %v869
          %871 = vdwg.mxu0
          %872 = vst [vmem:[#allocation3] sm:$0xff] %v713
          %873 = vst [vmem:[#allocation3 + $0x8] sm:$0xff] %v715
          %874 = vst [vmem:[#allocation3 + $0x10] sm:$0xff] %v826
          %875 = vst [vmem:[#allocation3 + $0x18] sm:$0xff] %v828
          %876 = vst [vmem:[#allocation3 + $0x20] sm:$0xff] %v719
          %877 = vst [vmem:[#allocation3 + $0x28] sm:$0xff] %v721
          %878 = vst [vmem:[#allocation3 + $0x30] sm:$0xff] %v832
          %879 = vst [vmem:[#allocation3 + $0x38] sm:$0xff] %v834
          %880 = vst [vmem:[#allocation3 + $0x40] sm:$0xff] %v725
          %881 = vst [vmem:[#allocation3 + $0x48] sm:$0xff] %v727
          %882 = vst [vmem:[#allocation3 + $0x50] sm:$0xff] %v838
          %883 = vst [vmem:[#allocation3 + $0x58] sm:$0xff] %v840
          %884 = vst [vmem:[#allocation3 + $0x60] sm:$0xff] %v731
          %885 = vst [vmem:[#allocation3 + $0x68] sm:$0xff] %v733
          %886 = vst [vmem:[#allocation3 + $0x70] sm:$0xff] %v844
          %887 = vst [vmem:[#allocation3 + $0x78] sm:$0xff] %v846
          %888 = vst [vmem:[#allocation3 + $0x80] sm:$0xff] %v737
          %889 = vst [vmem:[#allocation3 + $0x88] sm:$0xff] %v739
          %890 = vst [vmem:[#allocation3 + $0x90] sm:$0xff] %v850
          %891 = vst [vmem:[#allocation3 + $0x98] sm:$0xff] %v852
          %892 = vst [vmem:[#allocation3 + $0xa0] sm:$0xff] %v743
          %893 = vst [vmem:[#allocation3 + $0xa8] sm:$0xff] %v745
          %894 = vst [vmem:[#allocation3 + $0xb0] sm:$0xff] %v856
          %895 = vst [vmem:[#allocation3 + $0xb8] sm:$0xff] %v858
          %896 = vst [vmem:[#allocation3 + $0xc0] sm:$0xff] %v749
          %897 = vst [vmem:[#allocation3 + $0xc8] sm:$0xff] %v751
          %898 = vst [vmem:[#allocation3 + $0xd0] sm:$0xff] %v862
          %899 = vst [vmem:[#allocation3 + $0xd8] sm:$0xff] %v864
          %900 = vst [vmem:[#allocation3 + $0xe0] sm:$0xff] %v755
          %901 = vst [vmem:[#allocation3 + $0xe8] sm:$0xff] %v757
          %902 = vst [vmem:[#allocation3 + $0xf0] sm:$0xff] %v868
          %903 = vst [vmem:[#allocation3 + $0xf8] sm:$0xff] %v870
        $region64: #{tpu_custom_call.1} parent=43 // pred_fallthru
          _
        %p904 = scmp.ne.s32.totalorder %s32, 0
        // Predicated region
        $region65: #{tpu_custom_call.1} parent=43 // pred_check
          %p905 = pneg %p904
        $region66: #{tpu_custom_call.1} parent=43 // pred_check_branch
          %907 = sbr.rel (%p905) target = $region68
        $region67: #{tpu_custom_call.1} parent=43 // pred_region
          %v908 = vld [vmem:[#allocation2] sm:$0xff]
          %v909 = vld [vmem:[#allocation2 + $0x8] sm:$0xff]
          %v910 = vld [vmem:[#allocation2 + $0x10] sm:$0xff]
          %v911 = vld [vmem:[#allocation2 + $0x18] sm:$0xff]
          %v912 = vld [vmem:[#allocation2 + $0x20] sm:$0xff]
          %v913 = vld [vmem:[#allocation2 + $0x28] sm:$0xff]
          %v914 = vld [vmem:[#allocation2 + $0x30] sm:$0xff]
          %v915 = vld [vmem:[#allocation2 + $0x38] sm:$0xff]
          %v916 = vld [vmem:[%s354] sm:$0xff]
          %v917 = vld [vmem:[%s354 + $0x8] sm:$0xff]
          %v918 = vld [vmem:[%s354 + $0x10] sm:$0xff]
          %v919 = vld [vmem:[%s354 + $0x18] sm:$0xff]
          %v920 = vld [vmem:[%s354 + $0x20] sm:$0xff]
          %v921 = vld [vmem:[%s354 + $0x28] sm:$0xff]
          %v922 = vld [vmem:[%s354 + $0x30] sm:$0xff]
          %v923 = vld [vmem:[%s354 + $0x38] sm:$0xff]
          %v924 = vld [vmem:[%s354 + $0x40] sm:$0xff]
          %v925 = vld [vmem:[%s354 + $0x48] sm:$0xff]
          %v926 = vld [vmem:[%s354 + $0x50] sm:$0xff]
          %v927 = vld [vmem:[%s354 + $0x58] sm:$0xff]
          %v928 = vld [vmem:[%s354 + $0x60] sm:$0xff]
          %v929 = vld [vmem:[%s354 + $0x68] sm:$0xff]
          %v930 = vld [vmem:[%s354 + $0x70] sm:$0xff]
          %v931 = vld [vmem:[%s354 + $0x78] sm:$0xff]
          %v932 = vld [vmem:[%s354 + $0x80] sm:$0xff]
          %v933 = vld [vmem:[%s354 + $0x88] sm:$0xff]
          %v934 = vld [vmem:[%s354 + $0x90] sm:$0xff]
          %v935 = vld [vmem:[%s354 + $0x98] sm:$0xff]
          %v936 = vld [vmem:[%s354 + $0xa0] sm:$0xff]
          %v937 = vld [vmem:[%s354 + $0xa8] sm:$0xff]
          %v938 = vld [vmem:[%s354 + $0xb0] sm:$0xff]
          %v939 = vld [vmem:[%s354 + $0xb8] sm:$0xff]
          %v940 = vld [vmem:[%s354 + $0xc0] sm:$0xff]
          %v941 = vld [vmem:[%s354 + $0xc8] sm:$0xff]
          %v942 = vld [vmem:[%s354 + $0xd0] sm:$0xff]
          %v943 = vld [vmem:[%s354 + $0xd8] sm:$0xff]
          %v944 = vld [vmem:[%s354 + $0xe0] sm:$0xff]
          %v945 = vld [vmem:[%s354 + $0xe8] sm:$0xff]
          %v946 = vld [vmem:[%s354 + $0xf0] sm:$0xff]
          %v947 = vld [vmem:[%s354 + $0xf8] sm:$0xff]
          %v948 = vld [vmem:[%s354 + $0x100] sm:$0xff]
          %v949 = vld [vmem:[%s354 + $0x108] sm:$0xff]
          %v950 = vld [vmem:[%s354 + $0x110] sm:$0xff]
          %v951 = vld [vmem:[%s354 + $0x118] sm:$0xff]
          %v952 = vld [vmem:[%s354 + $0x120] sm:$0xff]
          %v953 = vld [vmem:[%s354 + $0x128] sm:$0xff]
          %v954 = vld [vmem:[%s354 + $0x130] sm:$0xff]
          %v955 = vld [vmem:[%s354 + $0x138] sm:$0xff]
          %v956 = vld [vmem:[%s354 + $0x140] sm:$0xff]
          %v957 = vld [vmem:[%s354 + $0x148] sm:$0xff]
          %v958 = vld [vmem:[%s354 + $0x150] sm:$0xff]
          %v959 = vld [vmem:[%s354 + $0x158] sm:$0xff]
          %v960 = vld [vmem:[%s354 + $0x160] sm:$0xff]
          %v961 = vld [vmem:[%s354 + $0x168] sm:$0xff]
          %v962 = vld [vmem:[%s354 + $0x170] sm:$0xff]
          %v963 = vld [vmem:[%s354 + $0x178] sm:$0xff]
          %v964 = vld [vmem:[%s354 + $0x180] sm:$0xff]
          %v965 = vld [vmem:[%s354 + $0x188] sm:$0xff]
          %v966 = vld [vmem:[%s354 + $0x190] sm:$0xff]
          %v967 = vld [vmem:[%s354 + $0x198] sm:$0xff]
          %v968 = vld [vmem:[%s354 + $0x1a0] sm:$0xff]
          %v969 = vld [vmem:[%s354 + $0x1a8] sm:$0xff]
          %v970 = vld [vmem:[%s354 + $0x1b0] sm:$0xff]
          %v971 = vld [vmem:[%s354 + $0x1b8] sm:$0xff]
          %v972 = vld [vmem:[%s354 + $0x1c0] sm:$0xff]
          %v973 = vld [vmem:[%s354 + $0x1c8] sm:$0xff]
          %v974 = vld [vmem:[%s354 + $0x1d0] sm:$0xff]
          %v975 = vld [vmem:[%s354 + $0x1d8] sm:$0xff]
          %v976 = vld [vmem:[%s354 + $0x1e0] sm:$0xff]
          %v977 = vld [vmem:[%s354 + $0x1e8] sm:$0xff]
          %v978 = vld [vmem:[%s354 + $0x1f0] sm:$0xff]
          %v979 = vld [vmem:[%s354 + $0x1f8] sm:$0xff]
          %v980 = vld [vmem:[%s411] sm:$0xf]
          %v982 = vlaneseq
          %v983 = vshrl.u32 %v982, 7
          %v984 = vsub.s32 0, %v983
          %v985 = vrot.slane %v980, %v984
          %v986 = vlaneseq
          %v987 = vshrl.u32 %v986, 7
          %v988 = vsub.s32 1, %v987
          %v989 = vrot.slane %v980, %v988
          %v990 = vlaneseq
          %v991 = vshrl.u32 %v990, 7
          %v992 = vsub.s32 2, %v991
          %v993 = vrot.slane %v980, %v992
          %v994 = vlaneseq
          %v995 = vshrl.u32 %v994, 7
          %v996 = vsub.s32 3, %v995
          %v997 = vrot.slane %v980, %v996
          %1002 = vmatprep.subr.mxu0 %v977
          %1003 = vmatpush1.msra.mxu0 %v976
          %1004 = vmatprep.subr.mxu0 %v973
          %1005 = vmatpush1.msra.mxu0 %v972
          %1006 = vmatprep.subr.mxu0 %v969
          %1007 = vmatpush1.msra.mxu0 %v968
          %1008 = vmatprep.subr.mxu0 %v965
          %1009 = vmatpush1.msra.mxu0 %v964
          %1010 = vmatprep.subr.mxu0 %v961
          %1011 = vmatpush1.msra.mxu0 %v960
          %1012 = vmatprep.subr.mxu0 %v957
          %1013 = vmatpush1.msra.mxu0 %v956
          %1014 = vmatprep.subr.mxu0 %v953
          %1015 = vmatpush1.msra.mxu0 %v952
          %1016 = vmatprep.subr.mxu0 %v949
          %1017 = vmatpush1.msra.mxu0 %v948
          %1018 = vmatprep.subr.mxu0 %v945
          %1019 = vmatpush1.msra.mxu0 %v944
          %1020 = vmatprep.subr.mxu0 %v941
          %1021 = vmatpush1.msra.mxu0 %v940
          %1022 = vmatprep.subr.mxu0 %v937
          %1023 = vmatpush1.msra.mxu0 %v936
          %1024 = vmatprep.subr.mxu0 %v933
          %1025 = vmatpush1.msra.mxu0 %v932
          %1026 = vmatprep.subr.mxu0 %v929
          %1027 = vmatpush1.msra.mxu0 %v928
          %1028 = vmatprep.subr.mxu0 %v925
          %1029 = vmatpush1.msra.mxu0 %v924
          %1030 = vmatprep.subr.mxu0 %v921
          %1031 = vmatpush1.msra.mxu0 %v920
          %1032 = vmatprep.subr.mxu0 %v917
          %1033 = vmatpush1.msra.mxu0 %v916
          %1034 = vmatprep.subr.mxu0 0.0
          %1035 = vmatpush2.msra.mxu0 0.0
          %1036 = vmatprep.subr.mxu0 0.0
          %1037 = vmatpush2.msra.mxu0 0.0
          %1038 = vmatprep.subr.mxu0 0.0
          %1039 = vmatpush2.msra.mxu0 0.0
          %1040 = vmatprep.subr.mxu0 0.0
          %1041 = vmatpush2.msra.mxu0 0.0
          %1042 = vmatprep.subr.mxu0 0.0
          %1043 = vmatpush2.msra.mxu0 0.0
          %1044 = vmatprep.subr.mxu0 0.0
          %1045 = vmatpush2.msra.mxu0 0.0
          %1046 = vmatprep.subr.mxu0 0.0
          %1047 = vmatpush2.msra.mxu0 0.0
          %1048 = vmatprep.subr.mxu0 0.0
          %1049 = vmatpush2.msra.mxu0 0.0
          %1050 = vmatprep.subr.mxu0 0.0
          %1051 = vmatpush2.msra.mxu0 0.0
          %1052 = vmatprep.subr.mxu0 0.0
          %1053 = vmatpush2.msra.mxu0 0.0
          %1054 = vmatprep.subr.mxu0 0.0
          %1055 = vmatpush2.msra.mxu0 0.0
          %1056 = vmatprep.subr.mxu0 0.0
          %1057 = vmatpush2.msra.mxu0 0.0
          %1058 = vmatprep.subr.mxu0 0.0
          %1059 = vmatpush2.msra.mxu0 0.0
          %1060 = vmatprep.subr.mxu0 0.0
          %1061 = vmatpush2.msra.mxu0 0.0
          %1062 = vmatprep.subr.mxu0 0.0
          %1063 = vmatpush2.msra.mxu0 0.0
          %1064 = vmatprep.subr.mxu0 0.0
          %1065 = vmatpush2.msra.mxu0 0.0
          %1066 = vmatprep.mubr.f32.mxu0 0.0
          %1067 = vmatmul.mubr.f32.gmra.mxu0 %v908
          %v1068 = vpop.f32.mrf.mxu0
          %v1069 = vadd.f32 %v985, %v1068
          %v1070 = vpop.f32.mrf.mxu0
          %v1071 = vadd.f32 %v989, %v1070
          %1072 = vmatprep.mubr.f32.mxu0 0.0
          %1073 = vmatmul.mubr.f32.gmra.mxu0 %v909
          %v1074 = vpop.f32.mrf.mxu0
          %v1075 = vadd.f32 %v985, %v1074
          %v1076 = vpop.f32.mrf.mxu0
          %v1077 = vadd.f32 %v989, %v1076
          %1078 = vmatprep.mubr.f32.mxu0 0.0
          %1079 = vmatmul.mubr.f32.gmra.mxu0 %v910
          %v1080 = vpop.f32.mrf.mxu0
          %v1081 = vadd.f32 %v985, %v1080
          %v1082 = vpop.f32.mrf.mxu0
          %v1083 = vadd.f32 %v989, %v1082
          %1084 = vmatprep.mubr.f32.mxu0 0.0
          %1085 = vmatmul.mubr.f32.gmra.mxu0 %v911
          %v1086 = vpop.f32.mrf.mxu0
          %v1087 = vadd.f32 %v985, %v1086
          %v1088 = vpop.f32.mrf.mxu0
          %v1089 = vadd.f32 %v989, %v1088
          %1090 = vmatprep.mubr.f32.mxu0 0.0
          %1091 = vmatmul.mubr.f32.gmra.mxu0 %v912
          %v1092 = vpop.f32.mrf.mxu0
          %v1093 = vadd.f32 %v985, %v1092
          %v1094 = vpop.f32.mrf.mxu0
          %v1095 = vadd.f32 %v989, %v1094
          %1096 = vmatprep.mubr.f32.mxu0 0.0
          %1097 = vmatmul.mubr.f32.gmra.mxu0 %v913
          %v1098 = vpop.f32.mrf.mxu0
          %v1099 = vadd.f32 %v985, %v1098
          %v1100 = vpop.f32.mrf.mxu0
          %v1101 = vadd.f32 %v989, %v1100
          %1102 = vmatprep.mubr.f32.mxu0 0.0
          %1103 = vmatmul.mubr.f32.gmra.mxu0 %v914
          %v1104 = vpop.f32.mrf.mxu0
          %v1105 = vadd.f32 %v985, %v1104
          %v1106 = vpop.f32.mrf.mxu0
          %v1107 = vadd.f32 %v989, %v1106
          %1108 = vmatprep.mubr.f32.mxu0 0.0
          %1109 = vmatmul.mubr.f32.gmra.mxu0 %v915
          %v1110 = vpop.f32.mrf.mxu0
          %v1111 = vadd.f32 %v985, %v1110
          %v1112 = vpop.f32.mrf.mxu0
          %v1113 = vadd.f32 %v989, %v1112
          %1114 = vdwg.mxu0
          %1115 = vmatprep.subr.mxu0 %v979
          %1116 = vmatpush1.msra.mxu0 %v978
          %1117 = vmatprep.subr.mxu0 %v975
          %1118 = vmatpush1.msra.mxu0 %v974
          %1119 = vmatprep.subr.mxu0 %v971
          %1120 = vmatpush1.msra.mxu0 %v970
          %1121 = vmatprep.subr.mxu0 %v967
          %1122 = vmatpush1.msra.mxu0 %v966
          %1123 = vmatprep.subr.mxu0 %v963
          %1124 = vmatpush1.msra.mxu0 %v962
          %1125 = vmatprep.subr.mxu0 %v959
          %1126 = vmatpush1.msra.mxu0 %v958
          %1127 = vmatprep.subr.mxu0 %v955
          %1128 = vmatpush1.msra.mxu0 %v954
          %1129 = vmatprep.subr.mxu0 %v951
          %1130 = vmatpush1.msra.mxu0 %v950
          %1131 = vmatprep.subr.mxu0 %v947
          %1132 = vmatpush1.msra.mxu0 %v946
          %1133 = vmatprep.subr.mxu0 %v943
          %1134 = vmatpush1.msra.mxu0 %v942
          %1135 = vmatprep.subr.mxu0 %v939
          %1136 = vmatpush1.msra.mxu0 %v938
          %1137 = vmatprep.subr.mxu0 %v935
          %1138 = vmatpush1.msra.mxu0 %v934
          %1139 = vmatprep.subr.mxu0 %v931
          %1140 = vmatpush1.msra.mxu0 %v930
          %1141 = vmatprep.subr.mxu0 %v927
          %1142 = vmatpush1.msra.mxu0 %v926
          %1143 = vmatprep.subr.mxu0 %v923
          %1144 = vmatpush1.msra.mxu0 %v922
          %1145 = vmatprep.subr.mxu0 %v919
          %1146 = vmatpush1.msra.mxu0 %v918
          %1147 = vmatprep.subr.mxu0 0.0
          %1148 = vmatpush2.msra.mxu0 0.0
          %1149 = vmatprep.subr.mxu0 0.0
          %1150 = vmatpush2.msra.mxu0 0.0
          %1151 = vmatprep.subr.mxu0 0.0
          %1152 = vmatpush2.msra.mxu0 0.0
          %1153 = vmatprep.subr.mxu0 0.0
          %1154 = vmatpush2.msra.mxu0 0.0
          %1155 = vmatprep.subr.mxu0 0.0
          %1156 = vmatpush2.msra.mxu0 0.0
          %1157 = vmatprep.subr.mxu0 0.0
          %1158 = vmatpush2.msra.mxu0 0.0
          %1159 = vmatprep.subr.mxu0 0.0
          %1160 = vmatpush2.msra.mxu0 0.0
          %1161 = vmatprep.subr.mxu0 0.0
          %1162 = vmatpush2.msra.mxu0 0.0
          %1163 = vmatprep.subr.mxu0 0.0
          %1164 = vmatpush2.msra.mxu0 0.0
          %1165 = vmatprep.subr.mxu0 0.0
          %1166 = vmatpush2.msra.mxu0 0.0
          %1167 = vmatprep.subr.mxu0 0.0
          %1168 = vmatpush2.msra.mxu0 0.0
          %1169 = vmatprep.subr.mxu0 0.0
          %1170 = vmatpush2.msra.mxu0 0.0
          %1171 = vmatprep.subr.mxu0 0.0
          %1172 = vmatpush2.msra.mxu0 0.0
          %1173 = vmatprep.subr.mxu0 0.0
          %1174 = vmatpush2.msra.mxu0 0.0
          %1175 = vmatprep.subr.mxu0 0.0
          %1176 = vmatpush2.msra.mxu0 0.0
          %1177 = vmatprep.subr.mxu0 0.0
          %1178 = vmatpush2.msra.mxu0 0.0
          %1179 = vmatprep.mubr.f32.mxu0 0.0
          %1180 = vmatmul.mubr.f32.gmra.mxu0 %v908
          %v1181 = vpop.f32.mrf.mxu0
          %v1182 = vadd.f32 %v993, %v1181
          %v1183 = vpop.f32.mrf.mxu0
          %v1184 = vadd.f32 %v997, %v1183
          %1185 = vmatprep.mubr.f32.mxu0 0.0
          %1186 = vmatmul.mubr.f32.gmra.mxu0 %v909
          %v1187 = vpop.f32.mrf.mxu0
          %v1188 = vadd.f32 %v993, %v1187
          %v1189 = vpop.f32.mrf.mxu0
          %v1190 = vadd.f32 %v997, %v1189
          %1191 = vmatprep.mubr.f32.mxu0 0.0
          %1192 = vmatmul.mubr.f32.gmra.mxu0 %v910
          %v1193 = vpop.f32.mrf.mxu0
          %v1194 = vadd.f32 %v993, %v1193
          %v1195 = vpop.f32.mrf.mxu0
          %v1196 = vadd.f32 %v997, %v1195
          %1197 = vmatprep.mubr.f32.mxu0 0.0
          %1198 = vmatmul.mubr.f32.gmra.mxu0 %v911
          %v1199 = vpop.f32.mrf.mxu0
          %v1200 = vadd.f32 %v993, %v1199
          %v1201 = vpop.f32.mrf.mxu0
          %v1202 = vadd.f32 %v997, %v1201
          %1203 = vmatprep.mubr.f32.mxu0 0.0
          %1204 = vmatmul.mubr.f32.gmra.mxu0 %v912
          %v1205 = vpop.f32.mrf.mxu0
          %v1206 = vadd.f32 %v993, %v1205
          %v1207 = vpop.f32.mrf.mxu0
          %v1208 = vadd.f32 %v997, %v1207
          %1209 = vmatprep.mubr.f32.mxu0 0.0
          %1210 = vmatmul.mubr.f32.gmra.mxu0 %v913
          %v1211 = vpop.f32.mrf.mxu0
          %v1212 = vadd.f32 %v993, %v1211
          %v1213 = vpop.f32.mrf.mxu0
          %v1214 = vadd.f32 %v997, %v1213
          %1215 = vmatprep.mubr.f32.mxu0 0.0
          %1216 = vmatmul.mubr.f32.gmra.mxu0 %v914
          %v1217 = vpop.f32.mrf.mxu0
          %v1218 = vadd.f32 %v993, %v1217
          %v1219 = vpop.f32.mrf.mxu0
          %v1220 = vadd.f32 %v997, %v1219
          %1221 = vmatprep.mubr.f32.mxu0 0.0
          %1222 = vmatmul.mubr.f32.gmra.mxu0 %v915
          %v1223 = vpop.f32.mrf.mxu0
          %v1224 = vadd.f32 %v993, %v1223
          %v1225 = vpop.f32.mrf.mxu0
          %v1226 = vadd.f32 %v997, %v1225
          %1227 = vdwg.mxu0
          %1228 = vst [vmem:[#allocation3] sm:$0xff] %v1069
          %1229 = vst [vmem:[#allocation3 + $0x8] sm:$0xff] %v1071
          %1230 = vst [vmem:[#allocation3 + $0x10] sm:$0xff] %v1182
          %1231 = vst [vmem:[#allocation3 + $0x18] sm:$0xff] %v1184
          %1232 = vst [vmem:[#allocation3 + $0x20] sm:$0xff] %v1075
          %1233 = vst [vmem:[#allocation3 + $0x28] sm:$0xff] %v1077
          %1234 = vst [vmem:[#allocation3 + $0x30] sm:$0xff] %v1188
          %1235 = vst [vmem:[#allocation3 + $0x38] sm:$0xff] %v1190
          %1236 = vst [vmem:[#allocation3 + $0x40] sm:$0xff] %v1081
          %1237 = vst [vmem:[#allocation3 + $0x48] sm:$0xff] %v1083
          %1238 = vst [vmem:[#allocation3 + $0x50] sm:$0xff] %v1194
          %1239 = vst [vmem:[#allocation3 + $0x58] sm:$0xff] %v1196
          %1240 = vst [vmem:[#allocation3 + $0x60] sm:$0xff] %v1087
          %1241 = vst [vmem:[#allocation3 + $0x68] sm:$0xff] %v1089
          %1242 = vst [vmem:[#allocation3 + $0x70] sm:$0xff] %v1200
          %1243 = vst [vmem:[#allocation3 + $0x78] sm:$0xff] %v1202
          %1244 = vst [vmem:[#allocation3 + $0x80] sm:$0xff] %v1093
          %1245 = vst [vmem:[#allocation3 + $0x88] sm:$0xff] %v1095
          %1246 = vst [vmem:[#allocation3 + $0x90] sm:$0xff] %v1206
          %1247 = vst [vmem:[#allocation3 + $0x98] sm:$0xff] %v1208
          %1248 = vst [vmem:[#allocation3 + $0xa0] sm:$0xff] %v1099
          %1249 = vst [vmem:[#allocation3 + $0xa8] sm:$0xff] %v1101
          %1250 = vst [vmem:[#allocation3 + $0xb0] sm:$0xff] %v1212
          %1251 = vst [vmem:[#allocation3 + $0xb8] sm:$0xff] %v1214
          %1252 = vst [vmem:[#allocation3 + $0xc0] sm:$0xff] %v1105
          %1253 = vst [vmem:[#allocation3 + $0xc8] sm:$0xff] %v1107
          %1254 = vst [vmem:[#allocation3 + $0xd0] sm:$0xff] %v1218
          %1255 = vst [vmem:[#allocation3 + $0xd8] sm:$0xff] %v1220
          %1256 = vst [vmem:[#allocation3 + $0xe0] sm:$0xff] %v1111
          %1257 = vst [vmem:[#allocation3 + $0xe8] sm:$0xff] %v1113
          %1258 = vst [vmem:[#allocation3 + $0xf0] sm:$0xff] %v1224
          %1259 = vst [vmem:[#allocation3 + $0xf8] sm:$0xff] %v1226
        $region68: #{tpu_custom_call.1} parent=43 // pred_fallthru
          _
        %v1260 = vld [vmem:[#allocation3] sm:$0xff]
        %v1261 = vld [vmem:[#allocation3 + $0x8] sm:$0xff]
        %v1262 = vld [vmem:[#allocation3 + $0x10] sm:$0xff]
        %v1263 = vld [vmem:[#allocation3 + $0x18] sm:$0xff]
        %v1264 = vld [vmem:[%s363] sm:$0xff]
        %v1265 = vld [vmem:[%s363 + $0x8] sm:$0xff]
        %v1266 = vld [vmem:[%s363 + $0x10] sm:$0xff]
        %v1267 = vld [vmem:[%s363 + $0x18] sm:$0xff]
        %v1268 = vld [vmem:[%s363 + $0x20] sm:$0xff]
        %v1269 = vld [vmem:[%s363 + $0x28] sm:$0xff]
        %v1270 = vld [vmem:[%s363 + $0x30] sm:$0xff]
        %v1271 = vld [vmem:[%s363 + $0x38] sm:$0xff]
        %v1272 = vld [vmem:[%s363 + $0x40] sm:$0xff]
        %v1273 = vld [vmem:[%s363 + $0x48] sm:$0xff]
        %v1274 = vld [vmem:[%s363 + $0x50] sm:$0xff]
        %v1275 = vld [vmem:[%s363 + $0x58] sm:$0xff]
        %v1276 = vld [vmem:[%s363 + $0x60] sm:$0xff]
        %v1277 = vld [vmem:[%s363 + $0x68] sm:$0xff]
        %v1278 = vld [vmem:[%s363 + $0x70] sm:$0xff]
        %v1279 = vld [vmem:[%s363 + $0x78] sm:$0xff]
        %v1280 = vld [vmem:[%s363 + $0x80] sm:$0xff]
        %v1281 = vld [vmem:[%s363 + $0x88] sm:$0xff]
        %v1282 = vld [vmem:[%s363 + $0x90] sm:$0xff]
        %v1283 = vld [vmem:[%s363 + $0x98] sm:$0xff]
        %v1284 = vld [vmem:[%s363 + $0xa0] sm:$0xff]
        %v1285 = vld [vmem:[%s363 + $0xa8] sm:$0xff]
        %v1286 = vld [vmem:[%s363 + $0xb0] sm:$0xff]
        %v1287 = vld [vmem:[%s363 + $0xb8] sm:$0xff]
        %v1288 = vld [vmem:[%s363 + $0xc0] sm:$0xff]
        %v1289 = vld [vmem:[%s363 + $0xc8] sm:$0xff]
        %v1290 = vld [vmem:[%s363 + $0xd0] sm:$0xff]
        %v1291 = vld [vmem:[%s363 + $0xd8] sm:$0xff]
        %v1292 = vld [vmem:[%s363 + $0xe0] sm:$0xff]
        %v1293 = vld [vmem:[%s363 + $0xe8] sm:$0xff]
        %v1294 = vld [vmem:[%s363 + $0xf0] sm:$0xff]
        %v1295 = vld [vmem:[%s363 + $0xf8] sm:$0xff]
        %v1296 = vld [vmem:[%s363 + $0x100] sm:$0xff]
        %v1297 = vld [vmem:[%s363 + $0x108] sm:$0xff]
        %v1298 = vld [vmem:[%s363 + $0x110] sm:$0xff]
        %v1299 = vld [vmem:[%s363 + $0x118] sm:$0xff]
        %v1300 = vld [vmem:[%s363 + $0x120] sm:$0xff]
        %v1301 = vld [vmem:[%s363 + $0x128] sm:$0xff]
        %v1302 = vld [vmem:[%s363 + $0x130] sm:$0xff]
        %v1303 = vld [vmem:[%s363 + $0x138] sm:$0xff]
        %v1304 = vld [vmem:[%s363 + $0x140] sm:$0xff]
        %v1305 = vld [vmem:[%s363 + $0x148] sm:$0xff]
        %v1306 = vld [vmem:[%s363 + $0x150] sm:$0xff]
        %v1307 = vld [vmem:[%s363 + $0x158] sm:$0xff]
        %v1308 = vld [vmem:[%s363 + $0x160] sm:$0xff]
        %v1309 = vld [vmem:[%s363 + $0x168] sm:$0xff]
        %v1310 = vld [vmem:[%s363 + $0x170] sm:$0xff]
        %v1311 = vld [vmem:[%s363 + $0x178] sm:$0xff]
        %v1312 = vld [vmem:[%s363 + $0x180] sm:$0xff]
        %v1313 = vld [vmem:[%s363 + $0x188] sm:$0xff]
        %v1314 = vld [vmem:[%s363 + $0x190] sm:$0xff]
        %v1315 = vld [vmem:[%s363 + $0x198] sm:$0xff]
        %v1316 = vld [vmem:[%s363 + $0x1a0] sm:$0xff]
        %v1317 = vld [vmem:[%s363 + $0x1a8] sm:$0xff]
        %v1318 = vld [vmem:[%s363 + $0x1b0] sm:$0xff]
        %v1319 = vld [vmem:[%s363 + $0x1b8] sm:$0xff]
        %v1320 = vld [vmem:[%s363 + $0x1c0] sm:$0xff]
        %v1321 = vld [vmem:[%s363 + $0x1c8] sm:$0xff]
        %v1322 = vld [vmem:[%s363 + $0x1d0] sm:$0xff]
        %v1323 = vld [vmem:[%s363 + $0x1d8] sm:$0xff]
        %v1324 = vld [vmem:[%s363 + $0x1e0] sm:$0xff]
        %v1325 = vld [vmem:[%s363 + $0x1e8] sm:$0xff]
        %v1326 = vld [vmem:[%s363 + $0x1f0] sm:$0xff]
        %v1327 = vld [vmem:[%s363 + $0x1f8] sm:$0xff]
        %1328 = vmatprep.subr.mxu0 %v1325
        %1329 = vmatpush1.msra.mxu0 %v1324
        %1330 = vmatprep.subr.mxu0 %v1321
        %1331 = vmatpush1.msra.mxu0 %v1320
        %1332 = vmatprep.subr.mxu0 %v1317
        %1333 = vmatpush1.msra.mxu0 %v1316
        %1334 = vmatprep.subr.mxu0 %v1313
        %1335 = vmatpush1.msra.mxu0 %v1312
        %1336 = vmatprep.subr.mxu0 %v1309
        %1337 = vmatpush1.msra.mxu0 %v1308
        %1338 = vmatprep.subr.mxu0 %v1305
        %1339 = vmatpush1.msra.mxu0 %v1304
        %1340 = vmatprep.subr.mxu0 %v1301
        %1341 = vmatpush1.msra.mxu0 %v1300
        %1342 = vmatprep.subr.mxu0 %v1297
        %1343 = vmatpush1.msra.mxu0 %v1296
        %1344 = vmatprep.subr.mxu0 %v1293
        %1345 = vmatpush1.msra.mxu0 %v1292
        %1346 = vmatprep.subr.mxu0 %v1289
        %1347 = vmatpush1.msra.mxu0 %v1288
        %1348 = vmatprep.subr.mxu0 %v1285
        %1349 = vmatpush1.msra.mxu0 %v1284
        %1350 = vmatprep.subr.mxu0 %v1281
        %1351 = vmatpush1.msra.mxu0 %v1280
        %1352 = vmatprep.subr.mxu0 %v1277
        %1353 = vmatpush1.msra.mxu0 %v1276
        %1354 = vmatprep.subr.mxu0 %v1273
        %1355 = vmatpush1.msra.mxu0 %v1272
        %1356 = vmatprep.subr.mxu0 %v1269
        %1357 = vmatpush1.msra.mxu0 %v1268
        %1358 = vmatprep.subr.mxu0 %v1265
        %1359 = vmatpush1.msra.mxu0 %v1264
        %1360 = vmatprep.subr.mxu0 0.0
        %1361 = vmatpush2.msra.mxu0 0.0
        %1362 = vmatprep.subr.mxu0 0.0
        %1363 = vmatpush2.msra.mxu0 0.0
        %1364 = vmatprep.subr.mxu0 0.0
        %1365 = vmatpush2.msra.mxu0 0.0
        %1366 = vmatprep.subr.mxu0 0.0
        %1367 = vmatpush2.msra.mxu0 0.0
        %1368 = vmatprep.subr.mxu0 0.0
        %1369 = vmatpush2.msra.mxu0 0.0
        %1370 = vmatprep.subr.mxu0 0.0
        %1371 = vmatpush2.msra.mxu0 0.0
        %1372 = vmatprep.subr.mxu0 0.0
        %1373 = vmatpush2.msra.mxu0 0.0
        %1374 = vmatprep.subr.mxu0 0.0
        %1375 = vmatpush2.msra.mxu0 0.0
        %1376 = vmatprep.subr.mxu0 0.0
        %1377 = vmatpush2.msra.mxu0 0.0
        %1378 = vmatprep.subr.mxu0 0.0
        %1379 = vmatpush2.msra.mxu0 0.0
        %1380 = vmatprep.subr.mxu0 0.0
        %1381 = vmatpush2.msra.mxu0 0.0
        %1382 = vmatprep.subr.mxu0 0.0
        %1383 = vmatpush2.msra.mxu0 0.0
        %1384 = vmatprep.subr.mxu0 0.0
        %1385 = vmatpush2.msra.mxu0 0.0
        %1386 = vmatprep.subr.mxu0 0.0
        %1387 = vmatpush2.msra.mxu0 0.0
        %1388 = vmatprep.subr.mxu0 0.0
        %1389 = vmatpush2.msra.mxu0 0.0
        %1390 = vmatprep.subr.mxu0 0.0
        %1391 = vmatpush2.msra.mxu0 0.0
        %1392 = vmatprep.mubr.f32.mxu0 0.0
        %1393 = vmatmul.mubr.f32.gmra.mxu0 0.0
        %v1394 = vpop.f32.mrf.mxu0
        %v1395 = vadd.f32 0.0, %v1394
        %v1396 = vpop.f32.mrf.mxu0
        %v1397 = vadd.f32 0.0, %v1396
        %1398 = vdwg.mxu0
        %1399 = vmatprep.subr.mxu0 %v1327
        %1400 = vmatpush1.msra.mxu0 %v1326
        %1401 = vmatprep.subr.mxu0 %v1323
        %1402 = vmatpush1.msra.mxu0 %v1322
        %1403 = vmatprep.subr.mxu0 %v1319
        %1404 = vmatpush1.msra.mxu0 %v1318
        %1405 = vmatprep.subr.mxu0 %v1315
        %1406 = vmatpush1.msra.mxu0 %v1314
        %1407 = vmatprep.subr.mxu0 %v1311
        %1408 = vmatpush1.msra.mxu0 %v1310
        %1409 = vmatprep.subr.mxu0 %v1307
        %1410 = vmatpush1.msra.mxu0 %v1306
        %1411 = vmatprep.subr.mxu0 %v1303
        %1412 = vmatpush1.msra.mxu0 %v1302
        %1413 = vmatprep.subr.mxu0 %v1299
        %1414 = vmatpush1.msra.mxu0 %v1298
        %1415 = vmatprep.subr.mxu0 %v1295
        %1416 = vmatpush1.msra.mxu0 %v1294
        %1417 = vmatprep.subr.mxu0 %v1291
        %1418 = vmatpush1.msra.mxu0 %v1290
        %1419 = vmatprep.subr.mxu0 %v1287
        %1420 = vmatpush1.msra.mxu0 %v1286
        %1421 = vmatprep.subr.mxu0 %v1283
        %1422 = vmatpush1.msra.mxu0 %v1282
        %1423 = vmatprep.subr.mxu0 %v1279
        %1424 = vmatpush1.msra.mxu0 %v1278
        %1425 = vmatprep.subr.mxu0 %v1275
        %1426 = vmatpush1.msra.mxu0 %v1274
        %1427 = vmatprep.subr.mxu0 %v1271
        %1428 = vmatpush1.msra.mxu0 %v1270
        %1429 = vmatprep.subr.mxu0 %v1267
        %1430 = vmatpush1.msra.mxu0 %v1266
        %1431 = vmatprep.subr.mxu0 0.0
        %1432 = vmatpush2.msra.mxu0 0.0
        %1433 = vmatprep.subr.mxu0 0.0
        %1434 = vmatpush2.msra.mxu0 0.0
        %1435 = vmatprep.subr.mxu0 0.0
        %1436 = vmatpush2.msra.mxu0 0.0
        %1437 = vmatprep.subr.mxu0 0.0
        %1438 = vmatpush2.msra.mxu0 0.0
        %1439 = vmatprep.subr.mxu0 0.0
        %1440 = vmatpush2.msra.mxu0 0.0
        %1441 = vmatprep.subr.mxu0 0.0
        %1442 = vmatpush2.msra.mxu0 0.0
        %1443 = vmatprep.subr.mxu0 0.0
        %1444 = vmatpush2.msra.mxu0 0.0
        %1445 = vmatprep.subr.mxu0 0.0
        %1446 = vmatpush2.msra.mxu0 0.0
        %1447 = vmatprep.subr.mxu0 0.0
        %1448 = vmatpush2.msra.mxu0 0.0
        %1449 = vmatprep.subr.mxu0 0.0
        %1450 = vmatpush2.msra.mxu0 0.0
        %1451 = vmatprep.subr.mxu0 0.0
        %1452 = vmatpush2.msra.mxu0 0.0
        %1453 = vmatprep.subr.mxu0 0.0
        %1454 = vmatpush2.msra.mxu0 0.0
        %1455 = vmatprep.subr.mxu0 0.0
        %1456 = vmatpush2.msra.mxu0 0.0
        %1457 = vmatprep.subr.mxu0 0.0
        %1458 = vmatpush2.msra.mxu0 0.0
        %1459 = vmatprep.subr.mxu0 0.0
        %1460 = vmatpush2.msra.mxu0 0.0
        %1461 = vmatprep.subr.mxu0 0.0
        %1462 = vmatpush2.msra.mxu0 0.0
        %1463 = vmatprep.mubr.f32.mxu0 0.0
        %1464 = vmatmul.mubr.f32.gmra.mxu0 0.0
        %v1465 = vpop.f32.mrf.mxu0
        %v1466 = vadd.f32 0.0, %v1465
        %v1467 = vpop.f32.mrf.mxu0
        %v1468 = vadd.f32 0.0, %v1467
        %1469 = vdwg.mxu0
        %v1470 = vadd.f32 %v1260, %v1395
        %v1471 = vadd.f32 %v1261, %v1397
        %v1472 = vadd.f32 %v1262, %v1466
        %v1473 = vadd.f32 %v1263, %v1468
        %v1474 = vxor.u32 %v1470, 2147483648
        %v1475 = vmul.f32 %v1474, 1.442695
        %v1476 = vpow.pop %v1475
        %v1477 = vadd.f32 %v1476, 1.0
        %v1478 = vrcp.pop %v1477
        %v1479 = vmul.f32 1.0, %v1478
        %v1480 = vxor.u32 %v1471, 2147483648
        %v1481 = vmul.f32 %v1480, 1.442695
        %v1482 = vpow.pop %v1481
        %v1483 = vadd.f32 %v1482, 1.0
        %v1484 = vrcp.pop %v1483
        %v1485 = vmul.f32 1.0, %v1484
        %v1486 = vtanh.pop %v1472
        %v1487 = vxor.u32 %v1473, 2147483648
        %v1488 = vmul.f32 %v1487, 1.442695
        %v1489 = vpow.pop %v1488
        %v1490 = vadd.f32 %v1489, 1.0
        %v1491 = vrcp.pop %v1490
        %v1492 = vmul.f32 1.0, %v1491
        %v1493 = vmul.f32 %v1485, 0.0
        %v1494 = vmul.f32 %v1479, %v1486
        %v1495 = vadd.f32 %v1493, %v1494
        %v1496 = vtanh.pop %v1495
        %v1497 = vmul.f32 %v1492, %v1496
        %1498 = vst [vmem:[#allocation2] sm:$0xff] %v1497
        %v1499 = vld [vmem:[#allocation3 + $0x20] sm:$0xff]
        %v1500 = vld [vmem:[#allocation3 + $0x28] sm:$0xff]
        %v1501 = vld [vmem:[#allocation3 + $0x30] sm:$0xff]
        %v1502 = vld [vmem:[#allocation3 + $0x38] sm:$0xff]
        %v1503 = vld [vmem:[%s363] sm:$0xff]
        %v1504 = vld [vmem:[%s363 + $0x8] sm:$0xff]
        %v1505 = vld [vmem:[%s363 + $0x10] sm:$0xff]
        %v1506 = vld [vmem:[%s363 + $0x18] sm:$0xff]
        %v1507 = vld [vmem:[%s363 + $0x20] sm:$0xff]
        %v1508 = vld [vmem:[%s363 + $0x28] sm:$0xff]
        %v1509 = vld [vmem:[%s363 + $0x30] sm:$0xff]
        %v1510 = vld [vmem:[%s363 + $0x38] sm:$0xff]
        %v1511 = vld [vmem:[%s363 + $0x40] sm:$0xff]
        %v1512 = vld [vmem:[%s363 + $0x48] sm:$0xff]
        %v1513 = vld [vmem:[%s363 + $0x50] sm:$0xff]
        %v1514 = vld [vmem:[%s363 + $0x58] sm:$0xff]
        %v1515 = vld [vmem:[%s363 + $0x60] sm:$0xff]
        %v1516 = vld [vmem:[%s363 + $0x68] sm:$0xff]
        %v1517 = vld [vmem:[%s363 + $0x70] sm:$0xff]
        %v1518 = vld [vmem:[%s363 + $0x78] sm:$0xff]
        %v1519 = vld [vmem:[%s363 + $0x80] sm:$0xff]
        %v1520 = vld [vmem:[%s363 + $0x88] sm:$0xff]
        %v1521 = vld [vmem:[%s363 + $0x90] sm:$0xff]
        %v1522 = vld [vmem:[%s363 + $0x98] sm:$0xff]
        %v1523 = vld [vmem:[%s363 + $0xa0] sm:$0xff]
        %v1524 = vld [vmem:[%s363 + $0xa8] sm:$0xff]
        %v1525 = vld [vmem:[%s363 + $0xb0] sm:$0xff]
        %v1526 = vld [vmem:[%s363 + $0xb8] sm:$0xff]
        %v1527 = vld [vmem:[%s363 + $0xc0] sm:$0xff]
        %v1528 = vld [vmem:[%s363 + $0xc8] sm:$0xff]
        %v1529 = vld [vmem:[%s363 + $0xd0] sm:$0xff]
        %v1530 = vld [vmem:[%s363 + $0xd8] sm:$0xff]
        %v1531 = vld [vmem:[%s363 + $0xe0] sm:$0xff]
        %v1532 = vld [vmem:[%s363 + $0xe8] sm:$0xff]
        %v1533 = vld [vmem:[%s363 + $0xf0] sm:$0xff]
        %v1534 = vld [vmem:[%s363 + $0xf8] sm:$0xff]
        %v1535 = vld [vmem:[%s363 + $0x100] sm:$0xff]
        %v1536 = vld [vmem:[%s363 + $0x108] sm:$0xff]
        %v1537 = vld [vmem:[%s363 + $0x110] sm:$0xff]
        %v1538 = vld [vmem:[%s363 + $0x118] sm:$0xff]
        %v1539 = vld [vmem:[%s363 + $0x120] sm:$0xff]
        %v1540 = vld [vmem:[%s363 + $0x128] sm:$0xff]
        %v1541 = vld [vmem:[%s363 + $0x130] sm:$0xff]
        %v1542 = vld [vmem:[%s363 + $0x138] sm:$0xff]
        %v1543 = vld [vmem:[%s363 + $0x140] sm:$0xff]
        %v1544 = vld [vmem:[%s363 + $0x148] sm:$0xff]
        %v1545 = vld [vmem:[%s363 + $0x150] sm:$0xff]
        %v1546 = vld [vmem:[%s363 + $0x158] sm:$0xff]
        %v1547 = vld [vmem:[%s363 + $0x160] sm:$0xff]
        %v1548 = vld [vmem:[%s363 + $0x168] sm:$0xff]
        %v1549 = vld [vmem:[%s363 + $0x170] sm:$0xff]
        %v1550 = vld [vmem:[%s363 + $0x178] sm:$0xff]
        %v1551 = vld [vmem:[%s363 + $0x180] sm:$0xff]
        %v1552 = vld [vmem:[%s363 + $0x188] sm:$0xff]
        %v1553 = vld [vmem:[%s363 + $0x190] sm:$0xff]
        %v1554 = vld [vmem:[%s363 + $0x198] sm:$0xff]
        %v1555 = vld [vmem:[%s363 + $0x1a0] sm:$0xff]
        %v1556 = vld [vmem:[%s363 + $0x1a8] sm:$0xff]
        %v1557 = vld [vmem:[%s363 + $0x1b0] sm:$0xff]
        %v1558 = vld [vmem:[%s363 + $0x1b8] sm:$0xff]
        %v1559 = vld [vmem:[%s363 + $0x1c0] sm:$0xff]
        %v1560 = vld [vmem:[%s363 + $0x1c8] sm:$0xff]
        %v1561 = vld [vmem:[%s363 + $0x1d0] sm:$0xff]
        %v1562 = vld [vmem:[%s363 + $0x1d8] sm:$0xff]
        %v1563 = vld [vmem:[%s363 + $0x1e0] sm:$0xff]
        %v1564 = vld [vmem:[%s363 + $0x1e8] sm:$0xff]
        %v1565 = vld [vmem:[%s363 + $0x1f0] sm:$0xff]
        %v1566 = vld [vmem:[%s363 + $0x1f8] sm:$0xff]
        %1567 = vmatprep.subr.mxu0 %v1564
        %1568 = vmatpush1.msra.mxu0 %v1563
        %1569 = vmatprep.subr.mxu0 %v1560
        %1570 = vmatpush1.msra.mxu0 %v1559
        %1571 = vmatprep.subr.mxu0 %v1556
        %1572 = vmatpush1.msra.mxu0 %v1555
        %1573 = vmatprep.subr.mxu0 %v1552
        %1574 = vmatpush1.msra.mxu0 %v1551
        %1575 = vmatprep.subr.mxu0 %v1548
        %1576 = vmatpush1.msra.mxu0 %v1547
        %1577 = vmatprep.subr.mxu0 %v1544
        %1578 = vmatpush1.msra.mxu0 %v1543
        %1579 = vmatprep.subr.mxu0 %v1540
        %1580 = vmatpush1.msra.mxu0 %v1539
        %1581 = vmatprep.subr.mxu0 %v1536
        %1582 = vmatpush1.msra.mxu0 %v1535
        %1583 = vmatprep.subr.mxu0 %v1532
        %1584 = vmatpush1.msra.mxu0 %v1531
        %1585 = vmatprep.subr.mxu0 %v1528
        %1586 = vmatpush1.msra.mxu0 %v1527
        %1587 = vmatprep.subr.mxu0 %v1524
        %1588 = vmatpush1.msra.mxu0 %v1523
        %1589 = vmatprep.subr.mxu0 %v1520
        %1590 = vmatpush1.msra.mxu0 %v1519
        %1591 = vmatprep.subr.mxu0 %v1516
        %1592 = vmatpush1.msra.mxu0 %v1515
        %1593 = vmatprep.subr.mxu0 %v1512
        %1594 = vmatpush1.msra.mxu0 %v1511
        %1595 = vmatprep.subr.mxu0 %v1508
        %1596 = vmatpush1.msra.mxu0 %v1507
        %1597 = vmatprep.subr.mxu0 %v1504
        %1598 = vmatpush1.msra.mxu0 %v1503
        %1599 = vmatprep.subr.mxu0 0.0
        %1600 = vmatpush2.msra.mxu0 0.0
        %1601 = vmatprep.subr.mxu0 0.0
        %1602 = vmatpush2.msra.mxu0 0.0
        %1603 = vmatprep.subr.mxu0 0.0
        %1604 = vmatpush2.msra.mxu0 0.0
        %1605 = vmatprep.subr.mxu0 0.0
        %1606 = vmatpush2.msra.mxu0 0.0
        %1607 = vmatprep.subr.mxu0 0.0
        %1608 = vmatpush2.msra.mxu0 0.0
        %1609 = vmatprep.subr.mxu0 0.0
        %1610 = vmatpush2.msra.mxu0 0.0
        %1611 = vmatprep.subr.mxu0 0.0
        %1612 = vmatpush2.msra.mxu0 0.0
        %1613 = vmatprep.subr.mxu0 0.0
        %1614 = vmatpush2.msra.mxu0 0.0
        %1615 = vmatprep.subr.mxu0 0.0
        %1616 = vmatpush2.msra.mxu0 0.0
        %1617 = vmatprep.subr.mxu0 0.0
        %1618 = vmatpush2.msra.mxu0 0.0
        %1619 = vmatprep.subr.mxu0 0.0
        %1620 = vmatpush2.msra.mxu0 0.0
        %1621 = vmatprep.subr.mxu0 0.0
        %1622 = vmatpush2.msra.mxu0 0.0
        %1623 = vmatprep.subr.mxu0 0.0
        %1624 = vmatpush2.msra.mxu0 0.0
        %1625 = vmatprep.subr.mxu0 0.0
        %1626 = vmatpush2.msra.mxu0 0.0
        %1627 = vmatprep.subr.mxu0 0.0
        %1628 = vmatpush2.msra.mxu0 0.0
        %1629 = vmatprep.subr.mxu0 0.0
        %1630 = vmatpush2.msra.mxu0 0.0
        %1631 = vmatprep.mubr.f32.mxu0 0.0
        %1632 = vmatmul.mubr.f32.gmra.mxu0 %v1497
        %v1633 = vpop.f32.mrf.mxu0
        %v1634 = vadd.f32 0.0, %v1633
        %v1635 = vpop.f32.mrf.mxu0
        %v1636 = vadd.f32 0.0, %v1635
        %1637 = vdwg.mxu0
        %1638 = vmatprep.subr.mxu0 %v1566
        %1639 = vmatpush1.msra.mxu0 %v1565
        %1640 = vmatprep.subr.mxu0 %v1562
        %1641 = vmatpush1.msra.mxu0 %v1561
        %1642 = vmatprep.subr.mxu0 %v1558
        %1643 = vmatpush1.msra.mxu0 %v1557
        %1644 = vmatprep.subr.mxu0 %v1554
        %1645 = vmatpush1.msra.mxu0 %v1553
        %1646 = vmatprep.subr.mxu0 %v1550
        %1647 = vmatpush1.msra.mxu0 %v1549
        %1648 = vmatprep.subr.mxu0 %v1546
        %1649 = vmatpush1.msra.mxu0 %v1545
        %1650 = vmatprep.subr.mxu0 %v1542
        %1651 = vmatpush1.msra.mxu0 %v1541
        %1652 = vmatprep.subr.mxu0 %v1538
        %1653 = vmatpush1.msra.mxu0 %v1537
        %1654 = vmatprep.subr.mxu0 %v1534
        %1655 = vmatpush1.msra.mxu0 %v1533
        %1656 = vmatprep.subr.mxu0 %v1530
        %1657 = vmatpush1.msra.mxu0 %v1529
        %1658 = vmatprep.subr.mxu0 %v1526
        %1659 = vmatpush1.msra.mxu0 %v1525
        %1660 = vmatprep.subr.mxu0 %v1522
        %1661 = vmatpush1.msra.mxu0 %v1521
        %1662 = vmatprep.subr.mxu0 %v1518
        %1663 = vmatpush1.msra.mxu0 %v1517
        %1664 = vmatprep.subr.mxu0 %v1514
        %1665 = vmatpush1.msra.mxu0 %v1513
        %1666 = vmatprep.subr.mxu0 %v1510
        %1667 = vmatpush1.msra.mxu0 %v1509
        %1668 = vmatprep.subr.mxu0 %v1506
        %1669 = vmatpush1.msra.mxu0 %v1505
        %1670 = vmatprep.subr.mxu0 0.0
        %1671 = vmatpush2.msra.mxu0 0.0
        %1672 = vmatprep.subr.mxu0 0.0
        %1673 = vmatpush2.msra.mxu0 0.0
        %1674 = vmatprep.subr.mxu0 0.0
        %1675 = vmatpush2.msra.mxu0 0.0
        %1676 = vmatprep.subr.mxu0 0.0
        %1677 = vmatpush2.msra.mxu0 0.0
        %1678 = vmatprep.subr.mxu0 0.0
        %1679 = vmatpush2.msra.mxu0 0.0
        %1680 = vmatprep.subr.mxu0 0.0
        %1681 = vmatpush2.msra.mxu0 0.0
        %1682 = vmatprep.subr.mxu0 0.0
        %1683 = vmatpush2.msra.mxu0 0.0
        %1684 = vmatprep.subr.mxu0 0.0
        %1685 = vmatpush2.msra.mxu0 0.0
        %1686 = vmatprep.subr.mxu0 0.0
        %1687 = vmatpush2.msra.mxu0 0.0
        %1688 = vmatprep.subr.mxu0 0.0
        %1689 = vmatpush2.msra.mxu0 0.0
        %1690 = vmatprep.subr.mxu0 0.0
        %1691 = vmatpush2.msra.mxu0 0.0
        %1692 = vmatprep.subr.mxu0 0.0
        %1693 = vmatpush2.msra.mxu0 0.0
        %1694 = vmatprep.subr.mxu0 0.0
        %1695 = vmatpush2.msra.mxu0 0.0
        %1696 = vmatprep.subr.mxu0 0.0
        %1697 = vmatpush2.msra.mxu0 0.0
        %1698 = vmatprep.subr.mxu0 0.0
        %1699 = vmatpush2.msra.mxu0 0.0
        %1700 = vmatprep.subr.mxu0 0.0
        %1701 = vmatpush2.msra.mxu0 0.0
        %1702 = vmatprep.mubr.f32.mxu0 0.0
        %1703 = vmatmul.mubr.f32.gmra.mxu0 %v1497
        %v1704 = vpop.f32.mrf.mxu0
        %v1705 = vadd.f32 0.0, %v1704
        %v1706 = vpop.f32.mrf.mxu0
        %v1707 = vadd.f32 0.0, %v1706
        %1708 = vdwg.mxu0
        %v1709 = vadd.f32 %v1499, %v1634
        %v1710 = vadd.f32 %v1500, %v1636
        %v1711 = vadd.f32 %v1501, %v1705
        %v1712 = vadd.f32 %v1502, %v1707
        %v1713 = vxor.u32 %v1709, 2147483648
        %v1714 = vmul.f32 %v1713, 1.442695
        %v1715 = vpow.pop %v1714
        %v1716 = vadd.f32 %v1715, 1.0
        %v1717 = vrcp.pop %v1716
        %v1718 = vmul.f32 1.0, %v1717
        %v1719 = vxor.u32 %v1710, 2147483648
        %v1720 = vmul.f32 %v1719, 1.442695
        %v1721 = vpow.pop %v1720
        %v1722 = vadd.f32 %v1721, 1.0
        %v1723 = vrcp.pop %v1722
        %v1724 = vmul.f32 1.0, %v1723
        %v1725 = vtanh.pop %v1711
        %v1726 = vxor.u32 %v1712, 2147483648
        %v1727 = vmul.f32 %v1726, 1.442695
        %v1728 = vpow.pop %v1727
        %v1729 = vadd.f32 %v1728, 1.0
        %v1730 = vrcp.pop %v1729
        %v1731 = vmul.f32 1.0, %v1730
        %v1732 = vmul.f32 %v1724, %v1495
        %v1733 = vmul.f32 %v1718, %v1725
        %v1734 = vadd.f32 %v1732, %v1733
        %v1735 = vtanh.pop %v1734
        %v1736 = vmul.f32 %v1731, %v1735
        %1737 = vst [vmem:[#allocation2 + $0x8] sm:$0xff] %v1736
        %v1738 = vld [vmem:[#allocation3 + $0x40] sm:$0xff]
        %v1739 = vld [vmem:[#allocation3 + $0x48] sm:$0xff]
        %v1740 = vld [vmem:[#allocation3 + $0x50] sm:$0xff]
        %v1741 = vld [vmem:[#allocation3 + $0x58] sm:$0xff]
        %v1742 = vld [vmem:[%s363] sm:$0xff]
        %v1743 = vld [vmem:[%s363 + $0x8] sm:$0xff]
        %v1744 = vld [vmem:[%s363 + $0x10] sm:$0xff]
        %v1745 = vld [vmem:[%s363 + $0x18] sm:$0xff]
        %v1746 = vld [vmem:[%s363 + $0x20] sm:$0xff]
        %v1747 = vld [vmem:[%s363 + $0x28] sm:$0xff]
        %v1748 = vld [vmem:[%s363 + $0x30] sm:$0xff]
        %v1749 = vld [vmem:[%s363 + $0x38] sm:$0xff]
        %v1750 = vld [vmem:[%s363 + $0x40] sm:$0xff]
        %v1751 = vld [vmem:[%s363 + $0x48] sm:$0xff]
        %v1752 = vld [vmem:[%s363 + $0x50] sm:$0xff]
        %v1753 = vld [vmem:[%s363 + $0x58] sm:$0xff]
        %v1754 = vld [vmem:[%s363 + $0x60] sm:$0xff]
        %v1755 = vld [vmem:[%s363 + $0x68] sm:$0xff]
        %v1756 = vld [vmem:[%s363 + $0x70] sm:$0xff]
        %v1757 = vld [vmem:[%s363 + $0x78] sm:$0xff]
        %v1758 = vld [vmem:[%s363 + $0x80] sm:$0xff]
        %v1759 = vld [vmem:[%s363 + $0x88] sm:$0xff]
        %v1760 = vld [vmem:[%s363 + $0x90] sm:$0xff]
        %v1761 = vld [vmem:[%s363 + $0x98] sm:$0xff]
        %v1762 = vld [vmem:[%s363 + $0xa0] sm:$0xff]
        %v1763 = vld [vmem:[%s363 + $0xa8] sm:$0xff]
        %v1764 = vld [vmem:[%s363 + $0xb0] sm:$0xff]
        %v1765 = vld [vmem:[%s363 + $0xb8] sm:$0xff]
        %v1766 = vld [vmem:[%s363 + $0xc0] sm:$0xff]
        %v1767 = vld [vmem:[%s363 + $0xc8] sm:$0xff]
        %v1768 = vld [vmem:[%s363 + $0xd0] sm:$0xff]
        %v1769 = vld [vmem:[%s363 + $0xd8] sm:$0xff]
        %v1770 = vld [vmem:[%s363 + $0xe0] sm:$0xff]
        %v1771 = vld [vmem:[%s363 + $0xe8] sm:$0xff]
        %v1772 = vld [vmem:[%s363 + $0xf0] sm:$0xff]
        %v1773 = vld [vmem:[%s363 + $0xf8] sm:$0xff]
        %v1774 = vld [vmem:[%s363 + $0x100] sm:$0xff]
        %v1775 = vld [vmem:[%s363 + $0x108] sm:$0xff]
        %v1776 = vld [vmem:[%s363 + $0x110] sm:$0xff]
        %v1777 = vld [vmem:[%s363 + $0x118] sm:$0xff]
        %v1778 = vld [vmem:[%s363 + $0x120] sm:$0xff]
        %v1779 = vld [vmem:[%s363 + $0x128] sm:$0xff]
        %v1780 = vld [vmem:[%s363 + $0x130] sm:$0xff]
        %v1781 = vld [vmem:[%s363 + $0x138] sm:$0xff]
        %v1782 = vld [vmem:[%s363 + $0x140] sm:$0xff]
        %v1783 = vld [vmem:[%s363 + $0x148] sm:$0xff]
        %v1784 = vld [vmem:[%s363 + $0x150] sm:$0xff]
        %v1785 = vld [vmem:[%s363 + $0x158] sm:$0xff]
        %v1786 = vld [vmem:[%s363 + $0x160] sm:$0xff]
        %v1787 = vld [vmem:[%s363 + $0x168] sm:$0xff]
        %v1788 = vld [vmem:[%s363 + $0x170] sm:$0xff]
        %v1789 = vld [vmem:[%s363 + $0x178] sm:$0xff]
        %v1790 = vld [vmem:[%s363 + $0x180] sm:$0xff]
        %v1791 = vld [vmem:[%s363 + $0x188] sm:$0xff]
        %v1792 = vld [vmem:[%s363 + $0x190] sm:$0xff]
        %v1793 = vld [vmem:[%s363 + $0x198] sm:$0xff]
        %v1794 = vld [vmem:[%s363 + $0x1a0] sm:$0xff]
        %v1795 = vld [vmem:[%s363 + $0x1a8] sm:$0xff]
        %v1796 = vld [vmem:[%s363 + $0x1b0] sm:$0xff]
        %v1797 = vld [vmem:[%s363 + $0x1b8] sm:$0xff]
        %v1798 = vld [vmem:[%s363 + $0x1c0] sm:$0xff]
        %v1799 = vld [vmem:[%s363 + $0x1c8] sm:$0xff]
        %v1800 = vld [vmem:[%s363 + $0x1d0] sm:$0xff]
        %v1801 = vld [vmem:[%s363 + $0x1d8] sm:$0xff]
        %v1802 = vld [vmem:[%s363 + $0x1e0] sm:$0xff]
        %v1803 = vld [vmem:[%s363 + $0x1e8] sm:$0xff]
        %v1804 = vld [vmem:[%s363 + $0x1f0] sm:$0xff]
        %v1805 = vld [vmem:[%s363 + $0x1f8] sm:$0xff]
        %1806 = vmatprep.subr.mxu0 %v1803
        %1807 = vmatpush1.msra.mxu0 %v1802
        %1808 = vmatprep.subr.mxu0 %v1799
        %1809 = vmatpush1.msra.mxu0 %v1798
        %1810 = vmatprep.subr.mxu0 %v1795
        %1811 = vmatpush1.msra.mxu0 %v1794
        %1812 = vmatprep.subr.mxu0 %v1791
        %1813 = vmatpush1.msra.mxu0 %v1790
        %1814 = vmatprep.subr.mxu0 %v1787
        %1815 = vmatpush1.msra.mxu0 %v1786
        %1816 = vmatprep.subr.mxu0 %v1783
        %1817 = vmatpush1.msra.mxu0 %v1782
        %1818 = vmatprep.subr.mxu0 %v1779
        %1819 = vmatpush1.msra.mxu0 %v1778
        %1820 = vmatprep.subr.mxu0 %v1775
        %1821 = vmatpush1.msra.mxu0 %v1774
        %1822 = vmatprep.subr.mxu0 %v1771
        %1823 = vmatpush1.msra.mxu0 %v1770
        %1824 = vmatprep.subr.mxu0 %v1767
        %1825 = vmatpush1.msra.mxu0 %v1766
        %1826 = vmatprep.subr.mxu0 %v1763
        %1827 = vmatpush1.msra.mxu0 %v1762
        %1828 = vmatprep.subr.mxu0 %v1759
        %1829 = vmatpush1.msra.mxu0 %v1758
        %1830 = vmatprep.subr.mxu0 %v1755
        %1831 = vmatpush1.msra.mxu0 %v1754
        %1832 = vmatprep.subr.mxu0 %v1751
        %1833 = vmatpush1.msra.mxu0 %v1750
        %1834 = vmatprep.subr.mxu0 %v1747
        %1835 = vmatpush1.msra.mxu0 %v1746
        %1836 = vmatprep.subr.mxu0 %v1743
        %1837 = vmatpush1.msra.mxu0 %v1742
        %1838 = vmatprep.subr.mxu0 0.0
        %1839 = vmatpush2.msra.mxu0 0.0
        %1840 = vmatprep.subr.mxu0 0.0
        %1841 = vmatpush2.msra.mxu0 0.0
        %1842 = vmatprep.subr.mxu0 0.0
        %1843 = vmatpush2.msra.mxu0 0.0
        %1844 = vmatprep.subr.mxu0 0.0
        %1845 = vmatpush2.msra.mxu0 0.0
        %1846 = vmatprep.subr.mxu0 0.0
        %1847 = vmatpush2.msra.mxu0 0.0
        %1848 = vmatprep.subr.mxu0 0.0
        %1849 = vmatpush2.msra.mxu0 0.0
        %1850 = vmatprep.subr.mxu0 0.0
        %1851 = vmatpush2.msra.mxu0 0.0
        %1852 = vmatprep.subr.mxu0 0.0
        %1853 = vmatpush2.msra.mxu0 0.0
        %1854 = vmatprep.subr.mxu0 0.0
        %1855 = vmatpush2.msra.mxu0 0.0
        %1856 = vmatprep.subr.mxu0 0.0
        %1857 = vmatpush2.msra.mxu0 0.0
        %1858 = vmatprep.subr.mxu0 0.0
        %1859 = vmatpush2.msra.mxu0 0.0
        %1860 = vmatprep.subr.mxu0 0.0
        %1861 = vmatpush2.msra.mxu0 0.0
        %1862 = vmatprep.subr.mxu0 0.0
        %1863 = vmatpush2.msra.mxu0 0.0
        %1864 = vmatprep.subr.mxu0 0.0
        %1865 = vmatpush2.msra.mxu0 0.0
        %1866 = vmatprep.subr.mxu0 0.0
        %1867 = vmatpush2.msra.mxu0 0.0
        %1868 = vmatprep.subr.mxu0 0.0
        %1869 = vmatpush2.msra.mxu0 0.0
        %1870 = vmatprep.mubr.f32.mxu0 0.0
        %1871 = vmatmul.mubr.f32.gmra.mxu0 %v1736
        %v1872 = vpop.f32.mrf.mxu0
        %v1873 = vadd.f32 0.0, %v1872
        %v1874 = vpop.f32.mrf.mxu0
        %v1875 = vadd.f32 0.0, %v1874
        %1876 = vdwg.mxu0
        %1877 = vmatprep.subr.mxu0 %v1805
        %1878 = vmatpush1.msra.mxu0 %v1804
        %1879 = vmatprep.subr.mxu0 %v1801
        %1880 = vmatpush1.msra.mxu0 %v1800
        %1881 = vmatprep.subr.mxu0 %v1797
        %1882 = vmatpush1.msra.mxu0 %v1796
        %1883 = vmatprep.subr.mxu0 %v1793
        %1884 = vmatpush1.msra.mxu0 %v1792
        %1885 = vmatprep.subr.mxu0 %v1789
        %1886 = vmatpush1.msra.mxu0 %v1788
        %1887 = vmatprep.subr.mxu0 %v1785
        %1888 = vmatpush1.msra.mxu0 %v1784
        %1889 = vmatprep.subr.mxu0 %v1781
        %1890 = vmatpush1.msra.mxu0 %v1780
        %1891 = vmatprep.subr.mxu0 %v1777
        %1892 = vmatpush1.msra.mxu0 %v1776
        %1893 = vmatprep.subr.mxu0 %v1773
        %1894 = vmatpush1.msra.mxu0 %v1772
        %1895 = vmatprep.subr.mxu0 %v1769
        %1896 = vmatpush1.msra.mxu0 %v1768
        %1897 = vmatprep.subr.mxu0 %v1765
        %1898 = vmatpush1.msra.mxu0 %v1764
        %1899 = vmatprep.subr.mxu0 %v1761
        %1900 = vmatpush1.msra.mxu0 %v1760
        %1901 = vmatprep.subr.mxu0 %v1757
        %1902 = vmatpush1.msra.mxu0 %v1756
        %1903 = vmatprep.subr.mxu0 %v1753
        %1904 = vmatpush1.msra.mxu0 %v1752
        %1905 = vmatprep.subr.mxu0 %v1749
        %1906 = vmatpush1.msra.mxu0 %v1748
        %1907 = vmatprep.subr.mxu0 %v1745
        %1908 = vmatpush1.msra.mxu0 %v1744
        %1909 = vmatprep.subr.mxu0 0.0
        %1910 = vmatpush2.msra.mxu0 0.0
        %1911 = vmatprep.subr.mxu0 0.0
        %1912 = vmatpush2.msra.mxu0 0.0
        %1913 = vmatprep.subr.mxu0 0.0
        %1914 = vmatpush2.msra.mxu0 0.0
        %1915 = vmatprep.subr.mxu0 0.0
        %1916 = vmatpush2.msra.mxu0 0.0
        %1917 = vmatprep.subr.mxu0 0.0
        %1918 = vmatpush2.msra.mxu0 0.0
        %1919 = vmatprep.subr.mxu0 0.0
        %1920 = vmatpush2.msra.mxu0 0.0
        %1921 = vmatprep.subr.mxu0 0.0
        %1922 = vmatpush2.msra.mxu0 0.0
        %1923 = vmatprep.subr.mxu0 0.0
        %1924 = vmatpush2.msra.mxu0 0.0
        %1925 = vmatprep.subr.mxu0 0.0
        %1926 = vmatpush2.msra.mxu0 0.0
        %1927 = vmatprep.subr.mxu0 0.0
        %1928 = vmatpush2.msra.mxu0 0.0
        %1929 = vmatprep.subr.mxu0 0.0
        %1930 = vmatpush2.msra.mxu0 0.0
        %1931 = vmatprep.subr.mxu0 0.0
        %1932 = vmatpush2.msra.mxu0 0.0
        %1933 = vmatprep.subr.mxu0 0.0
        %1934 = vmatpush2.msra.mxu0 0.0
        %1935 = vmatprep.subr.mxu0 0.0
        %1936 = vmatpush2.msra.mxu0 0.0
        %1937 = vmatprep.subr.mxu0 0.0
        %1938 = vmatpush2.msra.mxu0 0.0
        %1939 = vmatprep.subr.mxu0 0.0
        %1940 = vmatpush2.msra.mxu0 0.0
        %1941 = vmatprep.mubr.f32.mxu0 0.0
        %1942 = vmatmul.mubr.f32.gmra.mxu0 %v1736
        %v1943 = vpop.f32.mrf.mxu0
        %v1944 = vadd.f32 0.0, %v1943
        %v1945 = vpop.f32.mrf.mxu0
        %v1946 = vadd.f32 0.0, %v1945
        %1947 = vdwg.mxu0
        %v1948 = vadd.f32 %v1738, %v1873
        %v1949 = vadd.f32 %v1739, %v1875
        %v1950 = vadd.f32 %v1740, %v1944
        %v1951 = vadd.f32 %v1741, %v1946
        %v1952 = vxor.u32 %v1948, 2147483648
        %v1953 = vmul.f32 %v1952, 1.442695
        %v1954 = vpow.pop %v1953
        %v1955 = vadd.f32 %v1954, 1.0
        %v1956 = vrcp.pop %v1955
        %v1957 = vmul.f32 1.0, %v1956
        %v1958 = vxor.u32 %v1949, 2147483648
        %v1959 = vmul.f32 %v1958, 1.442695
        %v1960 = vpow.pop %v1959
        %v1961 = vadd.f32 %v1960, 1.0
        %v1962 = vrcp.pop %v1961
        %v1963 = vmul.f32 1.0, %v1962
        %v1964 = vtanh.pop %v1950
        %v1965 = vxor.u32 %v1951, 2147483648
        %v1966 = vmul.f32 %v1965, 1.442695
        %v1967 = vpow.pop %v1966
        %v1968 = vadd.f32 %v1967, 1.0
        %v1969 = vrcp.pop %v1968
        %v1970 = vmul.f32 1.0, %v1969
        %v1971 = vmul.f32 %v1963, %v1734
        %v1972 = vmul.f32 %v1957, %v1964
        %v1973 = vadd.f32 %v1971, %v1972
        %v1974 = vtanh.pop %v1973
        %v1975 = vmul.f32 %v1970, %v1974
        %1976 = vst [vmem:[#allocation2 + $0x10] sm:$0xff] %v1975
        %v1977 = vld [vmem:[#allocation3 + $0x60] sm:$0xff]
        %v1978 = vld [vmem:[#allocation3 + $0x68] sm:$0xff]
        %v1979 = vld [vmem:[#allocation3 + $0x70] sm:$0xff]
        %v1980 = vld [vmem:[#allocation3 + $0x78] sm:$0xff]
        %v1981 = vld [vmem:[%s363] sm:$0xff]
        %v1982 = vld [vmem:[%s363 + $0x8] sm:$0xff]
        %v1983 = vld [vmem:[%s363 + $0x10] sm:$0xff]
        %v1984 = vld [vmem:[%s363 + $0x18] sm:$0xff]
        %v1985 = vld [vmem:[%s363 + $0x20] sm:$0xff]
        %v1986 = vld [vmem:[%s363 + $0x28] sm:$0xff]
        %v1987 = vld [vmem:[%s363 + $0x30] sm:$0xff]
        %v1988 = vld [vmem:[%s363 + $0x38] sm:$0xff]
        %v1989 = vld [vmem:[%s363 + $0x40] sm:$0xff]
        %v1990 = vld [vmem:[%s363 + $0x48] sm:$0xff]
        %v1991 = vld [vmem:[%s363 + $0x50] sm:$0xff]
        %v1992 = vld [vmem:[%s363 + $0x58] sm:$0xff]
        %v1993 = vld [vmem:[%s363 + $0x60] sm:$0xff]
        %v1994 = vld [vmem:[%s363 + $0x68] sm:$0xff]
        %v1995 = vld [vmem:[%s363 + $0x70] sm:$0xff]
        %v1996 = vld [vmem:[%s363 + $0x78] sm:$0xff]
        %v1997 = vld [vmem:[%s363 + $0x80] sm:$0xff]
        %v1998 = vld [vmem:[%s363 + $0x88] sm:$0xff]
        %v1999 = vld [vmem:[%s363 + $0x90] sm:$0xff]
        %v2000 = vld [vmem:[%s363 + $0x98] sm:$0xff]
        %v2001 = vld [vmem:[%s363 + $0xa0] sm:$0xff]
        %v2002 = vld [vmem:[%s363 + $0xa8] sm:$0xff]
        %v2003 = vld [vmem:[%s363 + $0xb0] sm:$0xff]
        %v2004 = vld [vmem:[%s363 + $0xb8] sm:$0xff]
        %v2005 = vld [vmem:[%s363 + $0xc0] sm:$0xff]
        %v2006 = vld [vmem:[%s363 + $0xc8] sm:$0xff]
        %v2007 = vld [vmem:[%s363 + $0xd0] sm:$0xff]
        %v2008 = vld [vmem:[%s363 + $0xd8] sm:$0xff]
        %v2009 = vld [vmem:[%s363 + $0xe0] sm:$0xff]
        %v2010 = vld [vmem:[%s363 + $0xe8] sm:$0xff]
        %v2011 = vld [vmem:[%s363 + $0xf0] sm:$0xff]
        %v2012 = vld [vmem:[%s363 + $0xf8] sm:$0xff]
        %v2013 = vld [vmem:[%s363 + $0x100] sm:$0xff]
        %v2014 = vld [vmem:[%s363 + $0x108] sm:$0xff]
        %v2015 = vld [vmem:[%s363 + $0x110] sm:$0xff]
        %v2016 = vld [vmem:[%s363 + $0x118] sm:$0xff]
        %v2017 = vld [vmem:[%s363 + $0x120] sm:$0xff]
        %v2018 = vld [vmem:[%s363 + $0x128] sm:$0xff]
        %v2019 = vld [vmem:[%s363 + $0x130] sm:$0xff]
        %v2020 = vld [vmem:[%s363 + $0x138] sm:$0xff]
        %v2021 = vld [vmem:[%s363 + $0x140] sm:$0xff]
        %v2022 = vld [vmem:[%s363 + $0x148] sm:$0xff]
        %v2023 = vld [vmem:[%s363 + $0x150] sm:$0xff]
        %v2024 = vld [vmem:[%s363 + $0x158] sm:$0xff]
        %v2025 = vld [vmem:[%s363 + $0x160] sm:$0xff]
        %v2026 = vld [vmem:[%s363 + $0x168] sm:$0xff]
        %v2027 = vld [vmem:[%s363 + $0x170] sm:$0xff]
        %v2028 = vld [vmem:[%s363 + $0x178] sm:$0xff]
        %v2029 = vld [vmem:[%s363 + $0x180] sm:$0xff]
        %v2030 = vld [vmem:[%s363 + $0x188] sm:$0xff]
        %v2031 = vld [vmem:[%s363 + $0x190] sm:$0xff]
        %v2032 = vld [vmem:[%s363 + $0x198] sm:$0xff]
        %v2033 = vld [vmem:[%s363 + $0x1a0] sm:$0xff]
        %v2034 = vld [vmem:[%s363 + $0x1a8] sm:$0xff]
        %v2035 = vld [vmem:[%s363 + $0x1b0] sm:$0xff]
        %v2036 = vld [vmem:[%s363 + $0x1b8] sm:$0xff]
        %v2037 = vld [vmem:[%s363 + $0x1c0] sm:$0xff]
        %v2038 = vld [vmem:[%s363 + $0x1c8] sm:$0xff]
        %v2039 = vld [vmem:[%s363 + $0x1d0] sm:$0xff]
        %v2040 = vld [vmem:[%s363 + $0x1d8] sm:$0xff]
        %v2041 = vld [vmem:[%s363 + $0x1e0] sm:$0xff]
        %v2042 = vld [vmem:[%s363 + $0x1e8] sm:$0xff]
        %v2043 = vld [vmem:[%s363 + $0x1f0] sm:$0xff]
        %v2044 = vld [vmem:[%s363 + $0x1f8] sm:$0xff]
        %2045 = vmatprep.subr.mxu0 %v2042
        %2046 = vmatpush1.msra.mxu0 %v2041
        %2047 = vmatprep.subr.mxu0 %v2038
        %2048 = vmatpush1.msra.mxu0 %v2037
        %2049 = vmatprep.subr.mxu0 %v2034
        %2050 = vmatpush1.msra.mxu0 %v2033
        %2051 = vmatprep.subr.mxu0 %v2030
        %2052 = vmatpush1.msra.mxu0 %v2029
        %2053 = vmatprep.subr.mxu0 %v2026
        %2054 = vmatpush1.msra.mxu0 %v2025
        %2055 = vmatprep.subr.mxu0 %v2022
        %2056 = vmatpush1.msra.mxu0 %v2021
        %2057 = vmatprep.subr.mxu0 %v2018
        %2058 = vmatpush1.msra.mxu0 %v2017
        %2059 = vmatprep.subr.mxu0 %v2014
        %2060 = vmatpush1.msra.mxu0 %v2013
        %2061 = vmatprep.subr.mxu0 %v2010
        %2062 = vmatpush1.msra.mxu0 %v2009
        %2063 = vmatprep.subr.mxu0 %v2006
        %2064 = vmatpush1.msra.mxu0 %v2005
        %2065 = vmatprep.subr.mxu0 %v2002
        %2066 = vmatpush1.msra.mxu0 %v2001
        %2067 = vmatprep.subr.mxu0 %v1998
        %2068 = vmatpush1.msra.mxu0 %v1997
        %2069 = vmatprep.subr.mxu0 %v1994
        %2070 = vmatpush1.msra.mxu0 %v1993
        %2071 = vmatprep.subr.mxu0 %v1990
        %2072 = vmatpush1.msra.mxu0 %v1989
        %2073 = vmatprep.subr.mxu0 %v1986
        %2074 = vmatpush1.msra.mxu0 %v1985
        %2075 = vmatprep.subr.mxu0 %v1982
        %2076 = vmatpush1.msra.mxu0 %v1981
        %2077 = vmatprep.subr.mxu0 0.0
        %2078 = vmatpush2.msra.mxu0 0.0
        %2079 = vmatprep.subr.mxu0 0.0
        %2080 = vmatpush2.msra.mxu0 0.0
        %2081 = vmatprep.subr.mxu0 0.0
        %2082 = vmatpush2.msra.mxu0 0.0
        %2083 = vmatprep.subr.mxu0 0.0
        %2084 = vmatpush2.msra.mxu0 0.0
        %2085 = vmatprep.subr.mxu0 0.0
        %2086 = vmatpush2.msra.mxu0 0.0
        %2087 = vmatprep.subr.mxu0 0.0
        %2088 = vmatpush2.msra.mxu0 0.0
        %2089 = vmatprep.subr.mxu0 0.0
        %2090 = vmatpush2.msra.mxu0 0.0
        %2091 = vmatprep.subr.mxu0 0.0
        %2092 = vmatpush2.msra.mxu0 0.0
        %2093 = vmatprep.subr.mxu0 0.0
        %2094 = vmatpush2.msra.mxu0 0.0
        %2095 = vmatprep.subr.mxu0 0.0
        %2096 = vmatpush2.msra.mxu0 0.0
        %2097 = vmatprep.subr.mxu0 0.0
        %2098 = vmatpush2.msra.mxu0 0.0
        %2099 = vmatprep.subr.mxu0 0.0
        %2100 = vmatpush2.msra.mxu0 0.0
        %2101 = vmatprep.subr.mxu0 0.0
        %2102 = vmatpush2.msra.mxu0 0.0
        %2103 = vmatprep.subr.mxu0 0.0
        %2104 = vmatpush2.msra.mxu0 0.0
        %2105 = vmatprep.subr.mxu0 0.0
        %2106 = vmatpush2.msra.mxu0 0.0
        %2107 = vmatprep.subr.mxu0 0.0
        %2108 = vmatpush2.msra.mxu0 0.0
        %2109 = vmatprep.mubr.f32.mxu0 0.0
        %2110 = vmatmul.mubr.f32.gmra.mxu0 %v1975
        %v2111 = vpop.f32.mrf.mxu0
        %v2112 = vadd.f32 0.0, %v2111
        %v2113 = vpop.f32.mrf.mxu0
        %v2114 = vadd.f32 0.0, %v2113
        %2115 = vdwg.mxu0
        %2116 = vmatprep.subr.mxu0 %v2044
        %2117 = vmatpush1.msra.mxu0 %v2043
        %2118 = vmatprep.subr.mxu0 %v2040
        %2119 = vmatpush1.msra.mxu0 %v2039
        %2120 = vmatprep.subr.mxu0 %v2036
        %2121 = vmatpush1.msra.mxu0 %v2035
        %2122 = vmatprep.subr.mxu0 %v2032
        %2123 = vmatpush1.msra.mxu0 %v2031
        %2124 = vmatprep.subr.mxu0 %v2028
        %2125 = vmatpush1.msra.mxu0 %v2027
        %2126 = vmatprep.subr.mxu0 %v2024
        %2127 = vmatpush1.msra.mxu0 %v2023
        %2128 = vmatprep.subr.mxu0 %v2020
        %2129 = vmatpush1.msra.mxu0 %v2019
        %2130 = vmatprep.subr.mxu0 %v2016
        %2131 = vmatpush1.msra.mxu0 %v2015
        %2132 = vmatprep.subr.mxu0 %v2012
        %2133 = vmatpush1.msra.mxu0 %v2011
        %2134 = vmatprep.subr.mxu0 %v2008
        %2135 = vmatpush1.msra.mxu0 %v2007
        %2136 = vmatprep.subr.mxu0 %v2004
        %2137 = vmatpush1.msra.mxu0 %v2003
        %2138 = vmatprep.subr.mxu0 %v2000
        %2139 = vmatpush1.msra.mxu0 %v1999
        %2140 = vmatprep.subr.mxu0 %v1996
        %2141 = vmatpush1.msra.mxu0 %v1995
        %2142 = vmatprep.subr.mxu0 %v1992
        %2143 = vmatpush1.msra.mxu0 %v1991
        %2144 = vmatprep.subr.mxu0 %v1988
        %2145 = vmatpush1.msra.mxu0 %v1987
        %2146 = vmatprep.subr.mxu0 %v1984
        %2147 = vmatpush1.msra.mxu0 %v1983
        %2148 = vmatprep.subr.mxu0 0.0
        %2149 = vmatpush2.msra.mxu0 0.0
        %2150 = vmatprep.subr.mxu0 0.0
        %2151 = vmatpush2.msra.mxu0 0.0
        %2152 = vmatprep.subr.mxu0 0.0
        %2153 = vmatpush2.msra.mxu0 0.0
        %2154 = vmatprep.subr.mxu0 0.0
        %2155 = vmatpush2.msra.mxu0 0.0
        %2156 = vmatprep.subr.mxu0 0.0
        %2157 = vmatpush2.msra.mxu0 0.0
        %2158 = vmatprep.subr.mxu0 0.0
        %2159 = vmatpush2.msra.mxu0 0.0
        %2160 = vmatprep.subr.mxu0 0.0
        %2161 = vmatpush2.msra.mxu0 0.0
        %2162 = vmatprep.subr.mxu0 0.0
        %2163 = vmatpush2.msra.mxu0 0.0
        %2164 = vmatprep.subr.mxu0 0.0
        %2165 = vmatpush2.msra.mxu0 0.0
        %2166 = vmatprep.subr.mxu0 0.0
        %2167 = vmatpush2.msra.mxu0 0.0
        %2168 = vmatprep.subr.mxu0 0.0
        %2169 = vmatpush2.msra.mxu0 0.0
        %2170 = vmatprep.subr.mxu0 0.0
        %2171 = vmatpush2.msra.mxu0 0.0
        %2172 = vmatprep.subr.mxu0 0.0
        %2173 = vmatpush2.msra.mxu0 0.0
        %2174 = vmatprep.subr.mxu0 0.0
        %2175 = vmatpush2.msra.mxu0 0.0
        %2176 = vmatprep.subr.mxu0 0.0
        %2177 = vmatpush2.msra.mxu0 0.0
        %2178 = vmatprep.subr.mxu0 0.0
        %2179 = vmatpush2.msra.mxu0 0.0
        %2180 = vmatprep.mubr.f32.mxu0 0.0
        %2181 = vmatmul.mubr.f32.gmra.mxu0 %v1975
        %v2182 = vpop.f32.mrf.mxu0
        %v2183 = vadd.f32 0.0, %v2182
        %v2184 = vpop.f32.mrf.mxu0
        %v2185 = vadd.f32 0.0, %v2184
        %2186 = vdwg.mxu0
        %v2187 = vadd.f32 %v1977, %v2112
        %v2188 = vadd.f32 %v1978, %v2114
        %v2189 = vadd.f32 %v1979, %v2183
        %v2190 = vadd.f32 %v1980, %v2185
        %v2191 = vxor.u32 %v2187, 2147483648
        %v2192 = vmul.f32 %v2191, 1.442695
        %v2193 = vpow.pop %v2192
        %v2194 = vadd.f32 %v2193, 1.0
        %v2195 = vrcp.pop %v2194
        %v2196 = vmul.f32 1.0, %v2195
        %v2197 = vxor.u32 %v2188, 2147483648
        %v2198 = vmul.f32 %v2197, 1.442695
        %v2199 = vpow.pop %v2198
        %v2200 = vadd.f32 %v2199, 1.0
        %v2201 = vrcp.pop %v2200
        %v2202 = vmul.f32 1.0, %v2201
        %v2203 = vtanh.pop %v2189
        %v2204 = vxor.u32 %v2190, 2147483648
        %v2205 = vmul.f32 %v2204, 1.442695
        %v2206 = vpow.pop %v2205
        %v2207 = vadd.f32 %v2206, 1.0
        %v2208 = vrcp.pop %v2207
        %v2209 = vmul.f32 1.0, %v2208
        %v2210 = vmul.f32 %v2202, %v1973
        %v2211 = vmul.f32 %v2196, %v2203
        %v2212 = vadd.f32 %v2210, %v2211
        %v2213 = vtanh.pop %v2212
        %v2214 = vmul.f32 %v2209, %v2213
        %2215 = vst [vmem:[#allocation2 + $0x18] sm:$0xff] %v2214
        %v2216 = vld [vmem:[#allocation3 + $0x80] sm:$0xff]
        %v2217 = vld [vmem:[#allocation3 + $0x88] sm:$0xff]
        %v2218 = vld [vmem:[#allocation3 + $0x90] sm:$0xff]
        %v2219 = vld [vmem:[#allocation3 + $0x98] sm:$0xff]
        %v2220 = vld [vmem:[%s363] sm:$0xff]
        %v2221 = vld [vmem:[%s363 + $0x8] sm:$0xff]
        %v2222 = vld [vmem:[%s363 + $0x10] sm:$0xff]
        %v2223 = vld [vmem:[%s363 + $0x18] sm:$0xff]
        %v2224 = vld [vmem:[%s363 + $0x20] sm:$0xff]
        %v2225 = vld [vmem:[%s363 + $0x28] sm:$0xff]
        %v2226 = vld [vmem:[%s363 + $0x30] sm:$0xff]
        %v2227 = vld [vmem:[%s363 + $0x38] sm:$0xff]
        %v2228 = vld [vmem:[%s363 + $0x40] sm:$0xff]
        %v2229 = vld [vmem:[%s363 + $0x48] sm:$0xff]
        %v2230 = vld [vmem:[%s363 + $0x50] sm:$0xff]
        %v2231 = vld [vmem:[%s363 + $0x58] sm:$0xff]
        %v2232 = vld [vmem:[%s363 + $0x60] sm:$0xff]
        %v2233 = vld [vmem:[%s363 + $0x68] sm:$0xff]
        %v2234 = vld [vmem:[%s363 + $0x70] sm:$0xff]
        %v2235 = vld [vmem:[%s363 + $0x78] sm:$0xff]
        %v2236 = vld [vmem:[%s363 + $0x80] sm:$0xff]
        %v2237 = vld [vmem:[%s363 + $0x88] sm:$0xff]
        %v2238 = vld [vmem:[%s363 + $0x90] sm:$0xff]
        %v2239 = vld [vmem:[%s363 + $0x98] sm:$0xff]
        %v2240 = vld [vmem:[%s363 + $0xa0] sm:$0xff]
        %v2241 = vld [vmem:[%s363 + $0xa8] sm:$0xff]
        %v2242 = vld [vmem:[%s363 + $0xb0] sm:$0xff]
        %v2243 = vld [vmem:[%s363 + $0xb8] sm:$0xff]
        %v2244 = vld [vmem:[%s363 + $0xc0] sm:$0xff]
        %v2245 = vld [vmem:[%s363 + $0xc8] sm:$0xff]
        %v2246 = vld [vmem:[%s363 + $0xd0] sm:$0xff]
        %v2247 = vld [vmem:[%s363 + $0xd8] sm:$0xff]
        %v2248 = vld [vmem:[%s363 + $0xe0] sm:$0xff]
        %v2249 = vld [vmem:[%s363 + $0xe8] sm:$0xff]
        %v2250 = vld [vmem:[%s363 + $0xf0] sm:$0xff]
        %v2251 = vld [vmem:[%s363 + $0xf8] sm:$0xff]
        %v2252 = vld [vmem:[%s363 + $0x100] sm:$0xff]
        %v2253 = vld [vmem:[%s363 + $0x108] sm:$0xff]
        %v2254 = vld [vmem:[%s363 + $0x110] sm:$0xff]
        %v2255 = vld [vmem:[%s363 + $0x118] sm:$0xff]
        %v2256 = vld [vmem:[%s363 + $0x120] sm:$0xff]
        %v2257 = vld [vmem:[%s363 + $0x128] sm:$0xff]
        %v2258 = vld [vmem:[%s363 + $0x130] sm:$0xff]
        %v2259 = vld [vmem:[%s363 + $0x138] sm:$0xff]
        %v2260 = vld [vmem:[%s363 + $0x140] sm:$0xff]
        %v2261 = vld [vmem:[%s363 + $0x148] sm:$0xff]
        %v2262 = vld [vmem:[%s363 + $0x150] sm:$0xff]
        %v2263 = vld [vmem:[%s363 + $0x158] sm:$0xff]
        %v2264 = vld [vmem:[%s363 + $0x160] sm:$0xff]
        %v2265 = vld [vmem:[%s363 + $0x168] sm:$0xff]
        %v2266 = vld [vmem:[%s363 + $0x170] sm:$0xff]
        %v2267 = vld [vmem:[%s363 + $0x178] sm:$0xff]
        %v2268 = vld [vmem:[%s363 + $0x180] sm:$0xff]
        %v2269 = vld [vmem:[%s363 + $0x188] sm:$0xff]
        %v2270 = vld [vmem:[%s363 + $0x190] sm:$0xff]
        %v2271 = vld [vmem:[%s363 + $0x198] sm:$0xff]
        %v2272 = vld [vmem:[%s363 + $0x1a0] sm:$0xff]
        %v2273 = vld [vmem:[%s363 + $0x1a8] sm:$0xff]
        %v2274 = vld [vmem:[%s363 + $0x1b0] sm:$0xff]
        %v2275 = vld [vmem:[%s363 + $0x1b8] sm:$0xff]
        %v2276 = vld [vmem:[%s363 + $0x1c0] sm:$0xff]
        %v2277 = vld [vmem:[%s363 + $0x1c8] sm:$0xff]
        %v2278 = vld [vmem:[%s363 + $0x1d0] sm:$0xff]
        %v2279 = vld [vmem:[%s363 + $0x1d8] sm:$0xff]
        %v2280 = vld [vmem:[%s363 + $0x1e0] sm:$0xff]
        %v2281 = vld [vmem:[%s363 + $0x1e8] sm:$0xff]
        %v2282 = vld [vmem:[%s363 + $0x1f0] sm:$0xff]
        %v2283 = vld [vmem:[%s363 + $0x1f8] sm:$0xff]
        %2284 = vmatprep.subr.mxu0 %v2281
        %2285 = vmatpush1.msra.mxu0 %v2280
        %2286 = vmatprep.subr.mxu0 %v2277
        %2287 = vmatpush1.msra.mxu0 %v2276
        %2288 = vmatprep.subr.mxu0 %v2273
        %2289 = vmatpush1.msra.mxu0 %v2272
        %2290 = vmatprep.subr.mxu0 %v2269
        %2291 = vmatpush1.msra.mxu0 %v2268
        %2292 = vmatprep.subr.mxu0 %v2265
        %2293 = vmatpush1.msra.mxu0 %v2264
        %2294 = vmatprep.subr.mxu0 %v2261
        %2295 = vmatpush1.msra.mxu0 %v2260
        %2296 = vmatprep.subr.mxu0 %v2257
        %2297 = vmatpush1.msra.mxu0 %v2256
        %2298 = vmatprep.subr.mxu0 %v2253
        %2299 = vmatpush1.msra.mxu0 %v2252
        %2300 = vmatprep.subr.mxu0 %v2249
        %2301 = vmatpush1.msra.mxu0 %v2248
        %2302 = vmatprep.subr.mxu0 %v2245
        %2303 = vmatpush1.msra.mxu0 %v2244
        %2304 = vmatprep.subr.mxu0 %v2241
        %2305 = vmatpush1.msra.mxu0 %v2240
        %2306 = vmatprep.subr.mxu0 %v2237
        %2307 = vmatpush1.msra.mxu0 %v2236
        %2308 = vmatprep.subr.mxu0 %v2233
        %2309 = vmatpush1.msra.mxu0 %v2232
        %2310 = vmatprep.subr.mxu0 %v2229
        %2311 = vmatpush1.msra.mxu0 %v2228
        %2312 = vmatprep.subr.mxu0 %v2225
        %2313 = vmatpush1.msra.mxu0 %v2224
        %2314 = vmatprep.subr.mxu0 %v2221
        %2315 = vmatpush1.msra.mxu0 %v2220
        %2316 = vmatprep.subr.mxu0 0.0
        %2317 = vmatpush2.msra.mxu0 0.0
        %2318 = vmatprep.subr.mxu0 0.0
        %2319 = vmatpush2.msra.mxu0 0.0
        %2320 = vmatprep.subr.mxu0 0.0
        %2321 = vmatpush2.msra.mxu0 0.0
        %2322 = vmatprep.subr.mxu0 0.0
        %2323 = vmatpush2.msra.mxu0 0.0
        %2324 = vmatprep.subr.mxu0 0.0
        %2325 = vmatpush2.msra.mxu0 0.0
        %2326 = vmatprep.subr.mxu0 0.0
        %2327 = vmatpush2.msra.mxu0 0.0
        %2328 = vmatprep.subr.mxu0 0.0
        %2329 = vmatpush2.msra.mxu0 0.0
        %2330 = vmatprep.subr.mxu0 0.0
        %2331 = vmatpush2.msra.mxu0 0.0
        %2332 = vmatprep.subr.mxu0 0.0
        %2333 = vmatpush2.msra.mxu0 0.0
        %2334 = vmatprep.subr.mxu0 0.0
        %2335 = vmatpush2.msra.mxu0 0.0
        %2336 = vmatprep.subr.mxu0 0.0
        %2337 = vmatpush2.msra.mxu0 0.0
        %2338 = vmatprep.subr.mxu0 0.0
        %2339 = vmatpush2.msra.mxu0 0.0
        %2340 = vmatprep.subr.mxu0 0.0
        %2341 = vmatpush2.msra.mxu0 0.0
        %2342 = vmatprep.subr.mxu0 0.0
        %2343 = vmatpush2.msra.mxu0 0.0
        %2344 = vmatprep.subr.mxu0 0.0
        %2345 = vmatpush2.msra.mxu0 0.0
        %2346 = vmatprep.subr.mxu0 0.0
        %2347 = vmatpush2.msra.mxu0 0.0
        %2348 = vmatprep.mubr.f32.mxu0 0.0
        %2349 = vmatmul.mubr.f32.gmra.mxu0 %v2214
        %v2350 = vpop.f32.mrf.mxu0
        %v2351 = vadd.f32 0.0, %v2350
        %v2352 = vpop.f32.mrf.mxu0
        %v2353 = vadd.f32 0.0, %v2352
        %2354 = vdwg.mxu0
        %2355 = vmatprep.subr.mxu0 %v2283
        %2356 = vmatpush1.msra.mxu0 %v2282
        %2357 = vmatprep.subr.mxu0 %v2279
        %2358 = vmatpush1.msra.mxu0 %v2278
        %2359 = vmatprep.subr.mxu0 %v2275
        %2360 = vmatpush1.msra.mxu0 %v2274
        %2361 = vmatprep.subr.mxu0 %v2271
        %2362 = vmatpush1.msra.mxu0 %v2270
        %2363 = vmatprep.subr.mxu0 %v2267
        %2364 = vmatpush1.msra.mxu0 %v2266
        %2365 = vmatprep.subr.mxu0 %v2263
        %2366 = vmatpush1.msra.mxu0 %v2262
        %2367 = vmatprep.subr.mxu0 %v2259
        %2368 = vmatpush1.msra.mxu0 %v2258
        %2369 = vmatprep.subr.mxu0 %v2255
        %2370 = vmatpush1.msra.mxu0 %v2254
        %2371 = vmatprep.subr.mxu0 %v2251
        %2372 = vmatpush1.msra.mxu0 %v2250
        %2373 = vmatprep.subr.mxu0 %v2247
        %2374 = vmatpush1.msra.mxu0 %v2246
        %2375 = vmatprep.subr.mxu0 %v2243
        %2376 = vmatpush1.msra.mxu0 %v2242
        %2377 = vmatprep.subr.mxu0 %v2239
        %2378 = vmatpush1.msra.mxu0 %v2238
        %2379 = vmatprep.subr.mxu0 %v2235
        %2380 = vmatpush1.msra.mxu0 %v2234
        %2381 = vmatprep.subr.mxu0 %v2231
        %2382 = vmatpush1.msra.mxu0 %v2230
        %2383 = vmatprep.subr.mxu0 %v2227
        %2384 = vmatpush1.msra.mxu0 %v2226
        %2385 = vmatprep.subr.mxu0 %v2223
        %2386 = vmatpush1.msra.mxu0 %v2222
        %2387 = vmatprep.subr.mxu0 0.0
        %2388 = vmatpush2.msra.mxu0 0.0
        %2389 = vmatprep.subr.mxu0 0.0
        %2390 = vmatpush2.msra.mxu0 0.0
        %2391 = vmatprep.subr.mxu0 0.0
        %2392 = vmatpush2.msra.mxu0 0.0
        %2393 = vmatprep.subr.mxu0 0.0
        %2394 = vmatpush2.msra.mxu0 0.0
        %2395 = vmatprep.subr.mxu0 0.0
        %2396 = vmatpush2.msra.mxu0 0.0
        %2397 = vmatprep.subr.mxu0 0.0
        %2398 = vmatpush2.msra.mxu0 0.0
        %2399 = vmatprep.subr.mxu0 0.0
        %2400 = vmatpush2.msra.mxu0 0.0
        %2401 = vmatprep.subr.mxu0 0.0
        %2402 = vmatpush2.msra.mxu0 0.0
        %2403 = vmatprep.subr.mxu0 0.0
        %2404 = vmatpush2.msra.mxu0 0.0
        %2405 = vmatprep.subr.mxu0 0.0
        %2406 = vmatpush2.msra.mxu0 0.0
        %2407 = vmatprep.subr.mxu0 0.0
        %2408 = vmatpush2.msra.mxu0 0.0
        %2409 = vmatprep.subr.mxu0 0.0
        %2410 = vmatpush2.msra.mxu0 0.0
        %2411 = vmatprep.subr.mxu0 0.0
        %2412 = vmatpush2.msra.mxu0 0.0
        %2413 = vmatprep.subr.mxu0 0.0
        %2414 = vmatpush2.msra.mxu0 0.0
        %2415 = vmatprep.subr.mxu0 0.0
        %2416 = vmatpush2.msra.mxu0 0.0
        %2417 = vmatprep.subr.mxu0 0.0
        %2418 = vmatpush2.msra.mxu0 0.0
        %2419 = vmatprep.mubr.f32.mxu0 0.0
        %2420 = vmatmul.mubr.f32.gmra.mxu0 %v2214
        %v2421 = vpop.f32.mrf.mxu0
        %v2422 = vadd.f32 0.0, %v2421
        %v2423 = vpop.f32.mrf.mxu0
        %v2424 = vadd.f32 0.0, %v2423
        %2425 = vdwg.mxu0
        %v2426 = vadd.f32 %v2216, %v2351
        %v2427 = vadd.f32 %v2217, %v2353
        %v2428 = vadd.f32 %v2218, %v2422
        %v2429 = vadd.f32 %v2219, %v2424
        %v2430 = vxor.u32 %v2426, 2147483648
        %v2431 = vmul.f32 %v2430, 1.442695
        %v2432 = vpow.pop %v2431
        %v2433 = vadd.f32 %v2432, 1.0
        %v2434 = vrcp.pop %v2433
        %v2435 = vmul.f32 1.0, %v2434
        %v2436 = vxor.u32 %v2427, 2147483648
        %v2437 = vmul.f32 %v2436, 1.442695
        %v2438 = vpow.pop %v2437
        %v2439 = vadd.f32 %v2438, 1.0
        %v2440 = vrcp.pop %v2439
        %v2441 = vmul.f32 1.0, %v2440
        %v2442 = vtanh.pop %v2428
        %v2443 = vxor.u32 %v2429, 2147483648
        %v2444 = vmul.f32 %v2443, 1.442695
        %v2445 = vpow.pop %v2444
        %v2446 = vadd.f32 %v2445, 1.0
        %v2447 = vrcp.pop %v2446
        %v2448 = vmul.f32 1.0, %v2447
        %v2449 = vmul.f32 %v2441, %v2212
        %v2450 = vmul.f32 %v2435, %v2442
        %v2451 = vadd.f32 %v2449, %v2450
        %v2452 = vtanh.pop %v2451
        %v2453 = vmul.f32 %v2448, %v2452
        %2454 = vst [vmem:[#allocation2 + $0x20] sm:$0xff] %v2453
        %v2455 = vld [vmem:[#allocation3 + $0xa0] sm:$0xff]
        %v2456 = vld [vmem:[#allocation3 + $0xa8] sm:$0xff]
        %v2457 = vld [vmem:[#allocation3 + $0xb0] sm:$0xff]
        %v2458 = vld [vmem:[#allocation3 + $0xb8] sm:$0xff]
        %v2459 = vld [vmem:[%s363] sm:$0xff]
        %v2460 = vld [vmem:[%s363 + $0x8] sm:$0xff]
        %v2461 = vld [vmem:[%s363 + $0x10] sm:$0xff]
        %v2462 = vld [vmem:[%s363 + $0x18] sm:$0xff]
        %v2463 = vld [vmem:[%s363 + $0x20] sm:$0xff]
        %v2464 = vld [vmem:[%s363 + $0x28] sm:$0xff]
        %v2465 = vld [vmem:[%s363 + $0x30] sm:$0xff]
        %v2466 = vld [vmem:[%s363 + $0x38] sm:$0xff]
        %v2467 = vld [vmem:[%s363 + $0x40] sm:$0xff]
        %v2468 = vld [vmem:[%s363 + $0x48] sm:$0xff]
        %v2469 = vld [vmem:[%s363 + $0x50] sm:$0xff]
        %v2470 = vld [vmem:[%s363 + $0x58] sm:$0xff]
        %v2471 = vld [vmem:[%s363 + $0x60] sm:$0xff]
        %v2472 = vld [vmem:[%s363 + $0x68] sm:$0xff]
        %v2473 = vld [vmem:[%s363 + $0x70] sm:$0xff]
        %v2474 = vld [vmem:[%s363 + $0x78] sm:$0xff]
        %v2475 = vld [vmem:[%s363 + $0x80] sm:$0xff]
        %v2476 = vld [vmem:[%s363 + $0x88] sm:$0xff]
        %v2477 = vld [vmem:[%s363 + $0x90] sm:$0xff]
        %v2478 = vld [vmem:[%s363 + $0x98] sm:$0xff]
        %v2479 = vld [vmem:[%s363 + $0xa0] sm:$0xff]
        %v2480 = vld [vmem:[%s363 + $0xa8] sm:$0xff]
        %v2481 = vld [vmem:[%s363 + $0xb0] sm:$0xff]
        %v2482 = vld [vmem:[%s363 + $0xb8] sm:$0xff]
        %v2483 = vld [vmem:[%s363 + $0xc0] sm:$0xff]
        %v2484 = vld [vmem:[%s363 + $0xc8] sm:$0xff]
        %v2485 = vld [vmem:[%s363 + $0xd0] sm:$0xff]
        %v2486 = vld [vmem:[%s363 + $0xd8] sm:$0xff]
        %v2487 = vld [vmem:[%s363 + $0xe0] sm:$0xff]
        %v2488 = vld [vmem:[%s363 + $0xe8] sm:$0xff]
        %v2489 = vld [vmem:[%s363 + $0xf0] sm:$0xff]
        %v2490 = vld [vmem:[%s363 + $0xf8] sm:$0xff]
        %v2491 = vld [vmem:[%s363 + $0x100] sm:$0xff]
        %v2492 = vld [vmem:[%s363 + $0x108] sm:$0xff]
        %v2493 = vld [vmem:[%s363 + $0x110] sm:$0xff]
        %v2494 = vld [vmem:[%s363 + $0x118] sm:$0xff]
        %v2495 = vld [vmem:[%s363 + $0x120] sm:$0xff]
        %v2496 = vld [vmem:[%s363 + $0x128] sm:$0xff]
        %v2497 = vld [vmem:[%s363 + $0x130] sm:$0xff]
        %v2498 = vld [vmem:[%s363 + $0x138] sm:$0xff]
        %v2499 = vld [vmem:[%s363 + $0x140] sm:$0xff]
        %v2500 = vld [vmem:[%s363 + $0x148] sm:$0xff]
        %v2501 = vld [vmem:[%s363 + $0x150] sm:$0xff]
        %v2502 = vld [vmem:[%s363 + $0x158] sm:$0xff]
        %v2503 = vld [vmem:[%s363 + $0x160] sm:$0xff]
        %v2504 = vld [vmem:[%s363 + $0x168] sm:$0xff]
        %v2505 = vld [vmem:[%s363 + $0x170] sm:$0xff]
        %v2506 = vld [vmem:[%s363 + $0x178] sm:$0xff]
        %v2507 = vld [vmem:[%s363 + $0x180] sm:$0xff]
        %v2508 = vld [vmem:[%s363 + $0x188] sm:$0xff]
        %v2509 = vld [vmem:[%s363 + $0x190] sm:$0xff]
        %v2510 = vld [vmem:[%s363 + $0x198] sm:$0xff]
        %v2511 = vld [vmem:[%s363 + $0x1a0] sm:$0xff]
        %v2512 = vld [vmem:[%s363 + $0x1a8] sm:$0xff]
        %v2513 = vld [vmem:[%s363 + $0x1b0] sm:$0xff]
        %v2514 = vld [vmem:[%s363 + $0x1b8] sm:$0xff]
        %v2515 = vld [vmem:[%s363 + $0x1c0] sm:$0xff]
        %v2516 = vld [vmem:[%s363 + $0x1c8] sm:$0xff]
        %v2517 = vld [vmem:[%s363 + $0x1d0] sm:$0xff]
        %v2518 = vld [vmem:[%s363 + $0x1d8] sm:$0xff]
        %v2519 = vld [vmem:[%s363 + $0x1e0] sm:$0xff]
        %v2520 = vld [vmem:[%s363 + $0x1e8] sm:$0xff]
        %v2521 = vld [vmem:[%s363 + $0x1f0] sm:$0xff]
        %v2522 = vld [vmem:[%s363 + $0x1f8] sm:$0xff]
        %2523 = vmatprep.subr.mxu0 %v2520
        %2524 = vmatpush1.msra.mxu0 %v2519
        %2525 = vmatprep.subr.mxu0 %v2516
        %2526 = vmatpush1.msra.mxu0 %v2515
        %2527 = vmatprep.subr.mxu0 %v2512
        %2528 = vmatpush1.msra.mxu0 %v2511
        %2529 = vmatprep.subr.mxu0 %v2508
        %2530 = vmatpush1.msra.mxu0 %v2507
        %2531 = vmatprep.subr.mxu0 %v2504
        %2532 = vmatpush1.msra.mxu0 %v2503
        %2533 = vmatprep.subr.mxu0 %v2500
        %2534 = vmatpush1.msra.mxu0 %v2499
        %2535 = vmatprep.subr.mxu0 %v2496
        %2536 = vmatpush1.msra.mxu0 %v2495
        %2537 = vmatprep.subr.mxu0 %v2492
        %2538 = vmatpush1.msra.mxu0 %v2491
        %2539 = vmatprep.subr.mxu0 %v2488
        %2540 = vmatpush1.msra.mxu0 %v2487
        %2541 = vmatprep.subr.mxu0 %v2484
        %2542 = vmatpush1.msra.mxu0 %v2483
        %2543 = vmatprep.subr.mxu0 %v2480
        %2544 = vmatpush1.msra.mxu0 %v2479
        %2545 = vmatprep.subr.mxu0 %v2476
        %2546 = vmatpush1.msra.mxu0 %v2475
        %2547 = vmatprep.subr.mxu0 %v2472
        %2548 = vmatpush1.msra.mxu0 %v2471
        %2549 = vmatprep.subr.mxu0 %v2468
        %2550 = vmatpush1.msra.mxu0 %v2467
        %2551 = vmatprep.subr.mxu0 %v2464
        %2552 = vmatpush1.msra.mxu0 %v2463
        %2553 = vmatprep.subr.mxu0 %v2460
        %2554 = vmatpush1.msra.mxu0 %v2459
        %2555 = vmatprep.subr.mxu0 0.0
        %2556 = vmatpush2.msra.mxu0 0.0
        %2557 = vmatprep.subr.mxu0 0.0
        %2558 = vmatpush2.msra.mxu0 0.0
        %2559 = vmatprep.subr.mxu0 0.0
        %2560 = vmatpush2.msra.mxu0 0.0
        %2561 = vmatprep.subr.mxu0 0.0
        %2562 = vmatpush2.msra.mxu0 0.0
        %2563 = vmatprep.subr.mxu0 0.0
        %2564 = vmatpush2.msra.mxu0 0.0
        %2565 = vmatprep.subr.mxu0 0.0
        %2566 = vmatpush2.msra.mxu0 0.0
        %2567 = vmatprep.subr.mxu0 0.0
        %2568 = vmatpush2.msra.mxu0 0.0
        %2569 = vmatprep.subr.mxu0 0.0
        %2570 = vmatpush2.msra.mxu0 0.0
        %2571 = vmatprep.subr.mxu0 0.0
        %2572 = vmatpush2.msra.mxu0 0.0
        %2573 = vmatprep.subr.mxu0 0.0
        %2574 = vmatpush2.msra.mxu0 0.0
        %2575 = vmatprep.subr.mxu0 0.0
        %2576 = vmatpush2.msra.mxu0 0.0
        %2577 = vmatprep.subr.mxu0 0.0
        %2578 = vmatpush2.msra.mxu0 0.0
        %2579 = vmatprep.subr.mxu0 0.0
        %2580 = vmatpush2.msra.mxu0 0.0
        %2581 = vmatprep.subr.mxu0 0.0
        %2582 = vmatpush2.msra.mxu0 0.0
        %2583 = vmatprep.subr.mxu0 0.0
        %2584 = vmatpush2.msra.mxu0 0.0
        %2585 = vmatprep.subr.mxu0 0.0
        %2586 = vmatpush2.msra.mxu0 0.0
        %2587 = vmatprep.mubr.f32.mxu0 0.0
        %2588 = vmatmul.mubr.f32.gmra.mxu0 %v2453
        %v2589 = vpop.f32.mrf.mxu0
        %v2590 = vadd.f32 0.0, %v2589
        %v2591 = vpop.f32.mrf.mxu0
        %v2592 = vadd.f32 0.0, %v2591
        %2593 = vdwg.mxu0
        %2594 = vmatprep.subr.mxu0 %v2522
        %2595 = vmatpush1.msra.mxu0 %v2521
        %2596 = vmatprep.subr.mxu0 %v2518
        %2597 = vmatpush1.msra.mxu0 %v2517
        %2598 = vmatprep.subr.mxu0 %v2514
        %2599 = vmatpush1.msra.mxu0 %v2513
        %2600 = vmatprep.subr.mxu0 %v2510
        %2601 = vmatpush1.msra.mxu0 %v2509
        %2602 = vmatprep.subr.mxu0 %v2506
        %2603 = vmatpush1.msra.mxu0 %v2505
        %2604 = vmatprep.subr.mxu0 %v2502
        %2605 = vmatpush1.msra.mxu0 %v2501
        %2606 = vmatprep.subr.mxu0 %v2498
        %2607 = vmatpush1.msra.mxu0 %v2497
        %2608 = vmatprep.subr.mxu0 %v2494
        %2609 = vmatpush1.msra.mxu0 %v2493
        %2610 = vmatprep.subr.mxu0 %v2490
        %2611 = vmatpush1.msra.mxu0 %v2489
        %2612 = vmatprep.subr.mxu0 %v2486
        %2613 = vmatpush1.msra.mxu0 %v2485
        %2614 = vmatprep.subr.mxu0 %v2482
        %2615 = vmatpush1.msra.mxu0 %v2481
        %2616 = vmatprep.subr.mxu0 %v2478
        %2617 = vmatpush1.msra.mxu0 %v2477
        %2618 = vmatprep.subr.mxu0 %v2474
        %2619 = vmatpush1.msra.mxu0 %v2473
        %2620 = vmatprep.subr.mxu0 %v2470
        %2621 = vmatpush1.msra.mxu0 %v2469
        %2622 = vmatprep.subr.mxu0 %v2466
        %2623 = vmatpush1.msra.mxu0 %v2465
        %2624 = vmatprep.subr.mxu0 %v2462
        %2625 = vmatpush1.msra.mxu0 %v2461
        %2626 = vmatprep.subr.mxu0 0.0
        %2627 = vmatpush2.msra.mxu0 0.0
        %2628 = vmatprep.subr.mxu0 0.0
        %2629 = vmatpush2.msra.mxu0 0.0
        %2630 = vmatprep.subr.mxu0 0.0
        %2631 = vmatpush2.msra.mxu0 0.0
        %2632 = vmatprep.subr.mxu0 0.0
        %2633 = vmatpush2.msra.mxu0 0.0
        %2634 = vmatprep.subr.mxu0 0.0
        %2635 = vmatpush2.msra.mxu0 0.0
        %2636 = vmatprep.subr.mxu0 0.0
        %2637 = vmatpush2.msra.mxu0 0.0
        %2638 = vmatprep.subr.mxu0 0.0
        %2639 = vmatpush2.msra.mxu0 0.0
        %2640 = vmatprep.subr.mxu0 0.0
        %2641 = vmatpush2.msra.mxu0 0.0
        %2642 = vmatprep.subr.mxu0 0.0
        %2643 = vmatpush2.msra.mxu0 0.0
        %2644 = vmatprep.subr.mxu0 0.0
        %2645 = vmatpush2.msra.mxu0 0.0
        %2646 = vmatprep.subr.mxu0 0.0
        %2647 = vmatpush2.msra.mxu0 0.0
        %2648 = vmatprep.subr.mxu0 0.0
        %2649 = vmatpush2.msra.mxu0 0.0
        %2650 = vmatprep.subr.mxu0 0.0
        %2651 = vmatpush2.msra.mxu0 0.0
        %2652 = vmatprep.subr.mxu0 0.0
        %2653 = vmatpush2.msra.mxu0 0.0
        %2654 = vmatprep.subr.mxu0 0.0
        %2655 = vmatpush2.msra.mxu0 0.0
        %2656 = vmatprep.subr.mxu0 0.0
        %2657 = vmatpush2.msra.mxu0 0.0
        %2658 = vmatprep.mubr.f32.mxu0 0.0
        %2659 = vmatmul.mubr.f32.gmra.mxu0 %v2453
        %v2660 = vpop.f32.mrf.mxu0
        %v2661 = vadd.f32 0.0, %v2660
        %v2662 = vpop.f32.mrf.mxu0
        %v2663 = vadd.f32 0.0, %v2662
        %2664 = vdwg.mxu0
        %v2665 = vadd.f32 %v2455, %v2590
        %v2666 = vadd.f32 %v2456, %v2592
        %v2667 = vadd.f32 %v2457, %v2661
        %v2668 = vadd.f32 %v2458, %v2663
        %v2669 = vxor.u32 %v2665, 2147483648
        %v2670 = vmul.f32 %v2669, 1.442695
        %v2671 = vpow.pop %v2670
        %v2672 = vadd.f32 %v2671, 1.0
        %v2673 = vrcp.pop %v2672
        %v2674 = vmul.f32 1.0, %v2673
        %v2675 = vxor.u32 %v2666, 2147483648
        %v2676 = vmul.f32 %v2675, 1.442695
        %v2677 = vpow.pop %v2676
        %v2678 = vadd.f32 %v2677, 1.0
        %v2679 = vrcp.pop %v2678
        %v2680 = vmul.f32 1.0, %v2679
        %v2681 = vtanh.pop %v2667
        %v2682 = vxor.u32 %v2668, 2147483648
        %v2683 = vmul.f32 %v2682, 1.442695
        %v2684 = vpow.pop %v2683
        %v2685 = vadd.f32 %v2684, 1.0
        %v2686 = vrcp.pop %v2685
        %v2687 = vmul.f32 1.0, %v2686
        %v2688 = vmul.f32 %v2680, %v2451
        %v2689 = vmul.f32 %v2674, %v2681
        %v2690 = vadd.f32 %v2688, %v2689
        %v2691 = vtanh.pop %v2690
        %v2692 = vmul.f32 %v2687, %v2691
        %2693 = vst [vmem:[#allocation2 + $0x28] sm:$0xff] %v2692
        %v2694 = vld [vmem:[#allocation3 + $0xc0] sm:$0xff]
        %v2695 = vld [vmem:[#allocation3 + $0xc8] sm:$0xff]
        %v2696 = vld [vmem:[#allocation3 + $0xd0] sm:$0xff]
        %v2697 = vld [vmem:[#allocation3 + $0xd8] sm:$0xff]
        %v2698 = vld [vmem:[%s363] sm:$0xff]
        %v2699 = vld [vmem:[%s363 + $0x8] sm:$0xff]
        %v2700 = vld [vmem:[%s363 + $0x10] sm:$0xff]
        %v2701 = vld [vmem:[%s363 + $0x18] sm:$0xff]
        %v2702 = vld [vmem:[%s363 + $0x20] sm:$0xff]
        %v2703 = vld [vmem:[%s363 + $0x28] sm:$0xff]
        %v2704 = vld [vmem:[%s363 + $0x30] sm:$0xff]
        %v2705 = vld [vmem:[%s363 + $0x38] sm:$0xff]
        %v2706 = vld [vmem:[%s363 + $0x40] sm:$0xff]
        %v2707 = vld [vmem:[%s363 + $0x48] sm:$0xff]
        %v2708 = vld [vmem:[%s363 + $0x50] sm:$0xff]
        %v2709 = vld [vmem:[%s363 + $0x58] sm:$0xff]
        %v2710 = vld [vmem:[%s363 + $0x60] sm:$0xff]
        %v2711 = vld [vmem:[%s363 + $0x68] sm:$0xff]
        %v2712 = vld [vmem:[%s363 + $0x70] sm:$0xff]
        %v2713 = vld [vmem:[%s363 + $0x78] sm:$0xff]
        %v2714 = vld [vmem:[%s363 + $0x80] sm:$0xff]
        %v2715 = vld [vmem:[%s363 + $0x88] sm:$0xff]
        %v2716 = vld [vmem:[%s363 + $0x90] sm:$0xff]
        %v2717 = vld [vmem:[%s363 + $0x98] sm:$0xff]
        %v2718 = vld [vmem:[%s363 + $0xa0] sm:$0xff]
        %v2719 = vld [vmem:[%s363 + $0xa8] sm:$0xff]
        %v2720 = vld [vmem:[%s363 + $0xb0] sm:$0xff]
        %v2721 = vld [vmem:[%s363 + $0xb8] sm:$0xff]
        %v2722 = vld [vmem:[%s363 + $0xc0] sm:$0xff]
        %v2723 = vld [vmem:[%s363 + $0xc8] sm:$0xff]
        %v2724 = vld [vmem:[%s363 + $0xd0] sm:$0xff]
        %v2725 = vld [vmem:[%s363 + $0xd8] sm:$0xff]
        %v2726 = vld [vmem:[%s363 + $0xe0] sm:$0xff]
        %v2727 = vld [vmem:[%s363 + $0xe8] sm:$0xff]
        %v2728 = vld [vmem:[%s363 + $0xf0] sm:$0xff]
        %v2729 = vld [vmem:[%s363 + $0xf8] sm:$0xff]
        %v2730 = vld [vmem:[%s363 + $0x100] sm:$0xff]
        %v2731 = vld [vmem:[%s363 + $0x108] sm:$0xff]
        %v2732 = vld [vmem:[%s363 + $0x110] sm:$0xff]
        %v2733 = vld [vmem:[%s363 + $0x118] sm:$0xff]
        %v2734 = vld [vmem:[%s363 + $0x120] sm:$0xff]
        %v2735 = vld [vmem:[%s363 + $0x128] sm:$0xff]
        %v2736 = vld [vmem:[%s363 + $0x130] sm:$0xff]
        %v2737 = vld [vmem:[%s363 + $0x138] sm:$0xff]
        %v2738 = vld [vmem:[%s363 + $0x140] sm:$0xff]
        %v2739 = vld [vmem:[%s363 + $0x148] sm:$0xff]
        %v2740 = vld [vmem:[%s363 + $0x150] sm:$0xff]
        %v2741 = vld [vmem:[%s363 + $0x158] sm:$0xff]
        %v2742 = vld [vmem:[%s363 + $0x160] sm:$0xff]
        %v2743 = vld [vmem:[%s363 + $0x168] sm:$0xff]
        %v2744 = vld [vmem:[%s363 + $0x170] sm:$0xff]
        %v2745 = vld [vmem:[%s363 + $0x178] sm:$0xff]
        %v2746 = vld [vmem:[%s363 + $0x180] sm:$0xff]
        %v2747 = vld [vmem:[%s363 + $0x188] sm:$0xff]
        %v2748 = vld [vmem:[%s363 + $0x190] sm:$0xff]
        %v2749 = vld [vmem:[%s363 + $0x198] sm:$0xff]
        %v2750 = vld [vmem:[%s363 + $0x1a0] sm:$0xff]
        %v2751 = vld [vmem:[%s363 + $0x1a8] sm:$0xff]
        %v2752 = vld [vmem:[%s363 + $0x1b0] sm:$0xff]
        %v2753 = vld [vmem:[%s363 + $0x1b8] sm:$0xff]
        %v2754 = vld [vmem:[%s363 + $0x1c0] sm:$0xff]
        %v2755 = vld [vmem:[%s363 + $0x1c8] sm:$0xff]
        %v2756 = vld [vmem:[%s363 + $0x1d0] sm:$0xff]
        %v2757 = vld [vmem:[%s363 + $0x1d8] sm:$0xff]
        %v2758 = vld [vmem:[%s363 + $0x1e0] sm:$0xff]
        %v2759 = vld [vmem:[%s363 + $0x1e8] sm:$0xff]
        %v2760 = vld [vmem:[%s363 + $0x1f0] sm:$0xff]
        %v2761 = vld [vmem:[%s363 + $0x1f8] sm:$0xff]
        %2762 = vmatprep.subr.mxu0 %v2759
        %2763 = vmatpush1.msra.mxu0 %v2758
        %2764 = vmatprep.subr.mxu0 %v2755
        %2765 = vmatpush1.msra.mxu0 %v2754
        %2766 = vmatprep.subr.mxu0 %v2751
        %2767 = vmatpush1.msra.mxu0 %v2750
        %2768 = vmatprep.subr.mxu0 %v2747
        %2769 = vmatpush1.msra.mxu0 %v2746
        %2770 = vmatprep.subr.mxu0 %v2743
        %2771 = vmatpush1.msra.mxu0 %v2742
        %2772 = vmatprep.subr.mxu0 %v2739
        %2773 = vmatpush1.msra.mxu0 %v2738
        %2774 = vmatprep.subr.mxu0 %v2735
        %2775 = vmatpush1.msra.mxu0 %v2734
        %2776 = vmatprep.subr.mxu0 %v2731
        %2777 = vmatpush1.msra.mxu0 %v2730
        %2778 = vmatprep.subr.mxu0 %v2727
        %2779 = vmatpush1.msra.mxu0 %v2726
        %2780 = vmatprep.subr.mxu0 %v2723
        %2781 = vmatpush1.msra.mxu0 %v2722
        %2782 = vmatprep.subr.mxu0 %v2719
        %2783 = vmatpush1.msra.mxu0 %v2718
        %2784 = vmatprep.subr.mxu0 %v2715
        %2785 = vmatpush1.msra.mxu0 %v2714
        %2786 = vmatprep.subr.mxu0 %v2711
        %2787 = vmatpush1.msra.mxu0 %v2710
        %2788 = vmatprep.subr.mxu0 %v2707
        %2789 = vmatpush1.msra.mxu0 %v2706
        %2790 = vmatprep.subr.mxu0 %v2703
        %2791 = vmatpush1.msra.mxu0 %v2702
        %2792 = vmatprep.subr.mxu0 %v2699
        %2793 = vmatpush1.msra.mxu0 %v2698
        %2794 = vmatprep.subr.mxu0 0.0
        %2795 = vmatpush2.msra.mxu0 0.0
        %2796 = vmatprep.subr.mxu0 0.0
        %2797 = vmatpush2.msra.mxu0 0.0
        %2798 = vmatprep.subr.mxu0 0.0
        %2799 = vmatpush2.msra.mxu0 0.0
        %2800 = vmatprep.subr.mxu0 0.0
        %2801 = vmatpush2.msra.mxu0 0.0
        %2802 = vmatprep.subr.mxu0 0.0
        %2803 = vmatpush2.msra.mxu0 0.0
        %2804 = vmatprep.subr.mxu0 0.0
        %2805 = vmatpush2.msra.mxu0 0.0
        %2806 = vmatprep.subr.mxu0 0.0
        %2807 = vmatpush2.msra.mxu0 0.0
        %2808 = vmatprep.subr.mxu0 0.0
        %2809 = vmatpush2.msra.mxu0 0.0
        %2810 = vmatprep.subr.mxu0 0.0
        %2811 = vmatpush2.msra.mxu0 0.0
        %2812 = vmatprep.subr.mxu0 0.0
        %2813 = vmatpush2.msra.mxu0 0.0
        %2814 = vmatprep.subr.mxu0 0.0
        %2815 = vmatpush2.msra.mxu0 0.0
        %2816 = vmatprep.subr.mxu0 0.0
        %2817 = vmatpush2.msra.mxu0 0.0
        %2818 = vmatprep.subr.mxu0 0.0
        %2819 = vmatpush2.msra.mxu0 0.0
        %2820 = vmatprep.subr.mxu0 0.0
        %2821 = vmatpush2.msra.mxu0 0.0
        %2822 = vmatprep.subr.mxu0 0.0
        %2823 = vmatpush2.msra.mxu0 0.0
        %2824 = vmatprep.subr.mxu0 0.0
        %2825 = vmatpush2.msra.mxu0 0.0
        %2826 = vmatprep.mubr.f32.mxu0 0.0
        %2827 = vmatmul.mubr.f32.gmra.mxu0 %v2692
        %v2828 = vpop.f32.mrf.mxu0
        %v2829 = vadd.f32 0.0, %v2828
        %v2830 = vpop.f32.mrf.mxu0
        %v2831 = vadd.f32 0.0, %v2830
        %2832 = vdwg.mxu0
        %2833 = vmatprep.subr.mxu0 %v2761
        %2834 = vmatpush1.msra.mxu0 %v2760
        %2835 = vmatprep.subr.mxu0 %v2757
        %2836 = vmatpush1.msra.mxu0 %v2756
        %2837 = vmatprep.subr.mxu0 %v2753
        %2838 = vmatpush1.msra.mxu0 %v2752
        %2839 = vmatprep.subr.mxu0 %v2749
        %2840 = vmatpush1.msra.mxu0 %v2748
        %2841 = vmatprep.subr.mxu0 %v2745
        %2842 = vmatpush1.msra.mxu0 %v2744
        %2843 = vmatprep.subr.mxu0 %v2741
        %2844 = vmatpush1.msra.mxu0 %v2740
        %2845 = vmatprep.subr.mxu0 %v2737
        %2846 = vmatpush1.msra.mxu0 %v2736
        %2847 = vmatprep.subr.mxu0 %v2733
        %2848 = vmatpush1.msra.mxu0 %v2732
        %2849 = vmatprep.subr.mxu0 %v2729
        %2850 = vmatpush1.msra.mxu0 %v2728
        %2851 = vmatprep.subr.mxu0 %v2725
        %2852 = vmatpush1.msra.mxu0 %v2724
        %2853 = vmatprep.subr.mxu0 %v2721
        %2854 = vmatpush1.msra.mxu0 %v2720
        %2855 = vmatprep.subr.mxu0 %v2717
        %2856 = vmatpush1.msra.mxu0 %v2716
        %2857 = vmatprep.subr.mxu0 %v2713
        %2858 = vmatpush1.msra.mxu0 %v2712
        %2859 = vmatprep.subr.mxu0 %v2709
        %2860 = vmatpush1.msra.mxu0 %v2708
        %2861 = vmatprep.subr.mxu0 %v2705
        %2862 = vmatpush1.msra.mxu0 %v2704
        %2863 = vmatprep.subr.mxu0 %v2701
        %2864 = vmatpush1.msra.mxu0 %v2700
        %2865 = vmatprep.subr.mxu0 0.0
        %2866 = vmatpush2.msra.mxu0 0.0
        %2867 = vmatprep.subr.mxu0 0.0
        %2868 = vmatpush2.msra.mxu0 0.0
        %2869 = vmatprep.subr.mxu0 0.0
        %2870 = vmatpush2.msra.mxu0 0.0
        %2871 = vmatprep.subr.mxu0 0.0
        %2872 = vmatpush2.msra.mxu0 0.0
        %2873 = vmatprep.subr.mxu0 0.0
        %2874 = vmatpush2.msra.mxu0 0.0
        %2875 = vmatprep.subr.mxu0 0.0
        %2876 = vmatpush2.msra.mxu0 0.0
        %2877 = vmatprep.subr.mxu0 0.0
        %2878 = vmatpush2.msra.mxu0 0.0
        %2879 = vmatprep.subr.mxu0 0.0
        %2880 = vmatpush2.msra.mxu0 0.0
        %2881 = vmatprep.subr.mxu0 0.0
        %2882 = vmatpush2.msra.mxu0 0.0
        %2883 = vmatprep.subr.mxu0 0.0
        %2884 = vmatpush2.msra.mxu0 0.0
        %2885 = vmatprep.subr.mxu0 0.0
        %2886 = vmatpush2.msra.mxu0 0.0
        %2887 = vmatprep.subr.mxu0 0.0
        %2888 = vmatpush2.msra.mxu0 0.0
        %2889 = vmatprep.subr.mxu0 0.0
        %2890 = vmatpush2.msra.mxu0 0.0
        %2891 = vmatprep.subr.mxu0 0.0
        %2892 = vmatpush2.msra.mxu0 0.0
        %2893 = vmatprep.subr.mxu0 0.0
        %2894 = vmatpush2.msra.mxu0 0.0
        %2895 = vmatprep.subr.mxu0 0.0
        %2896 = vmatpush2.msra.mxu0 0.0
        %2897 = vmatprep.mubr.f32.mxu0 0.0
        %2898 = vmatmul.mubr.f32.gmra.mxu0 %v2692
        %v2899 = vpop.f32.mrf.mxu0
        %v2900 = vadd.f32 0.0, %v2899
        %v2901 = vpop.f32.mrf.mxu0
        %v2902 = vadd.f32 0.0, %v2901
        %2903 = vdwg.mxu0
        %v2904 = vadd.f32 %v2694, %v2829
        %v2905 = vadd.f32 %v2695, %v2831
        %v2906 = vadd.f32 %v2696, %v2900
        %v2907 = vadd.f32 %v2697, %v2902
        %v2908 = vxor.u32 %v2904, 2147483648
        %v2909 = vmul.f32 %v2908, 1.442695
        %v2910 = vpow.pop %v2909
        %v2911 = vadd.f32 %v2910, 1.0
        %v2912 = vrcp.pop %v2911
        %v2913 = vmul.f32 1.0, %v2912
        %v2914 = vxor.u32 %v2905, 2147483648
        %v2915 = vmul.f32 %v2914, 1.442695
        %v2916 = vpow.pop %v2915
        %v2917 = vadd.f32 %v2916, 1.0
        %v2918 = vrcp.pop %v2917
        %v2919 = vmul.f32 1.0, %v2918
        %v2920 = vtanh.pop %v2906
        %v2921 = vxor.u32 %v2907, 2147483648
        %v2922 = vmul.f32 %v2921, 1.442695
        %v2923 = vpow.pop %v2922
        %v2924 = vadd.f32 %v2923, 1.0
        %v2925 = vrcp.pop %v2924
        %v2926 = vmul.f32 1.0, %v2925
        %v2927 = vmul.f32 %v2919, %v2690
        %v2928 = vmul.f32 %v2913, %v2920
        %v2929 = vadd.f32 %v2927, %v2928
        %v2930 = vtanh.pop %v2929
        %v2931 = vmul.f32 %v2926, %v2930
        %2932 = vst [vmem:[#allocation2 + $0x30] sm:$0xff] %v2931
        %v2933 = vld [vmem:[#allocation3 + $0xe0] sm:$0xff]
        %v2934 = vld [vmem:[#allocation3 + $0xe8] sm:$0xff]
        %v2935 = vld [vmem:[#allocation3 + $0xf0] sm:$0xff]
        %v2936 = vld [vmem:[#allocation3 + $0xf8] sm:$0xff]
        %v2937 = vld [vmem:[%s363] sm:$0xff]
        %v2938 = vld [vmem:[%s363 + $0x8] sm:$0xff]
        %v2939 = vld [vmem:[%s363 + $0x10] sm:$0xff]
        %v2940 = vld [vmem:[%s363 + $0x18] sm:$0xff]
        %v2941 = vld [vmem:[%s363 + $0x20] sm:$0xff]
        %v2942 = vld [vmem:[%s363 + $0x28] sm:$0xff]
        %v2943 = vld [vmem:[%s363 + $0x30] sm:$0xff]
        %v2944 = vld [vmem:[%s363 + $0x38] sm:$0xff]
        %v2945 = vld [vmem:[%s363 + $0x40] sm:$0xff]
        %v2946 = vld [vmem:[%s363 + $0x48] sm:$0xff]
        %v2947 = vld [vmem:[%s363 + $0x50] sm:$0xff]
        %v2948 = vld [vmem:[%s363 + $0x58] sm:$0xff]
        %v2949 = vld [vmem:[%s363 + $0x60] sm:$0xff]
        %v2950 = vld [vmem:[%s363 + $0x68] sm:$0xff]
        %v2951 = vld [vmem:[%s363 + $0x70] sm:$0xff]
        %v2952 = vld [vmem:[%s363 + $0x78] sm:$0xff]
        %v2953 = vld [vmem:[%s363 + $0x80] sm:$0xff]
        %v2954 = vld [vmem:[%s363 + $0x88] sm:$0xff]
        %v2955 = vld [vmem:[%s363 + $0x90] sm:$0xff]
        %v2956 = vld [vmem:[%s363 + $0x98] sm:$0xff]
        %v2957 = vld [vmem:[%s363 + $0xa0] sm:$0xff]
        %v2958 = vld [vmem:[%s363 + $0xa8] sm:$0xff]
        %v2959 = vld [vmem:[%s363 + $0xb0] sm:$0xff]
        %v2960 = vld [vmem:[%s363 + $0xb8] sm:$0xff]
        %v2961 = vld [vmem:[%s363 + $0xc0] sm:$0xff]
        %v2962 = vld [vmem:[%s363 + $0xc8] sm:$0xff]
        %v2963 = vld [vmem:[%s363 + $0xd0] sm:$0xff]
        %v2964 = vld [vmem:[%s363 + $0xd8] sm:$0xff]
        %v2965 = vld [vmem:[%s363 + $0xe0] sm:$0xff]
        %v2966 = vld [vmem:[%s363 + $0xe8] sm:$0xff]
        %v2967 = vld [vmem:[%s363 + $0xf0] sm:$0xff]
        %v2968 = vld [vmem:[%s363 + $0xf8] sm:$0xff]
        %v2969 = vld [vmem:[%s363 + $0x100] sm:$0xff]
        %v2970 = vld [vmem:[%s363 + $0x108] sm:$0xff]
        %v2971 = vld [vmem:[%s363 + $0x110] sm:$0xff]
        %v2972 = vld [vmem:[%s363 + $0x118] sm:$0xff]
        %v2973 = vld [vmem:[%s363 + $0x120] sm:$0xff]
        %v2974 = vld [vmem:[%s363 + $0x128] sm:$0xff]
        %v2975 = vld [vmem:[%s363 + $0x130] sm:$0xff]
        %v2976 = vld [vmem:[%s363 + $0x138] sm:$0xff]
        %v2977 = vld [vmem:[%s363 + $0x140] sm:$0xff]
        %v2978 = vld [vmem:[%s363 + $0x148] sm:$0xff]
        %v2979 = vld [vmem:[%s363 + $0x150] sm:$0xff]
        %v2980 = vld [vmem:[%s363 + $0x158] sm:$0xff]
        %v2981 = vld [vmem:[%s363 + $0x160] sm:$0xff]
        %v2982 = vld [vmem:[%s363 + $0x168] sm:$0xff]
        %v2983 = vld [vmem:[%s363 + $0x170] sm:$0xff]
        %v2984 = vld [vmem:[%s363 + $0x178] sm:$0xff]
        %v2985 = vld [vmem:[%s363 + $0x180] sm:$0xff]
        %v2986 = vld [vmem:[%s363 + $0x188] sm:$0xff]
        %v2987 = vld [vmem:[%s363 + $0x190] sm:$0xff]
        %v2988 = vld [vmem:[%s363 + $0x198] sm:$0xff]
        %v2989 = vld [vmem:[%s363 + $0x1a0] sm:$0xff]
        %v2990 = vld [vmem:[%s363 + $0x1a8] sm:$0xff]
        %v2991 = vld [vmem:[%s363 + $0x1b0] sm:$0xff]
        %v2992 = vld [vmem:[%s363 + $0x1b8] sm:$0xff]
        %v2993 = vld [vmem:[%s363 + $0x1c0] sm:$0xff]
        %v2994 = vld [vmem:[%s363 + $0x1c8] sm:$0xff]
        %v2995 = vld [vmem:[%s363 + $0x1d0] sm:$0xff]
        %v2996 = vld [vmem:[%s363 + $0x1d8] sm:$0xff]
        %v2997 = vld [vmem:[%s363 + $0x1e0] sm:$0xff]
        %v2998 = vld [vmem:[%s363 + $0x1e8] sm:$0xff]
        %v2999 = vld [vmem:[%s363 + $0x1f0] sm:$0xff]
        %v3000 = vld [vmem:[%s363 + $0x1f8] sm:$0xff]
        %3001 = vmatprep.subr.mxu0 %v2998
        %3002 = vmatpush1.msra.mxu0 %v2997
        %3003 = vmatprep.subr.mxu0 %v2994
        %3004 = vmatpush1.msra.mxu0 %v2993
        %3005 = vmatprep.subr.mxu0 %v2990
        %3006 = vmatpush1.msra.mxu0 %v2989
        %3007 = vmatprep.subr.mxu0 %v2986
        %3008 = vmatpush1.msra.mxu0 %v2985
        %3009 = vmatprep.subr.mxu0 %v2982
        %3010 = vmatpush1.msra.mxu0 %v2981
        %3011 = vmatprep.subr.mxu0 %v2978
        %3012 = vmatpush1.msra.mxu0 %v2977
        %3013 = vmatprep.subr.mxu0 %v2974
        %3014 = vmatpush1.msra.mxu0 %v2973
        %3015 = vmatprep.subr.mxu0 %v2970
        %3016 = vmatpush1.msra.mxu0 %v2969
        %3017 = vmatprep.subr.mxu0 %v2966
        %3018 = vmatpush1.msra.mxu0 %v2965
        %3019 = vmatprep.subr.mxu0 %v2962
        %3020 = vmatpush1.msra.mxu0 %v2961
        %3021 = vmatprep.subr.mxu0 %v2958
        %3022 = vmatpush1.msra.mxu0 %v2957
        %3023 = vmatprep.subr.mxu0 %v2954
        %3024 = vmatpush1.msra.mxu0 %v2953
        %3025 = vmatprep.subr.mxu0 %v2950
        %3026 = vmatpush1.msra.mxu0 %v2949
        %3027 = vmatprep.subr.mxu0 %v2946
        %3028 = vmatpush1.msra.mxu0 %v2945
        %3029 = vmatprep.subr.mxu0 %v2942
        %3030 = vmatpush1.msra.mxu0 %v2941
        %3031 = vmatprep.subr.mxu0 %v2938
        %3032 = vmatpush1.msra.mxu0 %v2937
        %3033 = vmatprep.subr.mxu0 0.0
        %3034 = vmatpush2.msra.mxu0 0.0
        %3035 = vmatprep.subr.mxu0 0.0
        %3036 = vmatpush2.msra.mxu0 0.0
        %3037 = vmatprep.subr.mxu0 0.0
        %3038 = vmatpush2.msra.mxu0 0.0
        %3039 = vmatprep.subr.mxu0 0.0
        %3040 = vmatpush2.msra.mxu0 0.0
        %3041 = vmatprep.subr.mxu0 0.0
        %3042 = vmatpush2.msra.mxu0 0.0
        %3043 = vmatprep.subr.mxu0 0.0
        %3044 = vmatpush2.msra.mxu0 0.0
        %3045 = vmatprep.subr.mxu0 0.0
        %3046 = vmatpush2.msra.mxu0 0.0
        %3047 = vmatprep.subr.mxu0 0.0
        %3048 = vmatpush2.msra.mxu0 0.0
        %3049 = vmatprep.subr.mxu0 0.0
        %3050 = vmatpush2.msra.mxu0 0.0
        %3051 = vmatprep.subr.mxu0 0.0
        %3052 = vmatpush2.msra.mxu0 0.0
        %3053 = vmatprep.subr.mxu0 0.0
        %3054 = vmatpush2.msra.mxu0 0.0
        %3055 = vmatprep.subr.mxu0 0.0
        %3056 = vmatpush2.msra.mxu0 0.0
        %3057 = vmatprep.subr.mxu0 0.0
        %3058 = vmatpush2.msra.mxu0 0.0
        %3059 = vmatprep.subr.mxu0 0.0
        %3060 = vmatpush2.msra.mxu0 0.0
        %3061 = vmatprep.subr.mxu0 0.0
        %3062 = vmatpush2.msra.mxu0 0.0
        %3063 = vmatprep.subr.mxu0 0.0
        %3064 = vmatpush2.msra.mxu0 0.0
        %3065 = vmatprep.mubr.f32.mxu0 0.0
        %3066 = vmatmul.mubr.f32.gmra.mxu0 %v2931
        %v3067 = vpop.f32.mrf.mxu0
        %v3068 = vadd.f32 0.0, %v3067
        %v3069 = vpop.f32.mrf.mxu0
        %v3070 = vadd.f32 0.0, %v3069
        %3071 = vdwg.mxu0
        %3072 = vmatprep.subr.mxu0 %v3000
        %3073 = vmatpush1.msra.mxu0 %v2999
        %3074 = vmatprep.subr.mxu0 %v2996
        %3075 = vmatpush1.msra.mxu0 %v2995
        %3076 = vmatprep.subr.mxu0 %v2992
        %3077 = vmatpush1.msra.mxu0 %v2991
        %3078 = vmatprep.subr.mxu0 %v2988
        %3079 = vmatpush1.msra.mxu0 %v2987
        %3080 = vmatprep.subr.mxu0 %v2984
        %3081 = vmatpush1.msra.mxu0 %v2983
        %3082 = vmatprep.subr.mxu0 %v2980
        %3083 = vmatpush1.msra.mxu0 %v2979
        %3084 = vmatprep.subr.mxu0 %v2976
        %3085 = vmatpush1.msra.mxu0 %v2975
        %3086 = vmatprep.subr.mxu0 %v2972
        %3087 = vmatpush1.msra.mxu0 %v2971
        %3088 = vmatprep.subr.mxu0 %v2968
        %3089 = vmatpush1.msra.mxu0 %v2967
        %3090 = vmatprep.subr.mxu0 %v2964
        %3091 = vmatpush1.msra.mxu0 %v2963
        %3092 = vmatprep.subr.mxu0 %v2960
        %3093 = vmatpush1.msra.mxu0 %v2959
        %3094 = vmatprep.subr.mxu0 %v2956
        %3095 = vmatpush1.msra.mxu0 %v2955
        %3096 = vmatprep.subr.mxu0 %v2952
        %3097 = vmatpush1.msra.mxu0 %v2951
        %3098 = vmatprep.subr.mxu0 %v2948
        %3099 = vmatpush1.msra.mxu0 %v2947
        %3100 = vmatprep.subr.mxu0 %v2944
        %3101 = vmatpush1.msra.mxu0 %v2943
        %3102 = vmatprep.subr.mxu0 %v2940
        %3103 = vmatpush1.msra.mxu0 %v2939
        %3104 = vmatprep.subr.mxu0 0.0
        %3105 = vmatpush2.msra.mxu0 0.0
        %3106 = vmatprep.subr.mxu0 0.0
        %3107 = vmatpush2.msra.mxu0 0.0
        %3108 = vmatprep.subr.mxu0 0.0
        %3109 = vmatpush2.msra.mxu0 0.0
        %3110 = vmatprep.subr.mxu0 0.0
        %3111 = vmatpush2.msra.mxu0 0.0
        %3112 = vmatprep.subr.mxu0 0.0
        %3113 = vmatpush2.msra.mxu0 0.0
        %3114 = vmatprep.subr.mxu0 0.0
        %3115 = vmatpush2.msra.mxu0 0.0
        %3116 = vmatprep.subr.mxu0 0.0
        %3117 = vmatpush2.msra.mxu0 0.0
        %3118 = vmatprep.subr.mxu0 0.0
        %3119 = vmatpush2.msra.mxu0 0.0
        %3120 = vmatprep.subr.mxu0 0.0
        %3121 = vmatpush2.msra.mxu0 0.0
        %3122 = vmatprep.subr.mxu0 0.0
        %3123 = vmatpush2.msra.mxu0 0.0
        %3124 = vmatprep.subr.mxu0 0.0
        %3125 = vmatpush2.msra.mxu0 0.0
        %3126 = vmatprep.subr.mxu0 0.0
        %3127 = vmatpush2.msra.mxu0 0.0
        %3128 = vmatprep.subr.mxu0 0.0
        %3129 = vmatpush2.msra.mxu0 0.0
        %3130 = vmatprep.subr.mxu0 0.0
        %3131 = vmatpush2.msra.mxu0 0.0
        %3132 = vmatprep.subr.mxu0 0.0
        %3133 = vmatpush2.msra.mxu0 0.0
        %3134 = vmatprep.subr.mxu0 0.0
        %3135 = vmatpush2.msra.mxu0 0.0
        %3136 = vmatprep.mubr.f32.mxu0 0.0
        %3137 = vmatmul.mubr.f32.gmra.mxu0 %v2931
        %v3138 = vpop.f32.mrf.mxu0
        %v3139 = vadd.f32 0.0, %v3138
        %v3140 = vpop.f32.mrf.mxu0
        %v3141 = vadd.f32 0.0, %v3140
        %3142 = vdwg.mxu0
        %v3143 = vadd.f32 %v2933, %v3068
        %v3144 = vadd.f32 %v2934, %v3070
        %v3145 = vadd.f32 %v2935, %v3139
        %v3146 = vadd.f32 %v2936, %v3141
        %v3147 = vxor.u32 %v3143, 2147483648
        %v3148 = vmul.f32 %v3147, 1.442695
        %v3149 = vpow.pop %v3148
        %v3150 = vadd.f32 %v3149, 1.0
        %v3151 = vrcp.pop %v3150
        %v3152 = vmul.f32 1.0, %v3151
        %v3153 = vxor.u32 %v3144, 2147483648
        %v3154 = vmul.f32 %v3153, 1.442695
        %v3155 = vpow.pop %v3154
        %v3156 = vadd.f32 %v3155, 1.0
        %v3157 = vrcp.pop %v3156
        %v3158 = vmul.f32 1.0, %v3157
        %v3159 = vtanh.pop %v3145
        %v3160 = vxor.u32 %v3146, 2147483648
        %v3161 = vmul.f32 %v3160, 1.442695
        %v3162 = vpow.pop %v3161
        %v3163 = vadd.f32 %v3162, 1.0
        %v3164 = vrcp.pop %v3163
        %v3165 = vmul.f32 1.0, %v3164
        %v3166 = vmul.f32 %v3158, %v2929
        %v3167 = vmul.f32 %v3152, %v3159
        %v3168 = vadd.f32 %v3166, %v3167
        %v3169 = vtanh.pop %v3168
        %v3170 = vmul.f32 %v3165, %v3169
        %3171 = vst [vmem:[#allocation2 + $0x38] sm:$0xff] %v3170
        %3172 = vst [vmem:[%s400] sm:$0xff] %v3170
        %3173 = vst [vmem:[%s407] sm:$0xff] %v3168
        %s3174 = sand.u32 %s195, 1
        %s3175 = scalar_lea.sflag [#allocation6], %s3174
        %s3176 = sand.u32 %s195, 1
        %s3177 = smul.addr %s3176, 8
        %s3178 = scalar_lea.vmem [#allocation11], %s3177
        %s3179 = sand.u32 %s223, 1
        %s3180 = scalar_lea.sflag [#allocation13], %s3179
        %s3181 = sand.u32 %s223, 1
        %s3182 = smul.addr %s3181, 8
        %s3183 = scalar_lea.vmem [#allocation12], %s3182
        // Predicated region
        $region69: #{tpu_custom_call.1} parent=43 // pred_check
          %p3184 = pneg %p205
        $region70: #{tpu_custom_call.1} parent=43 // pred_check_branch
          %3186 = sbr.rel (%p3184) target = $region72
        $region71: #{tpu_custom_call.1} parent=43 // pred_region
          %s3188 = ssub.s32 128, 128
          %3189 = vsyncadd %s3175, %s3188
          %s3190 = sadd.s32 %s31, %s32
          %s3191 = smul.addr %s3190, 128
          %s3192 = scalar_lea.hbm %s6, %s3191
          %s3194 = sshll.u32 %s3178, 4
          %s3195 = int_to_ptr.vmem [resolvable:$true] %s3194
          %3197 = dma.vmem_to_hbm [thread:$0]  %s3195, 128, %s3192, %s3175
        $region72: #{tpu_custom_call.1} parent=43 // pred_fallthru
          _
        // Predicated region
        $region73: #{tpu_custom_call.1} parent=43 // pred_check
          %p3198 = pneg %p233
        $region74: #{tpu_custom_call.1} parent=43 // pred_check_branch
          %3200 = sbr.rel (%p3198) target = $region76
        $region75: #{tpu_custom_call.1} parent=43 // pred_region
          %s3202 = ssub.s32 128, 128
          %3203 = vsyncadd %s3180, %s3202
          %s3204 = sadd.s32 %s31, %s32
          %s3205 = smul.addr %s3204, 128
          %s3206 = scalar_lea.hbm %s7, %s3205
          %s3208 = sshll.u32 %s3183, 4
          %s3209 = int_to_ptr.vmem [resolvable:$true] %s3208
          %3211 = dma.vmem_to_hbm [thread:$0]  %s3209, 128, %s3206, %s3180
        $region76: #{tpu_custom_call.1} parent=43 // pred_fallthru
          _
      $region44: #{tpu_custom_call.1} parent=5 // pred_fallthru
        _
      %p3212 = scmp.le.s32.totalorder 2, %s22
      // Predicated region
      $region77: #{tpu_custom_call.1} parent=5 // pred_check
        %p3213 = pneg %p3212
      $region78: #{tpu_custom_call.1} parent=5 // pred_check_branch
        %3215 = sbr.rel (%p3213) target = $region80
      $region79: #{tpu_custom_call.1} parent=5 // pred_region
        %s3216 = ssub.s32 %s22, 2
        // Predicated region
        $region81: #{tpu_custom_call.1} parent=79 // pred_check
          %p3217 = pneg %p211
        $region82: #{tpu_custom_call.1} parent=79 // pred_check_branch
          %3219 = sbr.rel (%p3217) target = $region84
        $region83: #{tpu_custom_call.1} parent=79 // pred_region
          %s3220 = sand.u32 %s196, 1
          %s3221 = scalar_lea.sflag [#allocation6], %s3220
          %s3222 = sand.u32 %s196, 1
          %s3223 = smul.addr %s3222, 8
          %s3224 = scalar_lea.vmem [#allocation11], %s3223
          %3225 = dma.done %s3221, 128
        $region84: #{tpu_custom_call.1} parent=79 // pred_fallthru
          _
        // Predicated region
        $region85: #{tpu_custom_call.1} parent=79 // pred_check
          %p3226 = pneg %p239
        $region86: #{tpu_custom_call.1} parent=79 // pred_check_branch
          %3228 = sbr.rel (%p3226) target = $region88
        $region87: #{tpu_custom_call.1} parent=79 // pred_region
          %s3229 = sand.u32 %s224, 1
          %s3230 = scalar_lea.sflag [#allocation13], %s3229
          %s3231 = sand.u32 %s224, 1
          %s3232 = smul.addr %s3231, 8
          %s3233 = scalar_lea.vmem [#allocation12], %s3232
          %3234 = dma.done %s3230, 128
        $region88: #{tpu_custom_call.1} parent=79 // pred_fallthru
          _
      $region80: #{tpu_custom_call.1} parent=5 // pred_fallthru
        _
    $region6: #{tpu_custom_call.1} parent=1 // loop_footer
      %s26 = sadd.s32 1, %s22
    $region7: #{tpu_custom_call.1} parent=1 // loop_footer_branch
      %21 = sbr.rel target = $region3
    $region8: #{tpu_custom_call.1} parent=1 // loop_exit
      _
    %3235 = vsyncpa [#allocation5], 1
    %s3236 = scalar_lea.sflag [#allocation5], 1
    %3237 = vsyncpa %s3236, 1
    %3238 = vsyncpa [#allocation8], 1
    %3239 = vsyncpa [#allocation6], 1
    %s3240 = scalar_lea.sflag [#allocation6], 1
    %3241 = vsyncpa %s3240, 1
    %3242 = vsyncpa [#allocation13], 1
    %s3243 = scalar_lea.sflag [#allocation13], 1
    %3244 = vsyncpa %s3243, 1

</llo_original>
